<compile_context>
chip_gen: v7x
topology: tpu7x:2x2x1
jax: 0.10.0
libtpu: 0.0.40
codegen_flags: <defaults>
</compile_context>

<pallas_src>
import functools

import jax
import jax.numpy as jnp
from jax.experimental import pallas as pl
from jax.experimental.pallas import tpu as pltpu

_NEG_SLOPE = 0.01   # nn.LeakyReLU() default
_BN_EPS = 1e-5      # nn.BatchNorm1d default
_PAD_MAX = 7        # largest conv padding in the block (net2: kernel 15, pad 7)


# --------------------------- in-kernel helpers -------------------------------

def _lrelu(v):
    return jnp.where(v >= 0.0, v, _NEG_SLOPE * v)


def _vpu_mm(x, w):
    """(B, T, Cin) x (Cin, Cout) -> (B, T, Cout) via Cin broadcast-MACs.

    With Cin/Cout in the 4..10 range a real matmul would use <5% of the MXU,
    so keep the contraction on the VPU (exact f32, no MXU-shaped relayouts)."""
    cin = x.shape[-1]
    out = x[:, :, 0:1] * w[0:1, :]
    for ci in range(1, cin):
        out = out + x[:, :, ci:ci + 1] * w[ci:ci + 1, :]
    return out


def _batchnorm(x, g_ref, b_ref):
    """BatchNorm1d (training mode): biased stats over (batch, length)."""
    n = x.shape[0] * x.shape[1]
    s = jnp.sum(jnp.sum(x, axis=1, keepdims=True), axis=0, keepdims=True)
    mean = s / n
    d = x - mean
    s2 = jnp.sum(jnp.sum(d * d, axis=1, keepdims=True), axis=0, keepdims=True)
    var = s2 / n
    return d * jax.lax.rsqrt(var + _BN_EPS) * g_ref[...] + b_ref[...]


def _fill_padded(pad_ref, xn, pad, L):
    """pad_ref[:, pad:pad+L, :] = xn, every other row zero (re-done per stage)."""
    pad_ref[...] = jnp.zeros_like(pad_ref)
    pad_ref[:, pad:pad + L, :] = xn


def _conv_lrelu(pad_ref, w_ref, cb_ref, *, K, L_out, stride):
    """Conv1d as K shifted VPU MACs over the padded scratch + bias + LeakyReLU.

    stride=2 taps are read directly with strided VMEM loads, which also
    realizes PyTorch's odd-length trim (only the first L_out outputs exist)."""
    acc = None
    for k in range(K):
        if stride == 1:
            xs = pad_ref[:, k:k + L_out, :]              # (B, L_out, Ci)
        else:
            xs = pad_ref[:, pl.ds(k, L_out, stride), :]  # rows k, k+s, ...
        term = _vpu_mm(xs, w_ref[k])
        acc = term if acc is None else acc + term
    return _lrelu(acc + cb_ref[...])


# --------------------------- fused kernel ------------------------------------

def residual_block_kernel(
        x_ref,                                          # (B, L, Ci) channels-last
        g1_ref, be1_ref, w1_ref, cb1_ref,               # BN1 + conv1 (k=7,  p=3)
        g2_ref, be2_ref, w2_ref, cb2_ref,               # BN2 + conv2 (k=15, p=7)
        g3_ref, be3_ref, w3_ref, cb3_ref,               # BN3 + conv3 (k=7,  p=3, s=2)
        w1a_ref, w1b_ref, lb1_ref,                      # lin1 split: pooled / h3 halves
        lw2_ref, lb2_ref, lw3_ref, lb3_ref,             # lin2, lin3
        o_ref,                                          # (B, L2, Co)
        pad_ref, h1_ref):                               # VMEM scratch
    B, L, Ci = x_ref.shape
    L2 = o_ref.shape[1]

    # ---- net1: BN -> Conv1d(k=7, pad=3) -> LeakyReLU ------------------------
    xn = _batchnorm(x_ref[...], g1_ref, be1_ref)
    _fill_padded(pad_ref, xn, 3, L)
    h1 = _conv_lrelu(pad_ref, w1_ref, cb1_ref, K=7, L_out=L, stride=1)

    # ---- _x = MaxPool1d(2)(h1): pairwise max via strided VMEM reads ---------
    h1_ref[...] = h1
    pooled = jnp.maximum(h1_ref[:, pl.ds(0, L2, 2), :],
                         h1_ref[:, pl.ds(1, L2, 2), :])        # (B, L2, Ci)

    # ---- net2: BN -> Conv1d(k=15, pad=7) -> LeakyReLU -----------------------
    xn = _batchnorm(h1, g2_ref, be2_ref)
    _fill_padded(pad_ref, xn, 7, L)
    h2 = _conv_lrelu(pad_ref, w2_ref, cb2_ref, K=15, L_out=L, stride=1)

    # ---- net3: BN -> Conv1d(k=7, pad=3, stride=2) -> LeakyReLU --------------
    # Computing exactly L2 strided outputs also implements the odd-L trim
    # (`__x = __x[:, :, :-1]`) of the PyTorch forward.
    xn = _batchnorm(h2, g3_ref, be3_ref)
    _fill_padded(pad_ref, xn, 3, L)
    h3 = _conv_lrelu(pad_ref, w3_ref, cb3_ref, K=7, L_out=L2, stride=2)  # (B, L2, Co)

    # ---- MLP on concat([pooled, h3]) without materializing the concat -------
    t = _lrelu(_vpu_mm(pooled, w1a_ref[...]) + _vpu_mm(h3, w1b_ref[...]) + lb1_ref[...])
    t = _lrelu(_vpu_mm(t, lw2_ref[...]) + lb2_ref[...])
    t = _lrelu(_vpu_mm(t, lw3_ref[...]) + lb3_ref[...])

    # ---- residual add: h3 reused in-register (no duplicate input DMA) -------
    o_ref[...] = h3 + t


# --------------------------- forward wrapper ---------------------------------

def residual_block_forward(x_ncl, p):
    """x_ncl: (B, C_in, L) float32 -> (B, C_out, L // 2)  (matches PyTorch)."""
    B, Ci, L = x_ncl.shape
    L2 = L // 2
    Co = p['conv3_w'].shape[-1]

    # Layout plumbing only: channels-last slab for the kernel.
    x_blc = jnp.transpose(x_ncl, (0, 2, 1)).astype(jnp.float32)

    vmem = pl.BlockSpec(memory_space=pltpu.MemorySpace.VMEM)
    row2 = lambda a: a.reshape(1, -1).astype(jnp.float32)

    operands = (
        x_blc,
        row2(p['bn1_g']), row2(p['bn1_b']), p['conv1_w'], row2(p['conv1_b']),
        row2(p['bn2_g']), row2(p['bn2_b']), p['conv2_w'], row2(p['conv2_b']),
        row2(p['bn3_g']), row2(p['bn3_b']), p['conv3_w'], row2(p['conv3_b']),
        p['lin1_w'][:Ci, :], p['lin1_w'][Ci:, :], row2(p['lin1_b']),
        p['lin2_w'], row2(p['lin2_b']), p['lin3_w'], row2(p['lin3_b']),
    )

    flops = int(2 * B * L * Ci * Ci * (7 + 15)            # conv1 + conv2
                + 2 * B * L2 * 7 * Ci * Co                 # conv3 (strided)
                + 2 * B * L2 * (Ci * Co + 3 * Co * Co)     # split lin1 + lin2 + lin3
                + 30 * B * L * Ci)                         # batchnorms / elementwise
    bytes_accessed = int(4 * (x_blc.size + B * L2 * Co
                              + sum(int(o.size) for o in operands[1:])))

    out_blc = pl.pallas_call(
        residual_block_kernel,
        out_shape=jax.ShapeDtypeStruct((B, L2, Co), jnp.float32),
        in_specs=[vmem] * len(operands),
        out_specs=vmem,
        scratch_shapes=[
            pltpu.VMEM((B, L + 2 * _PAD_MAX, Ci), jnp.float32),  # padded conv input
            pltpu.VMEM((B, L, Ci), jnp.float32),                 # h1 (for the max-pool)
        ],
        compiler_params=pltpu.CompilerParams(vmem_limit_bytes=32 * 1024 * 1024),
        cost_estimate=pl.CostEstimate(flops=flops, transcendentals=3 * Ci,
                                      bytes_accessed=bytes_accessed),
    )(*operands)

    # TODO(synk): for large B*L (esp. v7x with 64 MiB VMEM) add a row-tiled grid
    # with dimension_semantics=("parallel",) and a two-pass BatchNorm statistic.
    return jnp.transpose(out_blc, (0, 2, 1))               # back to (B, C_out, L2)


# --------------------------- parameters & reference --------------------------

def init_params(C_in, C_out, key):
    ks = iter(jax.random.split(key, 16))

    def rnd(shape, fan_in):
        return jax.random.normal(next(ks), shape, jnp.float32) / jnp.sqrt(float(fan_in))

    return {
        # BatchNorm affine params (PyTorch init: gamma=1, beta=0)
        'bn1_g': jnp.ones((C_in,), jnp.float32), 'bn1_b': jnp.zeros((C_in,), jnp.float32),
        'bn2_g': jnp.ones((C_in,), jnp.float32), 'bn2_b': jnp.zeros((C_in,), jnp.float32),
        'bn3_g': jnp.ones((C_in,), jnp.float32), 'bn3_b': jnp.zeros((C_in,), jnp.float32),
        # Conv weights stored as (K, C_in, C_out) == transpose of PyTorch (C_out, C_in, K)
        'conv1_w': rnd((7, C_in, C_in), 7 * C_in),   'conv1_b': rnd((C_in,), 7 * C_in),
        'conv2_w': rnd((15, C_in, C_in), 15 * C_in), 'conv2_b': rnd((C_in,), 15 * C_in),
        'conv3_w': rnd((7, C_in, C_out), 7 * C_in),  'conv3_b': rnd((C_out,), 7 * C_in),
        # Linear weights stored as (in_features, out_features) == PyTorch W.T
        'lin1_w': rnd((C_in + C_out, C_out), C_in + C_out), 'lin1_b': rnd((C_out,), C_in + C_out),
        'lin2_w': rnd((C_out, C_out), C_out),               'lin2_b': rnd((C_out,), C_out),
        'lin3_w': rnd((C_out, C_out), C_out),               'lin3_b': rnd((C_out,), C_out),
    }


def _reference_forward(x_ncl, p):
    """Pure-JAX mirror of the PyTorch forward (Precision.HIGHEST for tight check)."""
    hi = jax.lax.Precision.HIGHEST

    def bn(x, g, b):                                  # x: (B, C, L)
        mean = jnp.mean(x, axis=(0, 2), keepdims=True)
        var = jnp.mean(jnp.square(x - mean), axis=(0, 2), keepdims=True)
        return (x - mean) / jnp.sqrt(var + _BN_EPS) * g[None, :, None] + b[None, :, None]

    def conv(x, w_kio, b, stride, pad):
        w_oik = jnp.transpose(w_kio, (2, 1, 0))
        y = jax.lax.conv_general_dilated(x, w_oik, window_strides=(stride,),
                                         padding=[(pad, pad)],
                                         dimension_numbers=('NCH', 'OIH', 'NCH'),
                                         precision=hi)
        return y + b[None, :, None]

    def lrelu(v):
        return jnp.where(v >= 0.0, v, _NEG_SLOPE * v)

    B, C_in, L = x_ncl.shape
    h1 = lrelu(conv(bn(x_ncl, p['bn1_g'], p['bn1_b']), p['conv1_w'], p['conv1_b'], 1, 3))
    L2 = L // 2
    pooled = jnp.max(h1[:, :, :2 * L2].reshape(B, C_in, L2, 2), axis=-1)
    h2 = lrelu(conv(bn(h1, p['bn2_g'], p['bn2_b']), p['conv2_w'], p['conv2_b'], 1, 7))
    h3 = lrelu(conv(bn(h2, p['bn3_g'], p['bn3_b']), p['conv3_w'], p['conv3_b'], 2, 3))
    if pooled.shape[-1] != h3.shape[-1]:
        h3 = h3[:, :, :-1]
    cat = jnp.concatenate([pooled, h3], axis=1)
    t = jnp.swapaxes(cat, 1, 2)
    t = lrelu(jnp.matmul(t, p['lin1_w'], precision=hi) + p['lin1_b'])
    t = lrelu(jnp.matmul(t, p['lin2_w'], precision=hi) + p['lin2_b'])
    t = lrelu(jnp.matmul(t, p['lin3_w'], precision=hi) + p['lin3_b'])
    return h3 + jnp.swapaxes(t, 1, 2)


# --------------------------- main ---------------------------------------------

if __name__ == "__main__":
    B, C_in, C_out, L = 2, 4, 6, 16          # ResidualBlock(input_dims=4, output_dims=6)
    params = init_params(C_in, C_out, jax.random.PRNGKey(42))
    x = jax.random.uniform(jax.random.PRNGKey(0), (B, C_in, L), dtype=jnp.float32)

    fwd = jax.jit(functools.partial(residual_block_forward, p=params))
    out = fwd(x)
    jax.block_until_ready(out)

    assert out.shape == (B, C_out, L // 2), out.shape
    ref = _reference_forward(x, params)
    max_err = float(jnp.max(jnp.abs(out - ref)))
    # Kernel math is exact f32 on the VPU; reference runs at Precision.HIGHEST.
    assert max_err < 5e-3, f"mismatch vs pure-JAX reference: max abs err {max_err}"
    print("KERNEL_OK")
</pallas_src>

<mosaic_0001>
module attributes {stable_mosaic.version = 11 : i64} {
  func.func @residual_block_kernel(%arg0: memref<2x16x4xf32, #tpu.memory_space<vmem>>, %arg1: memref<1x4xf32, #tpu.memory_space<vmem>>, %arg2: memref<1x4xf32, #tpu.memory_space<vmem>>, %arg3: memref<7x4x4xf32, #tpu.memory_space<vmem>>, %arg4: memref<1x4xf32, #tpu.memory_space<vmem>>, %arg5: memref<1x4xf32, #tpu.memory_space<vmem>>, %arg6: memref<1x4xf32, #tpu.memory_space<vmem>>, %arg7: memref<15x4x4xf32, #tpu.memory_space<vmem>>, %arg8: memref<1x4xf32, #tpu.memory_space<vmem>>, %arg9: memref<1x4xf32, #tpu.memory_space<vmem>>, %arg10: memref<1x4xf32, #tpu.memory_space<vmem>>, %arg11: memref<7x4x6xf32, #tpu.memory_space<vmem>>, %arg12: memref<1x6xf32, #tpu.memory_space<vmem>>, %arg13: memref<4x6xf32, #tpu.memory_space<vmem>>, %arg14: memref<6x6xf32, #tpu.memory_space<vmem>>, %arg15: memref<1x6xf32, #tpu.memory_space<vmem>>, %arg16: memref<6x6xf32, #tpu.memory_space<vmem>>, %arg17: memref<1x6xf32, #tpu.memory_space<vmem>>, %arg18: memref<6x6xf32, #tpu.memory_space<vmem>>, %arg19: memref<1x6xf32, #tpu.memory_space<vmem>>, %arg20: memref<2x8x6xf32, #tpu.memory_space<vmem>>, %arg21: memref<2x30x4xf32, #tpu.memory_space<vmem>>, %arg22: memref<2x16x4xf32, #tpu.memory_space<vmem>>) attributes {dimension_semantics = [], scalar_prefetch = 0 : i64, scratch_operands = 2 : i64, tpu.core_type = #tpu.core_type<tc>} {
    %c0 = arith.constant 0 : index
    %c0_0 = arith.constant 0 : index
    %c0_1 = arith.constant 0 : index
    %0 = vector.load %arg0[%c0, %c0_0, %c0_1] : memref<2x16x4xf32, #tpu.memory_space<vmem>>, vector<2x16x4xf32>
    %cst = arith.constant dense<0.000000e+00> : vector<2x4xf32>
    %1 = vector.multi_reduction <add>, %0, %cst [1] : vector<2x16x4xf32> to vector<2x4xf32>
    %2 = vector.shape_cast %1 : vector<2x4xf32> to vector<2x1x4xf32>
    %cst_2 = arith.constant dense<0.000000e+00> : vector<1x4xf32>
    %3 = vector.multi_reduction <add>, %2, %cst_2 [0] : vector<2x1x4xf32> to vector<1x4xf32>
    %4 = vector.shape_cast %3 : vector<1x4xf32> to vector<1x1x4xf32>
    %cst_3 = arith.constant 3.200000e+01 : f32
    %5 = vector.broadcast %cst_3 : f32 to vector<1x1x4xf32>
    %6 = arith.divf %4, %5 : vector<1x1x4xf32>
    %7 = vector.broadcast %6 : vector<1x1x4xf32> to vector<2x16x4xf32>
    %8 = arith.subf %0, %7 : vector<2x16x4xf32>
    %9 = arith.mulf %8, %8 : vector<2x16x4xf32>
    %cst_4 = arith.constant dense<0.000000e+00> : vector<2x4xf32>
    %10 = vector.multi_reduction <add>, %9, %cst_4 [1] : vector<2x16x4xf32> to vector<2x4xf32>
    %11 = vector.shape_cast %10 : vector<2x4xf32> to vector<2x1x4xf32>
    %cst_5 = arith.constant dense<0.000000e+00> : vector<1x4xf32>
    %12 = vector.multi_reduction <add>, %11, %cst_5 [0] : vector<2x1x4xf32> to vector<1x4xf32>
    %13 = vector.shape_cast %12 : vector<1x4xf32> to vector<1x1x4xf32>
    %cst_6 = arith.constant 3.200000e+01 : f32
    %14 = vector.broadcast %cst_6 : f32 to vector<1x1x4xf32>
    %15 = arith.divf %13, %14 : vector<1x1x4xf32>
    %cst_7 = arith.constant 9.99999974E-6 : f32
    %16 = vector.broadcast %cst_7 : f32 to vector<1x1x4xf32>
    %17 = arith.addf %15, %16 : vector<1x1x4xf32>
    %18 = math.rsqrt %17 : vector<1x1x4xf32>
    %19 = vector.broadcast %18 : vector<1x1x4xf32> to vector<2x16x4xf32>
    %20 = arith.mulf %8, %19 : vector<2x16x4xf32>
    %c0_8 = arith.constant 0 : index
    %c0_9 = arith.constant 0 : index
    %21 = vector.load %arg1[%c0_8, %c0_9] : memref<1x4xf32, #tpu.memory_space<vmem>>, vector<1x4xf32>
    %22 = vector.shape_cast %21 : vector<1x4xf32> to vector<1x1x4xf32>
    %23 = vector.broadcast %22 : vector<1x1x4xf32> to vector<2x16x4xf32>
    %24 = arith.mulf %20, %23 : vector<2x16x4xf32>
    %c0_10 = arith.constant 0 : index
    %c0_11 = arith.constant 0 : index
    %25 = vector.load %arg2[%c0_10, %c0_11] : memref<1x4xf32, #tpu.memory_space<vmem>>, vector<1x4xf32>
    %26 = vector.shape_cast %25 : vector<1x4xf32> to vector<1x1x4xf32>
    %27 = vector.broadcast %26 : vector<1x1x4xf32> to vector<2x16x4xf32>
    %28 = arith.addf %24, %27 : vector<2x16x4xf32>
    %cst_12 = arith.constant 0.000000e+00 : f32
    %29 = vector.broadcast %cst_12 : f32 to vector<2x30x4xf32>
    %c0_13 = arith.constant 0 : index
    %c0_14 = arith.constant 0 : index
    %c0_15 = arith.constant 0 : index
    %30 = vector.load %arg21[%c0_13, %c0_14, %c0_15] : memref<2x30x4xf32, #tpu.memory_space<vmem>>, vector<2x30x4xf32>
    tpu.vector_store %arg21[%c0_13, %c0_14, %c0_15], %29 {strides = array<i32>} : memref<2x30x4xf32, #tpu.memory_space<vmem>>, vector<2x30x4xf32>,
    %c0_16 = arith.constant 0 : index
    %c3 = arith.constant 3 : index
    %c0_17 = arith.constant 0 : index
    %31 = vector.load %arg21[%c0_16, %c3, %c0_17] : memref<2x30x4xf32, #tpu.memory_space<vmem>>, vector<2x16x4xf32>
    tpu.vector_store %arg21[%c0_16, %c3, %c0_17], %28 {strides = array<i32>} : memref<2x30x4xf32, #tpu.memory_space<vmem>>, vector<2x16x4xf32>,
    %c0_18 = arith.constant 0 : index
    %c0_19 = arith.constant 0 : index
    %c0_20 = arith.constant 0 : index
    %32 = vector.load %arg21[%c0_18, %c0_19, %c0_20] : memref<2x30x4xf32, #tpu.memory_space<vmem>>, vector<2x16x4xf32>
    %c0_21 = arith.constant 0 : index
    %c0_22 = arith.constant 0 : index
    %c0_23 = arith.constant 0 : index
    %33 = vector.load %arg3[%c0_21, %c0_22, %c0_23] : memref<7x4x4xf32, #tpu.memory_space<vmem>>, vector<1x4x4xf32>
    %34 = vector.shape_cast %33 : vector<1x4x4xf32> to vector<4x4xf32>
    %35 = vector.extract_strided_slice %32 {offsets = [0, 0, 0], sizes = [2, 16, 1], strides = [1, 1, 1]} : vector<2x16x4xf32> to vector<2x16x1xf32>
    %36 = vector.extract_strided_slice %34 {offsets = [0, 0], sizes = [1, 4], strides = [1, 1]} : vector<4x4xf32> to vector<1x4xf32>
    %37 = vector.shape_cast %36 : vector<1x4xf32> to vector<1x1x4xf32>
    %38 = vector.broadcast %35 : vector<2x16x1xf32> to vector<2x16x4xf32>
    %39 = vector.broadcast %37 : vector<1x1x4xf32> to vector<2x16x4xf32>
    %40 = arith.mulf %38, %39 : vector<2x16x4xf32>
    %41 = vector.extract_strided_slice %32 {offsets = [0, 0, 1], sizes = [2, 16, 1], strides = [1, 1, 1]} : vector<2x16x4xf32> to vector<2x16x1xf32>
    %42 = vector.extract_strided_slice %34 {offsets = [1, 0], sizes = [1, 4], strides = [1, 1]} : vector<4x4xf32> to vector<1x4xf32>
    %43 = vector.shape_cast %42 : vector<1x4xf32> to vector<1x1x4xf32>
    %44 = vector.broadcast %41 : vector<2x16x1xf32> to vector<2x16x4xf32>
    %45 = vector.broadcast %43 : vector<1x1x4xf32> to vector<2x16x4xf32>
    %46 = arith.mulf %44, %45 : vector<2x16x4xf32>
    %47 = arith.addf %40, %46 : vector<2x16x4xf32>
    %48 = vector.extract_strided_slice %32 {offsets = [0, 0, 2], sizes = [2, 16, 1], strides = [1, 1, 1]} : vector<2x16x4xf32> to vector<2x16x1xf32>
    %49 = vector.extract_strided_slice %34 {offsets = [2, 0], sizes = [1, 4], strides = [1, 1]} : vector<4x4xf32> to vector<1x4xf32>
    %50 = vector.shape_cast %49 : vector<1x4xf32> to vector<1x1x4xf32>
    %51 = vector.broadcast %48 : vector<2x16x1xf32> to vector<2x16x4xf32>
    %52 = vector.broadcast %50 : vector<1x1x4xf32> to vector<2x16x4xf32>
    %53 = arith.mulf %51, %52 : vector<2x16x4xf32>
    %54 = arith.addf %47, %53 : vector<2x16x4xf32>
    %55 = vector.extract_strided_slice %32 {offsets = [0, 0, 3], sizes = [2, 16, 1], strides = [1, 1, 1]} : vector<2x16x4xf32> to vector<2x16x1xf32>
    %56 = vector.extract_strided_slice %34 {offsets = [3, 0], sizes = [1, 4], strides = [1, 1]} : vector<4x4xf32> to vector<1x4xf32>
    %57 = vector.shape_cast %56 : vector<1x4xf32> to vector<1x1x4xf32>
    %58 = vector.broadcast %55 : vector<2x16x1xf32> to vector<2x16x4xf32>
    %59 = vector.broadcast %57 : vector<1x1x4xf32> to vector<2x16x4xf32>
    %60 = arith.mulf %58, %59 : vector<2x16x4xf32>
    %61 = arith.addf %54, %60 : vector<2x16x4xf32>
    %c0_24 = arith.constant 0 : index
    %c1 = arith.constant 1 : index
    %c0_25 = arith.constant 0 : index
    %62 = vector.load %arg21[%c0_24, %c1, %c0_25] : memref<2x30x4xf32, #tpu.memory_space<vmem>>, vector<2x16x4xf32>
    %c1_26 = arith.constant 1 : index
    %c0_27 = arith.constant 0 : index
    %c0_28 = arith.constant 0 : index
    %63 = vector.load %arg3[%c1_26, %c0_27, %c0_28] : memref<7x4x4xf32, #tpu.memory_space<vmem>>, vector<1x4x4xf32>
    %64 = vector.shape_cast %63 : vector<1x4x4xf32> to vector<4x4xf32>
    %65 = vector.extract_strided_slice %62 {offsets = [0, 0, 0], sizes = [2, 16, 1], strides = [1, 1, 1]} : vector<2x16x4xf32> to vector<2x16x1xf32>
    %66 = vector.extract_strided_slice %64 {offsets = [0, 0], sizes = [1, 4], strides = [1, 1]} : vector<4x4xf32> to vector<1x4xf32>
    %67 = vector.shape_cast %66 : vector<1x4xf32> to vector<1x1x4xf32>
    %68 = vector.broadcast %65 : vector<2x16x1xf32> to vector<2x16x4xf32>
    %69 = vector.broadcast %67 : vector<1x1x4xf32> to vector<2x16x4xf32>
    %70 = arith.mulf %68, %69 : vector<2x16x4xf32>
    %71 = vector.extract_strided_slice %62 {offsets = [0, 0, 1], sizes = [2, 16, 1], strides = [1, 1, 1]} : vector<2x16x4xf32> to vector<2x16x1xf32>
    %72 = vector.extract_strided_slice %64 {offsets = [1, 0], sizes = [1, 4], strides = [1, 1]} : vector<4x4xf32> to vector<1x4xf32>
    %73 = vector.shape_cast %72 : vector<1x4xf32> to vector<1x1x4xf32>
    %74 = vector.broadcast %71 : vector<2x16x1xf32> to vector<2x16x4xf32>
    %75 = vector.broadcast %73 : vector<1x1x4xf32> to vector<2x16x4xf32>
    %76 = arith.mulf %74, %75 : vector<2x16x4xf32>
    %77 = arith.addf %70, %76 : vector<2x16x4xf32>
    %78 = vector.extract_strided_slice %62 {offsets = [0, 0, 2], sizes = [2, 16, 1], strides = [1, 1, 1]} : vector<2x16x4xf32> to vector<2x16x1xf32>
    %79 = vector.extract_strided_slice %64 {offsets = [2, 0], sizes = [1, 4], strides = [1, 1]} : vector<4x4xf32> to vector<1x4xf32>
    %80 = vector.shape_cast %79 : vector<1x4xf32> to vector<1x1x4xf32>
    %81 = vector.broadcast %78 : vector<2x16x1xf32> to vector<2x16x4xf32>
    %82 = vector.broadcast %80 : vector<1x1x4xf32> to vector<2x16x4xf32>
    %83 = arith.mulf %81, %82 : vector<2x16x4xf32>
    %84 = arith.addf %77, %83 : vector<2x16x4xf32>
    %85 = vector.extract_strided_slice %62 {offsets = [0, 0, 3], sizes = [2, 16, 1], strides = [1, 1, 1]} : vector<2x16x4xf32> to vector<2x16x1xf32>
    %86 = vector.extract_strided_slice %64 {offsets = [3, 0], sizes = [1, 4], strides = [1, 1]} : vector<4x4xf32> to vector<1x4xf32>
    %87 = vector.shape_cast %86 : vector<1x4xf32> to vector<1x1x4xf32>
    %88 = vector.broadcast %85 : vector<2x16x1xf32> to vector<2x16x4xf32>
    %89 = vector.broadcast %87 : vector<1x1x4xf32> to vector<2x16x4xf32>
    %90 = arith.mulf %88, %89 : vector<2x16x4xf32>
    %91 = arith.addf %84, %90 : vector<2x16x4xf32>
    %92 = arith.addf %61, %91 : vector<2x16x4xf32>
    %c0_29 = arith.constant 0 : index
    %c2 = arith.constant 2 : index
    %c0_30 = arith.constant 0 : index
    %93 = vector.load %arg21[%c0_29, %c2, %c0_30] : memref<2x30x4xf32, #tpu.memory_space<vmem>>, vector<2x16x4xf32>
    %c2_31 = arith.constant 2 : index
    %c0_32 = arith.constant 0 : index
    %c0_33 = arith.constant 0 : index
    %94 = vector.load %arg3[%c2_31, %c0_32, %c0_33] : memref<7x4x4xf32, #tpu.memory_space<vmem>>, vector<1x4x4xf32>
    %95 = vector.shape_cast %94 : vector<1x4x4xf32> to vector<4x4xf32>
    %96 = vector.extract_strided_slice %93 {offsets = [0, 0, 0], sizes = [2, 16, 1], strides = [1, 1, 1]} : vector<2x16x4xf32> to vector<2x16x1xf32>
    %97 = vector.extract_strided_slice %95 {offsets = [0, 0], sizes = [1, 4], strides = [1, 1]} : vector<4x4xf32> to vector<1x4xf32>
    %98 = vector.shape_cast %97 : vector<1x4xf32> to vector<1x1x4xf32>
    %99 = vector.broadcast %96 : vector<2x16x1xf32> to vector<2x16x4xf32>
    %100 = vector.broadcast %98 : vector<1x1x4xf32> to vector<2x16x4xf32>
    %101 = arith.mulf %99, %100 : vector<2x16x4xf32>
    %102 = vector.extract_strided_slice %93 {offsets = [0, 0, 1], sizes = [2, 16, 1], strides = [1, 1, 1]} : vector<2x16x4xf32> to vector<2x16x1xf32>
    %103 = vector.extract_strided_slice %95 {offsets = [1, 0], sizes = [1, 4], strides = [1, 1]} : vector<4x4xf32> to vector<1x4xf32>
    %104 = vector.shape_cast %103 : vector<1x4xf32> to vector<1x1x4xf32>
    %105 = vector.broadcast %102 : vector<2x16x1xf32> to vector<2x16x4xf32>
    %106 = vector.broadcast %104 : vector<1x1x4xf32> to vector<2x16x4xf32>
    %107 = arith.mulf %105, %106 : vector<2x16x4xf32>
    %108 = arith.addf %101, %107 : vector<2x16x4xf32>
    %109 = vector.extract_strided_slice %93 {offsets = [0, 0, 2], sizes = [2, 16, 1], strides = [1, 1, 1]} : vector<2x16x4xf32> to vector<2x16x1xf32>
    %110 = vector.extract_strided_slice %95 {offsets = [2, 0], sizes = [1, 4], strides = [1, 1]} : vector<4x4xf32> to vector<1x4xf32>
    %111 = vector.shape_cast %110 : vector<1x4xf32> to vector<1x1x4xf32>
    %112 = vector.broadcast %109 : vector<2x16x1xf32> to vector<2x16x4xf32>
    %113 = vector.broadcast %111 : vector<1x1x4xf32> to vector<2x16x4xf32>
    %114 = arith.mulf %112, %113 : vector<2x16x4xf32>
    %115 = arith.addf %108, %114 : vector<2x16x4xf32>
    %116 = vector.extract_strided_slice %93 {offsets = [0, 0, 3], sizes = [2, 16, 1], strides = [1, 1, 1]} : vector<2x16x4xf32> to vector<2x16x1xf32>
    %117 = vector.extract_strided_slice %95 {offsets = [3, 0], sizes = [1, 4], strides = [1, 1]} : vector<4x4xf32> to vector<1x4xf32>
    %118 = vector.shape_cast %117 : vector<1x4xf32> to vector<1x1x4xf32>
    %119 = vector.broadcast %116 : vector<2x16x1xf32> to vector<2x16x4xf32>
    %120 = vector.broadcast %118 : vector<1x1x4xf32> to vector<2x16x4xf32>
    %121 = arith.mulf %119, %120 : vector<2x16x4xf32>
    %122 = arith.addf %115, %121 : vector<2x16x4xf32>
    %123 = arith.addf %92, %122 : vector<2x16x4xf32>
    %c0_34 = arith.constant 0 : index
    %c3_35 = arith.constant 3 : index
    %c0_36 = arith.constant 0 : index
    %124 = vector.load %arg21[%c0_34, %c3_35, %c0_36] : memref<2x30x4xf32, #tpu.memory_space<vmem>>, vector<2x16x4xf32>
    %c3_37 = arith.constant 3 : index
    %c0_38 = arith.constant 0 : index
    %c0_39 = arith.constant 0 : index
    %125 = vector.load %arg3[%c3_37, %c0_38, %c0_39] : memref<7x4x4xf32, #tpu.memory_space<vmem>>, vector<1x4x4xf32>
    %126 = vector.shape_cast %125 : vector<1x4x4xf32> to vector<4x4xf32>
    %127 = vector.extract_strided_slice %124 {offsets = [0, 0, 0], sizes = [2, 16, 1], strides = [1, 1, 1]} : vector<2x16x4xf32> to vector<2x16x1xf32>
    %128 = vector.extract_strided_slice %126 {offsets = [0, 0], sizes = [1, 4], strides = [1, 1]} : vector<4x4xf32> to vector<1x4xf32>
    %129 = vector.shape_cast %128 : vector<1x4xf32> to vector<1x1x4xf32>
    %130 = vector.broadcast %127 : vector<2x16x1xf32> to vector<2x16x4xf32>
    %131 = vector.broadcast %129 : vector<1x1x4xf32> to vector<2x16x4xf32>
    %132 = arith.mulf %130, %131 : vector<2x16x4xf32>
    %133 = vector.extract_strided_slice %124 {offsets = [0, 0, 1], sizes = [2, 16, 1], strides = [1, 1, 1]} : vector<2x16x4xf32> to vector<2x16x1xf32>
    %134 = vector.extract_strided_slice %126 {offsets = [1, 0], sizes = [1, 4], strides = [1, 1]} : vector<4x4xf32> to vector<1x4xf32>
    %135 = vector.shape_cast %134 : vector<1x4xf32> to vector<1x1x4xf32>
    %136 = vector.broadcast %133 : vector<2x16x1xf32> to vector<2x16x4xf32>
    %137 = vector.broadcast %135 : vector<1x1x4xf32> to vector<2x16x4xf32>
    %138 = arith.mulf %136, %137 : vector<2x16x4xf32>
    %139 = arith.addf %132, %138 : vector<2x16x4xf32>
    %140 = vector.extract_strided_slice %124 {offsets = [0, 0, 2], sizes = [2, 16, 1], strides = [1, 1, 1]} : vector<2x16x4xf32> to vector<2x16x1xf32>
    %141 = vector.extract_strided_slice %126 {offsets = [2, 0], sizes = [1, 4], strides = [1, 1]} : vector<4x4xf32> to vector<1x4xf32>
    %142 = vector.shape_cast %141 : vector<1x4xf32> to vector<1x1x4xf32>
    %143 = vector.broadcast %140 : vector<2x16x1xf32> to vector<2x16x4xf32>
    %144 = vector.broadcast %142 : vector<1x1x4xf32> to vector<2x16x4xf32>
    %145 = arith.mulf %143, %144 : vector<2x16x4xf32>
    %146 = arith.addf %139, %145 : vector<2x16x4xf32>
    %147 = vector.extract_strided_slice %124 {offsets = [0, 0, 3], sizes = [2, 16, 1], strides = [1, 1, 1]} : vector<2x16x4xf32> to vector<2x16x1xf32>
    %148 = vector.extract_strided_slice %126 {offsets = [3, 0], sizes = [1, 4], strides = [1, 1]} : vector<4x4xf32> to vector<1x4xf32>
    %149 = vector.shape_cast %148 : vector<1x4xf32> to vector<1x1x4xf32>
    %150 = vector.broadcast %147 : vector<2x16x1xf32> to vector<2x16x4xf32>
    %151 = vector.broadcast %149 : vector<1x1x4xf32> to vector<2x16x4xf32>
    %152 = arith.mulf %150, %151 : vector<2x16x4xf32>
    %153 = arith.addf %146, %152 : vector<2x16x4xf32>
    %154 = arith.addf %123, %153 : vector<2x16x4xf32>
    %c0_40 = arith.constant 0 : index
    %c4 = arith.constant 4 : index
    %c0_41 = arith.constant 0 : index
    %155 = vector.load %arg21[%c0_40, %c4, %c0_41] : memref<2x30x4xf32, #tpu.memory_space<vmem>>, vector<2x16x4xf32>
    %c4_42 = arith.constant 4 : index
    %c0_43 = arith.constant 0 : index
    %c0_44 = arith.constant 0 : index
    %156 = vector.load %arg3[%c4_42, %c0_43, %c0_44] : memref<7x4x4xf32, #tpu.memory_space<vmem>>, vector<1x4x4xf32>
    %157 = vector.shape_cast %156 : vector<1x4x4xf32> to vector<4x4xf32>
    %158 = vector.extract_strided_slice %155 {offsets = [0, 0, 0], sizes = [2, 16, 1], strides = [1, 1, 1]} : vector<2x16x4xf32> to vector<2x16x1xf32>
    %159 = vector.extract_strided_slice %157 {offsets = [0, 0], sizes = [1, 4], strides = [1, 1]} : vector<4x4xf32> to vector<1x4xf32>
    %160 = vector.shape_cast %159 : vector<1x4xf32> to vector<1x1x4xf32>
    %161 = vector.broadcast %158 : vector<2x16x1xf32> to vector<2x16x4xf32>
    %162 = vector.broadcast %160 : vector<1x1x4xf32> to vector<2x16x4xf32>
    %163 = arith.mulf %161, %162 : vector<2x16x4xf32>
    %164 = vector.extract_strided_slice %155 {offsets = [0, 0, 1], sizes = [2, 16, 1], strides = [1, 1, 1]} : vector<2x16x4xf32> to vector<2x16x1xf32>
    %165 = vector.extract_strided_slice %157 {offsets = [1, 0], sizes = [1, 4], strides = [1, 1]} : vector<4x4xf32> to vector<1x4xf32>
    %166 = vector.shape_cast %165 : vector<1x4xf32> to vector<1x1x4xf32>
    %167 = vector.broadcast %164 : vector<2x16x1xf32> to vector<2x16x4xf32>
    %168 = vector.broadcast %166 : vector<1x1x4xf32> to vector<2x16x4xf32>
    %169 = arith.mulf %167, %168 : vector<2x16x4xf32>
    %170 = arith.addf %163, %169 : vector<2x16x4xf32>
    %171 = vector.extract_strided_slice %155 {offsets = [0, 0, 2], sizes = [2, 16, 1], strides = [1, 1, 1]} : vector<2x16x4xf32> to vector<2x16x1xf32>
    %172 = vector.extract_strided_slice %157 {offsets = [2, 0], sizes = [1, 4], strides = [1, 1]} : vector<4x4xf32> to vector<1x4xf32>
    %173 = vector.shape_cast %172 : vector<1x4xf32> to vector<1x1x4xf32>
    %174 = vector.broadcast %171 : vector<2x16x1xf32> to vector<2x16x4xf32>
    %175 = vector.broadcast %173 : vector<1x1x4xf32> to vector<2x16x4xf32>
    %176 = arith.mulf %174, %175 : vector<2x16x4xf32>
    %177 = arith.addf %170, %176 : vector<2x16x4xf32>
    %178 = vector.extract_strided_slice %155 {offsets = [0, 0, 3], sizes = [2, 16, 1], strides = [1, 1, 1]} : vector<2x16x4xf32> to vector<2x16x1xf32>
    %179 = vector.extract_strided_slice %157 {offsets = [3, 0], sizes = [1, 4], strides = [1, 1]} : vector<4x4xf32> to vector<1x4xf32>
    %180 = vector.shape_cast %179 : vector<1x4xf32> to vector<1x1x4xf32>
    %181 = vector.broadcast %178 : vector<2x16x1xf32> to vector<2x16x4xf32>
    %182 = vector.broadcast %180 : vector<1x1x4xf32> to vector<2x16x4xf32>
    %183 = arith.mulf %181, %182 : vector<2x16x4xf32>
    %184 = arith.addf %177, %183 : vector<2x16x4xf32>
    %185 = arith.addf %154, %184 : vector<2x16x4xf32>
    %c0_45 = arith.constant 0 : index
    %c5 = arith.constant 5 : index
    %c0_46 = arith.constant 0 : index
    %186 = vector.load %arg21[%c0_45, %c5, %c0_46] : memref<2x30x4xf32, #tpu.memory_space<vmem>>, vector<2x16x4xf32>
    %c5_47 = arith.constant 5 : index
    %c0_48 = arith.constant 0 : index
    %c0_49 = arith.constant 0 : index
    %187 = vector.load %arg3[%c5_47, %c0_48, %c0_49] : memref<7x4x4xf32, #tpu.memory_space<vmem>>, vector<1x4x4xf32>
    %188 = vector.shape_cast %187 : vector<1x4x4xf32> to vector<4x4xf32>
    %189 = vector.extract_strided_slice %186 {offsets = [0, 0, 0], sizes = [2, 16, 1], strides = [1, 1, 1]} : vector<2x16x4xf32> to vector<2x16x1xf32>
    %190 = vector.extract_strided_slice %188 {offsets = [0, 0], sizes = [1, 4], strides = [1, 1]} : vector<4x4xf32> to vector<1x4xf32>
    %191 = vector.shape_cast %190 : vector<1x4xf32> to vector<1x1x4xf32>
    %192 = vector.broadcast %189 : vector<2x16x1xf32> to vector<2x16x4xf32>
    %193 = vector.broadcast %191 : vector<1x1x4xf32> to vector<2x16x4xf32>
    %194 = arith.mulf %192, %193 : vector<2x16x4xf32>
    %195 = vector.extract_strided_slice %186 {offsets = [0, 0, 1], sizes = [2, 16, 1], strides = [1, 1, 1]} : vector<2x16x4xf32> to vector<2x16x1xf32>
    %196 = vector.extract_strided_slice %188 {offsets = [1, 0], sizes = [1, 4], strides = [1, 1]} : vector<4x4xf32> to vector<1x4xf32>
    %197 = vector.shape_cast %196 : vector<1x4xf32> to vector<1x1x4xf32>
    %198 = vector.broadcast %195 : vector<2x16x1xf32> to vector<2x16x4xf32>
    %199 = vector.broadcast %197 : vector<1x1x4xf32> to vector<2x16x4xf32>
    %200 = arith.mulf %198, %199 : vector<2x16x4xf32>
    %201 = arith.addf %194, %200 : vector<2x16x4xf32>
    %202 = vector.extract_strided_slice %186 {offsets = [0, 0, 2], sizes = [2, 16, 1], strides = [1, 1, 1]} : vector<2x16x4xf32> to vector<2x16x1xf32>
    %203 = vector.extract_strided_slice %188 {offsets = [2, 0], sizes = [1, 4], strides = [1, 1]} : vector<4x4xf32> to vector<1x4xf32>
    %204 = vector.shape_cast %203 : vector<1x4xf32> to vector<1x1x4xf32>
    %205 = vector.broadcast %202 : vector<2x16x1xf32> to vector<2x16x4xf32>
    %206 = vector.broadcast %204 : vector<1x1x4xf32> to vector<2x16x4xf32>
    %207 = arith.mulf %205, %206 : vector<2x16x4xf32>
    %208 = arith.addf %201, %207 : vector<2x16x4xf32>
    %209 = vector.extract_strided_slice %186 {offsets = [0, 0, 3], sizes = [2, 16, 1], strides = [1, 1, 1]} : vector<2x16x4xf32> to vector<2x16x1xf32>
    %210 = vector.extract_strided_slice %188 {offsets = [3, 0], sizes = [1, 4], strides = [1, 1]} : vector<4x4xf32> to vector<1x4xf32>
    %211 = vector.shape_cast %210 : vector<1x4xf32> to vector<1x1x4xf32>
    %212 = vector.broadcast %209 : vector<2x16x1xf32> to vector<2x16x4xf32>
    %213 = vector.broadcast %211 : vector<1x1x4xf32> to vector<2x16x4xf32>
    %214 = arith.mulf %212, %213 : vector<2x16x4xf32>
    %215 = arith.addf %208, %214 : vector<2x16x4xf32>
    %216 = arith.addf %185, %215 : vector<2x16x4xf32>
    %c0_50 = arith.constant 0 : index
    %c6 = arith.constant 6 : index
    %c0_51 = arith.constant 0 : index
    %217 = vector.load %arg21[%c0_50, %c6, %c0_51] : memref<2x30x4xf32, #tpu.memory_space<vmem>>, vector<2x16x4xf32>
    %c6_52 = arith.constant 6 : index
    %c0_53 = arith.constant 0 : index
    %c0_54 = arith.constant 0 : index
    %218 = vector.load %arg3[%c6_52, %c0_53, %c0_54] : memref<7x4x4xf32, #tpu.memory_space<vmem>>, vector<1x4x4xf32>
    %219 = vector.shape_cast %218 : vector<1x4x4xf32> to vector<4x4xf32>
    %220 = vector.extract_strided_slice %217 {offsets = [0, 0, 0], sizes = [2, 16, 1], strides = [1, 1, 1]} : vector<2x16x4xf32> to vector<2x16x1xf32>
    %221 = vector.extract_strided_slice %219 {offsets = [0, 0], sizes = [1, 4], strides = [1, 1]} : vector<4x4xf32> to vector<1x4xf32>
    %222 = vector.shape_cast %221 : vector<1x4xf32> to vector<1x1x4xf32>
    %223 = vector.broadcast %220 : vector<2x16x1xf32> to vector<2x16x4xf32>
    %224 = vector.broadcast %222 : vector<1x1x4xf32> to vector<2x16x4xf32>
    %225 = arith.mulf %223, %224 : vector<2x16x4xf32>
    %226 = vector.extract_strided_slice %217 {offsets = [0, 0, 1], sizes = [2, 16, 1], strides = [1, 1, 1]} : vector<2x16x4xf32> to vector<2x16x1xf32>
    %227 = vector.extract_strided_slice %219 {offsets = [1, 0], sizes = [1, 4], strides = [1, 1]} : vector<4x4xf32> to vector<1x4xf32>
    %228 = vector.shape_cast %227 : vector<1x4xf32> to vector<1x1x4xf32>
    %229 = vector.broadcast %226 : vector<2x16x1xf32> to vector<2x16x4xf32>
    %230 = vector.broadcast %228 : vector<1x1x4xf32> to vector<2x16x4xf32>
    %231 = arith.mulf %229, %230 : vector<2x16x4xf32>
    %232 = arith.addf %225, %231 : vector<2x16x4xf32>
    %233 = vector.extract_strided_slice %217 {offsets = [0, 0, 2], sizes = [2, 16, 1], strides = [1, 1, 1]} : vector<2x16x4xf32> to vector<2x16x1xf32>
    %234 = vector.extract_strided_slice %219 {offsets = [2, 0], sizes = [1, 4], strides = [1, 1]} : vector<4x4xf32> to vector<1x4xf32>
    %235 = vector.shape_cast %234 : vector<1x4xf32> to vector<1x1x4xf32>
    %236 = vector.broadcast %233 : vector<2x16x1xf32> to vector<2x16x4xf32>
    %237 = vector.broadcast %235 : vector<1x1x4xf32> to vector<2x16x4xf32>
    %238 = arith.mulf %236, %237 : vector<2x16x4xf32>
    %239 = arith.addf %232, %238 : vector<2x16x4xf32>
    %240 = vector.extract_strided_slice %217 {offsets = [0, 0, 3], sizes = [2, 16, 1], strides = [1, 1, 1]} : vector<2x16x4xf32> to vector<2x16x1xf32>
    %241 = vector.extract_strided_slice %219 {offsets = [3, 0], sizes = [1, 4], strides = [1, 1]} : vector<4x4xf32> to vector<1x4xf32>
    %242 = vector.shape_cast %241 : vector<1x4xf32> to vector<1x1x4xf32>
    %243 = vector.broadcast %240 : vector<2x16x1xf32> to vector<2x16x4xf32>
    %244 = vector.broadcast %242 : vector<1x1x4xf32> to vector<2x16x4xf32>
    %245 = arith.mulf %243, %244 : vector<2x16x4xf32>
    %246 = arith.addf %239, %245 : vector<2x16x4xf32>
    %247 = arith.addf %216, %246 : vector<2x16x4xf32>
    %c0_55 = arith.constant 0 : index
    %c0_56 = arith.constant 0 : index
    %248 = vector.load %arg4[%c0_55, %c0_56] : memref<1x4xf32, #tpu.memory_space<vmem>>, vector<1x4xf32>
    %249 = vector.shape_cast %248 : vector<1x4xf32> to vector<1x1x4xf32>
    %250 = vector.broadcast %249 : vector<1x1x4xf32> to vector<2x16x4xf32>
    %251 = arith.addf %247, %250 : vector<2x16x4xf32>
    %cst_57 = arith.constant 0.000000e+00 : f32
    %252 = vector.broadcast %cst_57 : f32 to vector<2x16x4xf32>
    %253 = arith.cmpf oge, %251, %252 : vector<2x16x4xf32>
    %cst_58 = arith.constant 0.00999999977 : f32
    %254 = vector.broadcast %cst_58 : f32 to vector<2x16x4xf32>
    %255 = arith.mulf %254, %251 : vector<2x16x4xf32>
    %256 = arith.select %253, %251, %255 : vector<2x16x4xi1>, vector<2x16x4xf32>
    %c0_59 = arith.constant 0 : index
    %c0_60 = arith.constant 0 : index
    %c0_61 = arith.constant 0 : index
    %257 = vector.load %arg22[%c0_59, %c0_60, %c0_61] : memref<2x16x4xf32, #tpu.memory_space<vmem>>, vector<2x16x4xf32>
    tpu.vector_store %arg22[%c0_59, %c0_60, %c0_61], %256 {strides = array<i32>} : memref<2x16x4xf32, #tpu.memory_space<vmem>>, vector<2x16x4xf32>,
    %c0_62 = arith.constant 0 : index
    %c0_63 = arith.constant 0 : index
    %c0_64 = arith.constant 0 : index
    %258 = tpu.strided_load %arg22[%c0_62, %c0_63, %c0_64] {strides = array<i32: 1, 2, 1>} : memref<2x16x4xf32, #tpu.memory_space<vmem>>, vector<2x8x4xf32>
    %c0_65 = arith.constant 0 : index
    %c1_66 = arith.constant 1 : index
    %c0_67 = arith.constant 0 : index
    %259 = tpu.strided_load %arg22[%c0_65, %c1_66, %c0_67] {strides = array<i32: 1, 2, 1>} : memref<2x16x4xf32, #tpu.memory_space<vmem>>, vector<2x8x4xf32>
    %260 = arith.maximumf %258, %259 : vector<2x8x4xf32>
    %cst_68 = arith.constant dense<0.000000e+00> : vector<2x4xf32>
    %261 = vector.multi_reduction <add>, %256, %cst_68 [1] : vector<2x16x4xf32> to vector<2x4xf32>
    %262 = vector.shape_cast %261 : vector<2x4xf32> to vector<2x1x4xf32>
    %cst_69 = arith.constant dense<0.000000e+00> : vector<1x4xf32>
    %263 = vector.multi_reduction <add>, %262, %cst_69 [0] : vector<2x1x4xf32> to vector<1x4xf32>
    %264 = vector.shape_cast %263 : vector<1x4xf32> to vector<1x1x4xf32>
    %cst_70 = arith.constant 3.200000e+01 : f32
    %265 = vector.broadcast %cst_70 : f32 to vector<1x1x4xf32>
    %266 = arith.divf %264, %265 : vector<1x1x4xf32>
    %267 = vector.broadcast %266 : vector<1x1x4xf32> to vector<2x16x4xf32>
    %268 = arith.subf %256, %267 : vector<2x16x4xf32>
    %269 = arith.mulf %268, %268 : vector<2x16x4xf32>
    %cst_71 = arith.constant dense<0.000000e+00> : vector<2x4xf32>
    %270 = vector.multi_reduction <add>, %269, %cst_71 [1] : vector<2x16x4xf32> to vector<2x4xf32>
    %271 = vector.shape_cast %270 : vector<2x4xf32> to vector<2x1x4xf32>
    %cst_72 = arith.constant dense<0.000000e+00> : vector<1x4xf32>
    %272 = vector.multi_reduction <add>, %271, %cst_72 [0] : vector<2x1x4xf32> to vector<1x4xf32>
    %273 = vector.shape_cast %272 : vector<1x4xf32> to vector<1x1x4xf32>
    %cst_73 = arith.constant 3.200000e+01 : f32
    %274 = vector.broadcast %cst_73 : f32 to vector<1x1x4xf32>
    %275 = arith.divf %273, %274 : vector<1x1x4xf32>
    %cst_74 = arith.constant 9.99999974E-6 : f32
    %276 = vector.broadcast %cst_74 : f32 to vector<1x1x4xf32>
    %277 = arith.addf %275, %276 : vector<1x1x4xf32>
    %278 = math.rsqrt %277 : vector<1x1x4xf32>
    %279 = vector.broadcast %278 : vector<1x1x4xf32> to vector<2x16x4xf32>
    %280 = arith.mulf %268, %279 : vector<2x16x4xf32>
    %c0_75 = arith.constant 0 : index
    %c0_76 = arith.constant 0 : index
    %281 = vector.load %arg5[%c0_75, %c0_76] : memref<1x4xf32, #tpu.memory_space<vmem>>, vector<1x4xf32>
    %282 = vector.shape_cast %281 : vector<1x4xf32> to vector<1x1x4xf32>
    %283 = vector.broadcast %282 : vector<1x1x4xf32> to vector<2x16x4xf32>
    %284 = arith.mulf %280, %283 : vector<2x16x4xf32>
    %c0_77 = arith.constant 0 : index
    %c0_78 = arith.constant 0 : index
    %285 = vector.load %arg6[%c0_77, %c0_78] : memref<1x4xf32, #tpu.memory_space<vmem>>, vector<1x4xf32>
    %286 = vector.shape_cast %285 : vector<1x4xf32> to vector<1x1x4xf32>
    %287 = vector.broadcast %286 : vector<1x1x4xf32> to vector<2x16x4xf32>
    %288 = arith.addf %284, %287 : vector<2x16x4xf32>
    %cst_79 = arith.constant 0.000000e+00 : f32
    %289 = vector.broadcast %cst_79 : f32 to vector<2x30x4xf32>
    %c0_80 = arith.constant 0 : index
    %c0_81 = arith.constant 0 : index
    %c0_82 = arith.constant 0 : index
    %290 = vector.load %arg21[%c0_80, %c0_81, %c0_82] : memref<2x30x4xf32, #tpu.memory_space<vmem>>, vector<2x30x4xf32>
    tpu.vector_store %arg21[%c0_80, %c0_81, %c0_82], %289 {strides = array<i32>} : memref<2x30x4xf32, #tpu.memory_space<vmem>>, vector<2x30x4xf32>,
    %c0_83 = arith.constant 0 : index
    %c7 = arith.constant 7 : index
    %c0_84 = arith.constant 0 : index
    %291 = vector.load %arg21[%c0_83, %c7, %c0_84] : memref<2x30x4xf32, #tpu.memory_space<vmem>>, vector<2x16x4xf32>
    tpu.vector_store %arg21[%c0_83, %c7, %c0_84], %288 {strides = array<i32>} : memref<2x30x4xf32, #tpu.memory_space<vmem>>, vector<2x16x4xf32>,
    %c0_85 = arith.constant 0 : index
    %c0_86 = arith.constant 0 : index
    %c0_87 = arith.constant 0 : index
    %292 = vector.load %arg21[%c0_85, %c0_86, %c0_87] : memref<2x30x4xf32, #tpu.memory_space<vmem>>, vector<2x16x4xf32>
    %c0_88 = arith.constant 0 : index
    %c0_89 = arith.constant 0 : index
    %c0_90 = arith.constant 0 : index
    %293 = vector.load %arg7[%c0_88, %c0_89, %c0_90] : memref<15x4x4xf32, #tpu.memory_space<vmem>>, vector<1x4x4xf32>
    %294 = vector.shape_cast %293 : vector<1x4x4xf32> to vector<4x4xf32>
    %295 = vector.extract_strided_slice %292 {offsets = [0, 0, 0], sizes = [2, 16, 1], strides = [1, 1, 1]} : vector<2x16x4xf32> to vector<2x16x1xf32>
    %296 = vector.extract_strided_slice %294 {offsets = [0, 0], sizes = [1, 4], strides = [1, 1]} : vector<4x4xf32> to vector<1x4xf32>
    %297 = vector.shape_cast %296 : vector<1x4xf32> to vector<1x1x4xf32>
    %298 = vector.broadcast %295 : vector<2x16x1xf32> to vector<2x16x4xf32>
    %299 = vector.broadcast %297 : vector<1x1x4xf32> to vector<2x16x4xf32>
    %300 = arith.mulf %298, %299 : vector<2x16x4xf32>
    %301 = vector.extract_strided_slice %292 {offsets = [0, 0, 1], sizes = [2, 16, 1], strides = [1, 1, 1]} : vector<2x16x4xf32> to vector<2x16x1xf32>
    %302 = vector.extract_strided_slice %294 {offsets = [1, 0], sizes = [1, 4], strides = [1, 1]} : vector<4x4xf32> to vector<1x4xf32>
    %303 = vector.shape_cast %302 : vector<1x4xf32> to vector<1x1x4xf32>
    %304 = vector.broadcast %301 : vector<2x16x1xf32> to vector<2x16x4xf32>
    %305 = vector.broadcast %303 : vector<1x1x4xf32> to vector<2x16x4xf32>
    %306 = arith.mulf %304, %305 : vector<2x16x4xf32>
    %307 = arith.addf %300, %306 : vector<2x16x4xf32>
    %308 = vector.extract_strided_slice %292 {offsets = [0, 0, 2], sizes = [2, 16, 1], strides = [1, 1, 1]} : vector<2x16x4xf32> to vector<2x16x1xf32>
    %309 = vector.extract_strided_slice %294 {offsets = [2, 0], sizes = [1, 4], strides = [1, 1]} : vector<4x4xf32> to vector<1x4xf32>
    %310 = vector.shape_cast %309 : vector<1x4xf32> to vector<1x1x4xf32>
    %311 = vector.broadcast %308 : vector<2x16x1xf32> to vector<2x16x4xf32>
    %312 = vector.broadcast %310 : vector<1x1x4xf32> to vector<2x16x4xf32>
    %313 = arith.mulf %311, %312 : vector<2x16x4xf32>
    %314 = arith.addf %307, %313 : vector<2x16x4xf32>
    %315 = vector.extract_strided_slice %292 {offsets = [0, 0, 3], sizes = [2, 16, 1], strides = [1, 1, 1]} : vector<2x16x4xf32> to vector<2x16x1xf32>
    %316 = vector.extract_strided_slice %294 {offsets = [3, 0], sizes = [1, 4], strides = [1, 1]} : vector<4x4xf32> to vector<1x4xf32>
    %317 = vector.shape_cast %316 : vector<1x4xf32> to vector<1x1x4xf32>
    %318 = vector.broadcast %315 : vector<2x16x1xf32> to vector<2x16x4xf32>
    %319 = vector.broadcast %317 : vector<1x1x4xf32> to vector<2x16x4xf32>
    %320 = arith.mulf %318, %319 : vector<2x16x4xf32>
    %321 = arith.addf %314, %320 : vector<2x16x4xf32>
    %c0_91 = arith.constant 0 : index
    %c1_92 = arith.constant 1 : index
    %c0_93 = arith.constant 0 : index
    %322 = vector.load %arg21[%c0_91, %c1_92, %c0_93] : memref<2x30x4xf32, #tpu.memory_space<vmem>>, vector<2x16x4xf32>
    %c1_94 = arith.constant 1 : index
    %c0_95 = arith.constant 0 : index
    %c0_96 = arith.constant 0 : index
    %323 = vector.load %arg7[%c1_94, %c0_95, %c0_96] : memref<15x4x4xf32, #tpu.memory_space<vmem>>, vector<1x4x4xf32>
    %324 = vector.shape_cast %323 : vector<1x4x4xf32> to vector<4x4xf32>
    %325 = vector.extract_strided_slice %322 {offsets = [0, 0, 0], sizes = [2, 16, 1], strides = [1, 1, 1]} : vector<2x16x4xf32> to vector<2x16x1xf32>
    %326 = vector.extract_strided_slice %324 {offsets = [0, 0], sizes = [1, 4], strides = [1, 1]} : vector<4x4xf32> to vector<1x4xf32>
    %327 = vector.shape_cast %326 : vector<1x4xf32> to vector<1x1x4xf32>
    %328 = vector.broadcast %325 : vector<2x16x1xf32> to vector<2x16x4xf32>
    %329 = vector.broadcast %327 : vector<1x1x4xf32> to vector<2x16x4xf32>
    %330 = arith.mulf %328, %329 : vector<2x16x4xf32>
    %331 = vector.extract_strided_slice %322 {offsets = [0, 0, 1], sizes = [2, 16, 1], strides = [1, 1, 1]} : vector<2x16x4xf32> to vector<2x16x1xf32>
    %332 = vector.extract_strided_slice %324 {offsets = [1, 0], sizes = [1, 4], strides = [1, 1]} : vector<4x4xf32> to vector<1x4xf32>
    %333 = vector.shape_cast %332 : vector<1x4xf32> to vector<1x1x4xf32>
    %334 = vector.broadcast %331 : vector<2x16x1xf32> to vector<2x16x4xf32>
    %335 = vector.broadcast %333 : vector<1x1x4xf32> to vector<2x16x4xf32>
    %336 = arith.mulf %334, %335 : vector<2x16x4xf32>
    %337 = arith.addf %330, %336 : vector<2x16x4xf32>
    %338 = vector.extract_strided_slice %322 {offsets = [0, 0, 2], sizes = [2, 16, 1], strides = [1, 1, 1]} : vector<2x16x4xf32> to vector<2x16x1xf32>
    %339 = vector.extract_strided_slice %324 {offsets = [2, 0], sizes = [1, 4], strides = [1, 1]} : vector<4x4xf32> to vector<1x4xf32>
    %340 = vector.shape_cast %339 : vector<1x4xf32> to vector<1x1x4xf32>
    %341 = vector.broadcast %338 : vector<2x16x1xf32> to vector<2x16x4xf32>
    %342 = vector.broadcast %340 : vector<1x1x4xf32> to vector<2x16x4xf32>
    %343 = arith.mulf %341, %342 : vector<2x16x4xf32>
    %344 = arith.addf %337, %343 : vector<2x16x4xf32>
    %345 = vector.extract_strided_slice %322 {offsets = [0, 0, 3], sizes = [2, 16, 1], strides = [1, 1, 1]} : vector<2x16x4xf32> to vector<2x16x1xf32>
    %346 = vector.extract_strided_slice %324 {offsets = [3, 0], sizes = [1, 4], strides = [1, 1]} : vector<4x4xf32> to vector<1x4xf32>
    %347 = vector.shape_cast %346 : vector<1x4xf32> to vector<1x1x4xf32>
    %348 = vector.broadcast %345 : vector<2x16x1xf32> to vector<2x16x4xf32>
    %349 = vector.broadcast %347 : vector<1x1x4xf32> to vector<2x16x4xf32>
    %350 = arith.mulf %348, %349 : vector<2x16x4xf32>
    %351 = arith.addf %344, %350 : vector<2x16x4xf32>
    %352 = arith.addf %321, %351 : vector<2x16x4xf32>
    %c0_97 = arith.constant 0 : index
    %c2_98 = arith.constant 2 : index
    %c0_99 = arith.constant 0 : index
    %353 = vector.load %arg21[%c0_97, %c2_98, %c0_99] : memref<2x30x4xf32, #tpu.memory_space<vmem>>, vector<2x16x4xf32>
    %c2_100 = arith.constant 2 : index
    %c0_101 = arith.constant 0 : index
    %c0_102 = arith.constant 0 : index
    %354 = vector.load %arg7[%c2_100, %c0_101, %c0_102] : memref<15x4x4xf32, #tpu.memory_space<vmem>>, vector<1x4x4xf32>
    %355 = vector.shape_cast %354 : vector<1x4x4xf32> to vector<4x4xf32>
    %356 = vector.extract_strided_slice %353 {offsets = [0, 0, 0], sizes = [2, 16, 1], strides = [1, 1, 1]} : vector<2x16x4xf32> to vector<2x16x1xf32>
    %357 = vector.extract_strided_slice %355 {offsets = [0, 0], sizes = [1, 4], strides = [1, 1]} : vector<4x4xf32> to vector<1x4xf32>
    %358 = vector.shape_cast %357 : vector<1x4xf32> to vector<1x1x4xf32>
    %359 = vector.broadcast %356 : vector<2x16x1xf32> to vector<2x16x4xf32>
    %360 = vector.broadcast %358 : vector<1x1x4xf32> to vector<2x16x4xf32>
    %361 = arith.mulf %359, %360 : vector<2x16x4xf32>
    %362 = vector.extract_strided_slice %353 {offsets = [0, 0, 1], sizes = [2, 16, 1], strides = [1, 1, 1]} : vector<2x16x4xf32> to vector<2x16x1xf32>
    %363 = vector.extract_strided_slice %355 {offsets = [1, 0], sizes = [1, 4], strides = [1, 1]} : vector<4x4xf32> to vector<1x4xf32>
    %364 = vector.shape_cast %363 : vector<1x4xf32> to vector<1x1x4xf32>
    %365 = vector.broadcast %362 : vector<2x16x1xf32> to vector<2x16x4xf32>
    %366 = vector.broadcast %364 : vector<1x1x4xf32> to vector<2x16x4xf32>
    %367 = arith.mulf %365, %366 : vector<2x16x4xf32>
    %368 = arith.addf %361, %367 : vector<2x16x4xf32>
    %369 = vector.extract_strided_slice %353 {offsets = [0, 0, 2], sizes = [2, 16, 1], strides = [1, 1, 1]} : vector<2x16x4xf32> to vector<2x16x1xf32>
    %370 = vector.extract_strided_slice %355 {offsets = [2, 0], sizes = [1, 4], strides = [1, 1]} : vector<4x4xf32> to vector<1x4xf32>
    %371 = vector.shape_cast %370 : vector<1x4xf32> to vector<1x1x4xf32>
    %372 = vector.broadcast %369 : vector<2x16x1xf32> to vector<2x16x4xf32>
    %373 = vector.broadcast %371 : vector<1x1x4xf32> to vector<2x16x4xf32>
    %374 = arith.mulf %372, %373 : vector<2x16x4xf32>
    %375 = arith.addf %368, %374 : vector<2x16x4xf32>
    %376 = vector.extract_strided_slice %353 {offsets = [0, 0, 3], sizes = [2, 16, 1], strides = [1, 1, 1]} : vector<2x16x4xf32> to vector<2x16x1xf32>
    %377 = vector.extract_strided_slice %355 {offsets = [3, 0], sizes = [1, 4], strides = [1, 1]} : vector<4x4xf32> to vector<1x4xf32>
    %378 = vector.shape_cast %377 : vector<1x4xf32> to vector<1x1x4xf32>
    %379 = vector.broadcast %376 : vector<2x16x1xf32> to vector<2x16x4xf32>
    %380 = vector.broadcast %378 : vector<1x1x4xf32> to vector<2x16x4xf32>
    %381 = arith.mulf %379, %380 : vector<2x16x4xf32>
    %382 = arith.addf %375, %381 : vector<2x16x4xf32>
    %383 = arith.addf %352, %382 : vector<2x16x4xf32>
    %c0_103 = arith.constant 0 : index
    %c3_104 = arith.constant 3 : index
    %c0_105 = arith.constant 0 : index
    %384 = vector.load %arg21[%c0_103, %c3_104, %c0_105] : memref<2x30x4xf32, #tpu.memory_space<vmem>>, vector<2x16x4xf32>
    %c3_106 = arith.constant 3 : index
    %c0_107 = arith.constant 0 : index
    %c0_108 = arith.constant 0 : index
    %385 = vector.load %arg7[%c3_106, %c0_107, %c0_108] : memref<15x4x4xf32, #tpu.memory_space<vmem>>, vector<1x4x4xf32>
    %386 = vector.shape_cast %385 : vector<1x4x4xf32> to vector<4x4xf32>
    %387 = vector.extract_strided_slice %384 {offsets = [0, 0, 0], sizes = [2, 16, 1], strides = [1, 1, 1]} : vector<2x16x4xf32> to vector<2x16x1xf32>
    %388 = vector.extract_strided_slice %386 {offsets = [0, 0], sizes = [1, 4], strides = [1, 1]} : vector<4x4xf32> to vector<1x4xf32>
    %389 = vector.shape_cast %388 : vector<1x4xf32> to vector<1x1x4xf32>
    %390 = vector.broadcast %387 : vector<2x16x1xf32> to vector<2x16x4xf32>
    %391 = vector.broadcast %389 : vector<1x1x4xf32> to vector<2x16x4xf32>
    %392 = arith.mulf %390, %391 : vector<2x16x4xf32>
    %393 = vector.extract_strided_slice %384 {offsets = [0, 0, 1], sizes = [2, 16, 1], strides = [1, 1, 1]} : vector<2x16x4xf32> to vector<2x16x1xf32>
    %394 = vector.extract_strided_slice %386 {offsets = [1, 0], sizes = [1, 4], strides = [1, 1]} : vector<4x4xf32> to vector<1x4xf32>
    %395 = vector.shape_cast %394 : vector<1x4xf32> to vector<1x1x4xf32>
    %396 = vector.broadcast %393 : vector<2x16x1xf32> to vector<2x16x4xf32>
    %397 = vector.broadcast %395 : vector<1x1x4xf32> to vector<2x16x4xf32>
    %398 = arith.mulf %396, %397 : vector<2x16x4xf32>
    %399 = arith.addf %392, %398 : vector<2x16x4xf32>
    %400 = vector.extract_strided_slice %384 {offsets = [0, 0, 2], sizes = [2, 16, 1], strides = [1, 1, 1]} : vector<2x16x4xf32> to vector<2x16x1xf32>
    %401 = vector.extract_strided_slice %386 {offsets = [2, 0], sizes = [1, 4], strides = [1, 1]} : vector<4x4xf32> to vector<1x4xf32>
    %402 = vector.shape_cast %401 : vector<1x4xf32> to vector<1x1x4xf32>
    %403 = vector.broadcast %400 : vector<2x16x1xf32> to vector<2x16x4xf32>
    %404 = vector.broadcast %402 : vector<1x1x4xf32> to vector<2x16x4xf32>
    %405 = arith.mulf %403, %404 : vector<2x16x4xf32>
    %406 = arith.addf %399, %405 : vector<2x16x4xf32>
    %407 = vector.extract_strided_slice %384 {offsets = [0, 0, 3], sizes = [2, 16, 1], strides = [1, 1, 1]} : vector<2x16x4xf32> to vector<2x16x1xf32>
    %408 = vector.extract_strided_slice %386 {offsets = [3, 0], sizes = [1, 4], strides = [1, 1]} : vector<4x4xf32> to vector<1x4xf32>
    %409 = vector.shape_cast %408 : vector<1x4xf32> to vector<1x1x4xf32>
    %410 = vector.broadcast %407 : vector<2x16x1xf32> to vector<2x16x4xf32>
    %411 = vector.broadcast %409 : vector<1x1x4xf32> to vector<2x16x4xf32>
    %412 = arith.mulf %410, %411 : vector<2x16x4xf32>
    %413 = arith.addf %406, %412 : vector<2x16x4xf32>
    %414 = arith.addf %383, %413 : vector<2x16x4xf32>
    %c0_109 = arith.constant 0 : index
    %c4_110 = arith.constant 4 : index
    %c0_111 = arith.constant 0 : index
    %415 = vector.load %arg21[%c0_109, %c4_110, %c0_111] : memref<2x30x4xf32, #tpu.memory_space<vmem>>, vector<2x16x4xf32>
    %c4_112 = arith.constant 4 : index
    %c0_113 = arith.constant 0 : index
    %c0_114 = arith.constant 0 : index
    %416 = vector.load %arg7[%c4_112, %c0_113, %c0_114] : memref<15x4x4xf32, #tpu.memory_space<vmem>>, vector<1x4x4xf32>
    %417 = vector.shape_cast %416 : vector<1x4x4xf32> to vector<4x4xf32>
    %418 = vector.extract_strided_slice %415 {offsets = [0, 0, 0], sizes = [2, 16, 1], strides = [1, 1, 1]} : vector<2x16x4xf32> to vector<2x16x1xf32>
    %419 = vector.extract_strided_slice %417 {offsets = [0, 0], sizes = [1, 4], strides = [1, 1]} : vector<4x4xf32> to vector<1x4xf32>
    %420 = vector.shape_cast %419 : vector<1x4xf32> to vector<1x1x4xf32>
    %421 = vector.broadcast %418 : vector<2x16x1xf32> to vector<2x16x4xf32>
    %422 = vector.broadcast %420 : vector<1x1x4xf32> to vector<2x16x4xf32>
    %423 = arith.mulf %421, %422 : vector<2x16x4xf32>
    %424 = vector.extract_strided_slice %415 {offsets = [0, 0, 1], sizes = [2, 16, 1], strides = [1, 1, 1]} : vector<2x16x4xf32> to vector<2x16x1xf32>
    %425 = vector.extract_strided_slice %417 {offsets = [1, 0], sizes = [1, 4], strides = [1, 1]} : vector<4x4xf32> to vector<1x4xf32>
    %426 = vector.shape_cast %425 : vector<1x4xf32> to vector<1x1x4xf32>
    %427 = vector.broadcast %424 : vector<2x16x1xf32> to vector<2x16x4xf32>
    %428 = vector.broadcast %426 : vector<1x1x4xf32> to vector<2x16x4xf32>
    %429 = arith.mulf %427, %428 : vector<2x16x4xf32>
    %430 = arith.addf %423, %429 : vector<2x16x4xf32>
    %431 = vector.extract_strided_slice %415 {offsets = [0, 0, 2], sizes = [2, 16, 1], strides = [1, 1, 1]} : vector<2x16x4xf32> to vector<2x16x1xf32>
    %432 = vector.extract_strided_slice %417 {offsets = [2, 0], sizes = [1, 4], strides = [1, 1]} : vector<4x4xf32> to vector<1x4xf32>
    %433 = vector.shape_cast %432 : vector<1x4xf32> to vector<1x1x4xf32>
    %434 = vector.broadcast %431 : vector<2x16x1xf32> to vector<2x16x4xf32>
    %435 = vector.broadcast %433 : vector<1x1x4xf32> to vector<2x16x4xf32>
    %436 = arith.mulf %434, %435 : vector<2x16x4xf32>
    %437 = arith.addf %430, %436 : vector<2x16x4xf32>
    %438 = vector.extract_strided_slice %415 {offsets = [0, 0, 3], sizes = [2, 16, 1], strides = [1, 1, 1]} : vector<2x16x4xf32> to vector<2x16x1xf32>
    %439 = vector.extract_strided_slice %417 {offsets = [3, 0], sizes = [1, 4], strides = [1, 1]} : vector<4x4xf32> to vector<1x4xf32>
    %440 = vector.shape_cast %439 : vector<1x4xf32> to vector<1x1x4xf32>
    %441 = vector.broadcast %438 : vector<2x16x1xf32> to vector<2x16x4xf32>
    %442 = vector.broadcast %440 : vector<1x1x4xf32> to vector<2x16x4xf32>
    %443 = arith.mulf %441, %442 : vector<2x16x4xf32>
    %444 = arith.addf %437, %443 : vector<2x16x4xf32>
    %445 = arith.addf %414, %444 : vector<2x16x4xf32>
    %c0_115 = arith.constant 0 : index
    %c5_116 = arith.constant 5 : index
    %c0_117 = arith.constant 0 : index
    %446 = vector.load %arg21[%c0_115, %c5_116, %c0_117] : memref<2x30x4xf32, #tpu.memory_space<vmem>>, vector<2x16x4xf32>
    %c5_118 = arith.constant 5 : index
    %c0_119 = arith.constant 0 : index
    %c0_120 = arith.constant 0 : index
    %447 = vector.load %arg7[%c5_118, %c0_119, %c0_120] : memref<15x4x4xf32, #tpu.memory_space<vmem>>, vector<1x4x4xf32>
    %448 = vector.shape_cast %447 : vector<1x4x4xf32> to vector<4x4xf32>
    %449 = vector.extract_strided_slice %446 {offsets = [0, 0, 0], sizes = [2, 16, 1], strides = [1, 1, 1]} : vector<2x16x4xf32> to vector<2x16x1xf32>
    %450 = vector.extract_strided_slice %448 {offsets = [0, 0], sizes = [1, 4], strides = [1, 1]} : vector<4x4xf32> to vector<1x4xf32>
    %451 = vector.shape_cast %450 : vector<1x4xf32> to vector<1x1x4xf32>
    %452 = vector.broadcast %449 : vector<2x16x1xf32> to vector<2x16x4xf32>
    %453 = vector.broadcast %451 : vector<1x1x4xf32> to vector<2x16x4xf32>
    %454 = arith.mulf %452, %453 : vector<2x16x4xf32>
    %455 = vector.extract_strided_slice %446 {offsets = [0, 0, 1], sizes = [2, 16, 1], strides = [1, 1, 1]} : vector<2x16x4xf32> to vector<2x16x1xf32>
    %456 = vector.extract_strided_slice %448 {offsets = [1, 0], sizes = [1, 4], strides = [1, 1]} : vector<4x4xf32> to vector<1x4xf32>
    %457 = vector.shape_cast %456 : vector<1x4xf32> to vector<1x1x4xf32>
    %458 = vector.broadcast %455 : vector<2x16x1xf32> to vector<2x16x4xf32>
    %459 = vector.broadcast %457 : vector<1x1x4xf32> to vector<2x16x4xf32>
    %460 = arith.mulf %458, %459 : vector<2x16x4xf32>
    %461 = arith.addf %454, %460 : vector<2x16x4xf32>
    %462 = vector.extract_strided_slice %446 {offsets = [0, 0, 2], sizes = [2, 16, 1], strides = [1, 1, 1]} : vector<2x16x4xf32> to vector<2x16x1xf32>
    %463 = vector.extract_strided_slice %448 {offsets = [2, 0], sizes = [1, 4], strides = [1, 1]} : vector<4x4xf32> to vector<1x4xf32>
    %464 = vector.shape_cast %463 : vector<1x4xf32> to vector<1x1x4xf32>
    %465 = vector.broadcast %462 : vector<2x16x1xf32> to vector<2x16x4xf32>
    %466 = vector.broadcast %464 : vector<1x1x4xf32> to vector<2x16x4xf32>
    %467 = arith.mulf %465, %466 : vector<2x16x4xf32>
    %468 = arith.addf %461, %467 : vector<2x16x4xf32>
    %469 = vector.extract_strided_slice %446 {offsets = [0, 0, 3], sizes = [2, 16, 1], strides = [1, 1, 1]} : vector<2x16x4xf32> to vector<2x16x1xf32>
    %470 = vector.extract_strided_slice %448 {offsets = [3, 0], sizes = [1, 4], strides = [1, 1]} : vector<4x4xf32> to vector<1x4xf32>
    %471 = vector.shape_cast %470 : vector<1x4xf32> to vector<1x1x4xf32>
    %472 = vector.broadcast %469 : vector<2x16x1xf32> to vector<2x16x4xf32>
    %473 = vector.broadcast %471 : vector<1x1x4xf32> to vector<2x16x4xf32>
    %474 = arith.mulf %472, %473 : vector<2x16x4xf32>
    %475 = arith.addf %468, %474 : vector<2x16x4xf32>
    %476 = arith.addf %445, %475 : vector<2x16x4xf32>
    %c0_121 = arith.constant 0 : index
    %c6_122 = arith.constant 6 : index
    %c0_123 = arith.constant 0 : index
    %477 = vector.load %arg21[%c0_121, %c6_122, %c0_123] : memref<2x30x4xf32, #tpu.memory_space<vmem>>, vector<2x16x4xf32>
    %c6_124 = arith.constant 6 : index
    %c0_125 = arith.constant 0 : index
    %c0_126 = arith.constant 0 : index
    %478 = vector.load %arg7[%c6_124, %c0_125, %c0_126] : memref<15x4x4xf32, #tpu.memory_space<vmem>>, vector<1x4x4xf32>
    %479 = vector.shape_cast %478 : vector<1x4x4xf32> to vector<4x4xf32>
    %480 = vector.extract_strided_slice %477 {offsets = [0, 0, 0], sizes = [2, 16, 1], strides = [1, 1, 1]} : vector<2x16x4xf32> to vector<2x16x1xf32>
    %481 = vector.extract_strided_slice %479 {offsets = [0, 0], sizes = [1, 4], strides = [1, 1]} : vector<4x4xf32> to vector<1x4xf32>
    %482 = vector.shape_cast %481 : vector<1x4xf32> to vector<1x1x4xf32>
    %483 = vector.broadcast %480 : vector<2x16x1xf32> to vector<2x16x4xf32>
    %484 = vector.broadcast %482 : vector<1x1x4xf32> to vector<2x16x4xf32>
    %485 = arith.mulf %483, %484 : vector<2x16x4xf32>
    %486 = vector.extract_strided_slice %477 {offsets = [0, 0, 1], sizes = [2, 16, 1], strides = [1, 1, 1]} : vector<2x16x4xf32> to vector<2x16x1xf32>
    %487 = vector.extract_strided_slice %479 {offsets = [1, 0], sizes = [1, 4], strides = [1, 1]} : vector<4x4xf32> to vector<1x4xf32>
    %488 = vector.shape_cast %487 : vector<1x4xf32> to vector<1x1x4xf32>
    %489 = vector.broadcast %486 : vector<2x16x1xf32> to vector<2x16x4xf32>
    %490 = vector.broadcast %488 : vector<1x1x4xf32> to vector<2x16x4xf32>
    %491 = arith.mulf %489, %490 : vector<2x16x4xf32>
    %492 = arith.addf %485, %491 : vector<2x16x4xf32>
    %493 = vector.extract_strided_slice %477 {offsets = [0, 0, 2], sizes = [2, 16, 1], strides = [1, 1, 1]} : vector<2x16x4xf32> to vector<2x16x1xf32>
    %494 = vector.extract_strided_slice %479 {offsets = [2, 0], sizes = [1, 4], strides = [1, 1]} : vector<4x4xf32> to vector<1x4xf32>
    %495 = vector.shape_cast %494 : vector<1x4xf32> to vector<1x1x4xf32>
    %496 = vector.broadcast %493 : vector<2x16x1xf32> to vector<2x16x4xf32>
    %497 = vector.broadcast %495 : vector<1x1x4xf32> to vector<2x16x4xf32>
    %498 = arith.mulf %496, %497 : vector<2x16x4xf32>
    %499 = arith.addf %492, %498 : vector<2x16x4xf32>
    %500 = vector.extract_strided_slice %477 {offsets = [0, 0, 3], sizes = [2, 16, 1], strides = [1, 1, 1]} : vector<2x16x4xf32> to vector<2x16x1xf32>
    %501 = vector.extract_strided_slice %479 {offsets = [3, 0], sizes = [1, 4], strides = [1, 1]} : vector<4x4xf32> to vector<1x4xf32>
    %502 = vector.shape_cast %501 : vector<1x4xf32> to vector<1x1x4xf32>
    %503 = vector.broadcast %500 : vector<2x16x1xf32> to vector<2x16x4xf32>
    %504 = vector.broadcast %502 : vector<1x1x4xf32> to vector<2x16x4xf32>
    %505 = arith.mulf %503, %504 : vector<2x16x4xf32>
    %506 = arith.addf %499, %505 : vector<2x16x4xf32>
    %507 = arith.addf %476, %506 : vector<2x16x4xf32>
    %c0_127 = arith.constant 0 : index
    %c7_128 = arith.constant 7 : index
    %c0_129 = arith.constant 0 : index
    %508 = vector.load %arg21[%c0_127, %c7_128, %c0_129] : memref<2x30x4xf32, #tpu.memory_space<vmem>>, vector<2x16x4xf32>
    %c7_130 = arith.constant 7 : index
    %c0_131 = arith.constant 0 : index
    %c0_132 = arith.constant 0 : index
    %509 = vector.load %arg7[%c7_130, %c0_131, %c0_132] : memref<15x4x4xf32, #tpu.memory_space<vmem>>, vector<1x4x4xf32>
    %510 = vector.shape_cast %509 : vector<1x4x4xf32> to vector<4x4xf32>
    %511 = vector.extract_strided_slice %508 {offsets = [0, 0, 0], sizes = [2, 16, 1], strides = [1, 1, 1]} : vector<2x16x4xf32> to vector<2x16x1xf32>
    %512 = vector.extract_strided_slice %510 {offsets = [0, 0], sizes = [1, 4], strides = [1, 1]} : vector<4x4xf32> to vector<1x4xf32>
    %513 = vector.shape_cast %512 : vector<1x4xf32> to vector<1x1x4xf32>
    %514 = vector.broadcast %511 : vector<2x16x1xf32> to vector<2x16x4xf32>
    %515 = vector.broadcast %513 : vector<1x1x4xf32> to vector<2x16x4xf32>
    %516 = arith.mulf %514, %515 : vector<2x16x4xf32>
    %517 = vector.extract_strided_slice %508 {offsets = [0, 0, 1], sizes = [2, 16, 1], strides = [1, 1, 1]} : vector<2x16x4xf32> to vector<2x16x1xf32>
    %518 = vector.extract_strided_slice %510 {offsets = [1, 0], sizes = [1, 4], strides = [1, 1]} : vector<4x4xf32> to vector<1x4xf32>
    %519 = vector.shape_cast %518 : vector<1x4xf32> to vector<1x1x4xf32>
    %520 = vector.broadcast %517 : vector<2x16x1xf32> to vector<2x16x4xf32>
    %521 = vector.broadcast %519 : vector<1x1x4xf32> to vector<2x16x4xf32>
    %522 = arith.mulf %520, %521 : vector<2x16x4xf32>
    %523 = arith.addf %516, %522 : vector<2x16x4xf32>
    %524 = vector.extract_strided_slice %508 {offsets = [0, 0, 2], sizes = [2, 16, 1], strides = [1, 1, 1]} : vector<2x16x4xf32> to vector<2x16x1xf32>
    %525 = vector.extract_strided_slice %510 {offsets = [2, 0], sizes = [1, 4], strides = [1, 1]} : vector<4x4xf32> to vector<1x4xf32>
    %526 = vector.shape_cast %525 : vector<1x4xf32> to vector<1x1x4xf32>
    %527 = vector.broadcast %524 : vector<2x16x1xf32> to vector<2x16x4xf32>
    %528 = vector.broadcast %526 : vector<1x1x4xf32> to vector<2x16x4xf32>
    %529 = arith.mulf %527, %528 : vector<2x16x4xf32>
    %530 = arith.addf %523, %529 : vector<2x16x4xf32>
    %531 = vector.extract_strided_slice %508 {offsets = [0, 0, 3], sizes = [2, 16, 1], strides = [1, 1, 1]} : vector<2x16x4xf32> to vector<2x16x1xf32>
    %532 = vector.extract_strided_slice %510 {offsets = [3, 0], sizes = [1, 4], strides = [1, 1]} : vector<4x4xf32> to vector<1x4xf32>
    %533 = vector.shape_cast %532 : vector<1x4xf32> to vector<1x1x4xf32>
    %534 = vector.broadcast %531 : vector<2x16x1xf32> to vector<2x16x4xf32>
    %535 = vector.broadcast %533 : vector<1x1x4xf32> to vector<2x16x4xf32>
    %536 = arith.mulf %534, %535 : vector<2x16x4xf32>
    %537 = arith.addf %530, %536 : vector<2x16x4xf32>
    %538 = arith.addf %507, %537 : vector<2x16x4xf32>
    %c0_133 = arith.constant 0 : index
    %c8 = arith.constant 8 : index
    %c0_134 = arith.constant 0 : index
    %539 = vector.load %arg21[%c0_133, %c8, %c0_134] : memref<2x30x4xf32, #tpu.memory_space<vmem>>, vector<2x16x4xf32>
    %c8_135 = arith.constant 8 : index
    %c0_136 = arith.constant 0 : index
    %c0_137 = arith.constant 0 : index
    %540 = vector.load %arg7[%c8_135, %c0_136, %c0_137] : memref<15x4x4xf32, #tpu.memory_space<vmem>>, vector<1x4x4xf32>
    %541 = vector.shape_cast %540 : vector<1x4x4xf32> to vector<4x4xf32>
    %542 = vector.extract_strided_slice %539 {offsets = [0, 0, 0], sizes = [2, 16, 1], strides = [1, 1, 1]} : vector<2x16x4xf32> to vector<2x16x1xf32>
    %543 = vector.extract_strided_slice %541 {offsets = [0, 0], sizes = [1, 4], strides = [1, 1]} : vector<4x4xf32> to vector<1x4xf32>
    %544 = vector.shape_cast %543 : vector<1x4xf32> to vector<1x1x4xf32>
    %545 = vector.broadcast %542 : vector<2x16x1xf32> to vector<2x16x4xf32>
    %546 = vector.broadcast %544 : vector<1x1x4xf32> to vector<2x16x4xf32>
    %547 = arith.mulf %545, %546 : vector<2x16x4xf32>
    %548 = vector.extract_strided_slice %539 {offsets = [0, 0, 1], sizes = [2, 16, 1], strides = [1, 1, 1]} : vector<2x16x4xf32> to vector<2x16x1xf32>
    %549 = vector.extract_strided_slice %541 {offsets = [1, 0], sizes = [1, 4], strides = [1, 1]} : vector<4x4xf32> to vector<1x4xf32>
    %550 = vector.shape_cast %549 : vector<1x4xf32> to vector<1x1x4xf32>
    %551 = vector.broadcast %548 : vector<2x16x1xf32> to vector<2x16x4xf32>
    %552 = vector.broadcast %550 : vector<1x1x4xf32> to vector<2x16x4xf32>
    %553 = arith.mulf %551, %552 : vector<2x16x4xf32>
    %554 = arith.addf %547, %553 : vector<2x16x4xf32>
    %555 = vector.extract_strided_slice %539 {offsets = [0, 0, 2], sizes = [2, 16, 1], strides = [1, 1, 1]} : vector<2x16x4xf32> to vector<2x16x1xf32>
    %556 = vector.extract_strided_slice %541 {offsets = [2, 0], sizes = [1, 4], strides = [1, 1]} : vector<4x4xf32> to vector<1x4xf32>
    %557 = vector.shape_cast %556 : vector<1x4xf32> to vector<1x1x4xf32>
    %558 = vector.broadcast %555 : vector<2x16x1xf32> to vector<2x16x4xf32>
    %559 = vector.broadcast %557 : vector<1x1x4xf32> to vector<2x16x4xf32>
    %560 = arith.mulf %558, %559 : vector<2x16x4xf32>
    %561 = arith.addf %554, %560 : vector<2x16x4xf32>
    %562 = vector.extract_strided_slice %539 {offsets = [0, 0, 3], sizes = [2, 16, 1], strides = [1, 1, 1]} : vector<2x16x4xf32> to vector<2x16x1xf32>
    %563 = vector.extract_strided_slice %541 {offsets = [3, 0], sizes = [1, 4], strides = [1, 1]} : vector<4x4xf32> to vector<1x4xf32>
    %564 = vector.shape_cast %563 : vector<1x4xf32> to vector<1x1x4xf32>
    %565 = vector.broadcast %562 : vector<2x16x1xf32> to vector<2x16x4xf32>
    %566 = vector.broadcast %564 : vector<1x1x4xf32> to vector<2x16x4xf32>
    %567 = arith.mulf %565, %566 : vector<2x16x4xf32>
    %568 = arith.addf %561, %567 : vector<2x16x4xf32>
    %569 = arith.addf %538, %568 : vector<2x16x4xf32>
    %c0_138 = arith.constant 0 : index
    %c9 = arith.constant 9 : index
    %c0_139 = arith.constant 0 : index
    %570 = vector.load %arg21[%c0_138, %c9, %c0_139] : memref<2x30x4xf32, #tpu.memory_space<vmem>>, vector<2x16x4xf32>
    %c9_140 = arith.constant 9 : index
    %c0_141 = arith.constant 0 : index
    %c0_142 = arith.constant 0 : index
    %571 = vector.load %arg7[%c9_140, %c0_141, %c0_142] : memref<15x4x4xf32, #tpu.memory_space<vmem>>, vector<1x4x4xf32>
    %572 = vector.shape_cast %571 : vector<1x4x4xf32> to vector<4x4xf32>
    %573 = vector.extract_strided_slice %570 {offsets = [0, 0, 0], sizes = [2, 16, 1], strides = [1, 1, 1]} : vector<2x16x4xf32> to vector<2x16x1xf32>
    %574 = vector.extract_strided_slice %572 {offsets = [0, 0], sizes = [1, 4], strides = [1, 1]} : vector<4x4xf32> to vector<1x4xf32>
    %575 = vector.shape_cast %574 : vector<1x4xf32> to vector<1x1x4xf32>
    %576 = vector.broadcast %573 : vector<2x16x1xf32> to vector<2x16x4xf32>
    %577 = vector.broadcast %575 : vector<1x1x4xf32> to vector<2x16x4xf32>
    %578 = arith.mulf %576, %577 : vector<2x16x4xf32>
    %579 = vector.extract_strided_slice %570 {offsets = [0, 0, 1], sizes = [2, 16, 1], strides = [1, 1, 1]} : vector<2x16x4xf32> to vector<2x16x1xf32>
    %580 = vector.extract_strided_slice %572 {offsets = [1, 0], sizes = [1, 4], strides = [1, 1]} : vector<4x4xf32> to vector<1x4xf32>
    %581 = vector.shape_cast %580 : vector<1x4xf32> to vector<1x1x4xf32>
    %582 = vector.broadcast %579 : vector<2x16x1xf32> to vector<2x16x4xf32>
    %583 = vector.broadcast %581 : vector<1x1x4xf32> to vector<2x16x4xf32>
    %584 = arith.mulf %582, %583 : vector<2x16x4xf32>
    %585 = arith.addf %578, %584 : vector<2x16x4xf32>
    %586 = vector.extract_strided_slice %570 {offsets = [0, 0, 2], sizes = [2, 16, 1], strides = [1, 1, 1]} : vector<2x16x4xf32> to vector<2x16x1xf32>
    %587 = vector.extract_strided_slice %572 {offsets = [2, 0], sizes = [1, 4], strides = [1, 1]} : vector<4x4xf32> to vector<1x4xf32>
    %588 = vector.shape_cast %587 : vector<1x4xf32> to vector<1x1x4xf32>
    %589 = vector.broadcast %586 : vector<2x16x1xf32> to vector<2x16x4xf32>
    %590 = vector.broadcast %588 : vector<1x1x4xf32> to vector<2x16x4xf32>
    %591 = arith.mulf %589, %590 : vector<2x16x4xf32>
    %592 = arith.addf %585, %591 : vector<2x16x4xf32>
    %593 = vector.extract_strided_slice %570 {offsets = [0, 0, 3], sizes = [2, 16, 1], strides = [1, 1, 1]} : vector<2x16x4xf32> to vector<2x16x1xf32>
    %594 = vector.extract_strided_slice %572 {offsets = [3, 0], sizes = [1, 4], strides = [1, 1]} : vector<4x4xf32> to vector<1x4xf32>
    %595 = vector.shape_cast %594 : vector<1x4xf32> to vector<1x1x4xf32>
    %596 = vector.broadcast %593 : vector<2x16x1xf32> to vector<2x16x4xf32>
    %597 = vector.broadcast %595 : vector<1x1x4xf32> to vector<2x16x4xf32>
    %598 = arith.mulf %596, %597 : vector<2x16x4xf32>
    %599 = arith.addf %592, %598 : vector<2x16x4xf32>
    %600 = arith.addf %569, %599 : vector<2x16x4xf32>
    %c0_143 = arith.constant 0 : index
    %c10 = arith.constant 10 : index
    %c0_144 = arith.constant 0 : index
    %601 = vector.load %arg21[%c0_143, %c10, %c0_144] : memref<2x30x4xf32, #tpu.memory_space<vmem>>, vector<2x16x4xf32>
    %c10_145 = arith.constant 10 : index
    %c0_146 = arith.constant 0 : index
    %c0_147 = arith.constant 0 : index
    %602 = vector.load %arg7[%c10_145, %c0_146, %c0_147] : memref<15x4x4xf32, #tpu.memory_space<vmem>>, vector<1x4x4xf32>
    %603 = vector.shape_cast %602 : vector<1x4x4xf32> to vector<4x4xf32>
    %604 = vector.extract_strided_slice %601 {offsets = [0, 0, 0], sizes = [2, 16, 1], strides = [1, 1, 1]} : vector<2x16x4xf32> to vector<2x16x1xf32>
    %605 = vector.extract_strided_slice %603 {offsets = [0, 0], sizes = [1, 4], strides = [1, 1]} : vector<4x4xf32> to vector<1x4xf32>
    %606 = vector.shape_cast %605 : vector<1x4xf32> to vector<1x1x4xf32>
    %607 = vector.broadcast %604 : vector<2x16x1xf32> to vector<2x16x4xf32>
    %608 = vector.broadcast %606 : vector<1x1x4xf32> to vector<2x16x4xf32>
    %609 = arith.mulf %607, %608 : vector<2x16x4xf32>
    %610 = vector.extract_strided_slice %601 {offsets = [0, 0, 1], sizes = [2, 16, 1], strides = [1, 1, 1]} : vector<2x16x4xf32> to vector<2x16x1xf32>
    %611 = vector.extract_strided_slice %603 {offsets = [1, 0], sizes = [1, 4], strides = [1, 1]} : vector<4x4xf32> to vector<1x4xf32>
    %612 = vector.shape_cast %611 : vector<1x4xf32> to vector<1x1x4xf32>
    %613 = vector.broadcast %610 : vector<2x16x1xf32> to vector<2x16x4xf32>
    %614 = vector.broadcast %612 : vector<1x1x4xf32> to vector<2x16x4xf32>
    %615 = arith.mulf %613, %614 : vector<2x16x4xf32>
    %616 = arith.addf %609, %615 : vector<2x16x4xf32>
    %617 = vector.extract_strided_slice %601 {offsets = [0, 0, 2], sizes = [2, 16, 1], strides = [1, 1, 1]} : vector<2x16x4xf32> to vector<2x16x1xf32>
    %618 = vector.extract_strided_slice %603 {offsets = [2, 0], sizes = [1, 4], strides = [1, 1]} : vector<4x4xf32> to vector<1x4xf32>
    %619 = vector.shape_cast %618 : vector<1x4xf32> to vector<1x1x4xf32>
    %620 = vector.broadcast %617 : vector<2x16x1xf32> to vector<2x16x4xf32>
    %621 = vector.broadcast %619 : vector<1x1x4xf32> to vector<2x16x4xf32>
    %622 = arith.mulf %620, %621 : vector<2x16x4xf32>
    %623 = arith.addf %616, %622 : vector<2x16x4xf32>
    %624 = vector.extract_strided_slice %601 {offsets = [0, 0, 3], sizes = [2, 16, 1], strides = [1, 1, 1]} : vector<2x16x4xf32> to vector<2x16x1xf32>
    %625 = vector.extract_strided_slice %603 {offsets = [3, 0], sizes = [1, 4], strides = [1, 1]} : vector<4x4xf32> to vector<1x4xf32>
    %626 = vector.shape_cast %625 : vector<1x4xf32> to vector<1x1x4xf32>
    %627 = vector.broadcast %624 : vector<2x16x1xf32> to vector<2x16x4xf32>
    %628 = vector.broadcast %626 : vector<1x1x4xf32> to vector<2x16x4xf32>
    %629 = arith.mulf %627, %628 : vector<2x16x4xf32>
    %630 = arith.addf %623, %629 : vector<2x16x4xf32>
    %631 = arith.addf %600, %630 : vector<2x16x4xf32>
    %c0_148 = arith.constant 0 : index
    %c11 = arith.constant 11 : index
    %c0_149 = arith.constant 0 : index
    %632 = vector.load %arg21[%c0_148, %c11, %c0_149] : memref<2x30x4xf32, #tpu.memory_space<vmem>>, vector<2x16x4xf32>
    %c11_150 = arith.constant 11 : index
    %c0_151 = arith.constant 0 : index
    %c0_152 = arith.constant 0 : index
    %633 = vector.load %arg7[%c11_150, %c0_151, %c0_152] : memref<15x4x4xf32, #tpu.memory_space<vmem>>, vector<1x4x4xf32>
    %634 = vector.shape_cast %633 : vector<1x4x4xf32> to vector<4x4xf32>
    %635 = vector.extract_strided_slice %632 {offsets = [0, 0, 0], sizes = [2, 16, 1], strides = [1, 1, 1]} : vector<2x16x4xf32> to vector<2x16x1xf32>
    %636 = vector.extract_strided_slice %634 {offsets = [0, 0], sizes = [1, 4], strides = [1, 1]} : vector<4x4xf32> to vector<1x4xf32>
    %637 = vector.shape_cast %636 : vector<1x4xf32> to vector<1x1x4xf32>
    %638 = vector.broadcast %635 : vector<2x16x1xf32> to vector<2x16x4xf32>
    %639 = vector.broadcast %637 : vector<1x1x4xf32> to vector<2x16x4xf32>
    %640 = arith.mulf %638, %639 : vector<2x16x4xf32>
    %641 = vector.extract_strided_slice %632 {offsets = [0, 0, 1], sizes = [2, 16, 1], strides = [1, 1, 1]} : vector<2x16x4xf32> to vector<2x16x1xf32>
    %642 = vector.extract_strided_slice %634 {offsets = [1, 0], sizes = [1, 4], strides = [1, 1]} : vector<4x4xf32> to vector<1x4xf32>
    %643 = vector.shape_cast %642 : vector<1x4xf32> to vector<1x1x4xf32>
    %644 = vector.broadcast %641 : vector<2x16x1xf32> to vector<2x16x4xf32>
    %645 = vector.broadcast %643 : vector<1x1x4xf32> to vector<2x16x4xf32>
    %646 = arith.mulf %644, %645 : vector<2x16x4xf32>
    %647 = arith.addf %640, %646 : vector<2x16x4xf32>
    %648 = vector.extract_strided_slice %632 {offsets = [0, 0, 2], sizes = [2, 16, 1], strides = [1, 1, 1]} : vector<2x16x4xf32> to vector<2x16x1xf32>
    %649 = vector.extract_strided_slice %634 {offsets = [2, 0], sizes = [1, 4], strides = [1, 1]} : vector<4x4xf32> to vector<1x4xf32>
    %650 = vector.shape_cast %649 : vector<1x4xf32> to vector<1x1x4xf32>
    %651 = vector.broadcast %648 : vector<2x16x1xf32> to vector<2x16x4xf32>
    %652 = vector.broadcast %650 : vector<1x1x4xf32> to vector<2x16x4xf32>
    %653 = arith.mulf %651, %652 : vector<2x16x4xf32>
    %654 = arith.addf %647, %653 : vector<2x16x4xf32>
    %655 = vector.extract_strided_slice %632 {offsets = [0, 0, 3], sizes = [2, 16, 1], strides = [1, 1, 1]} : vector<2x16x4xf32> to vector<2x16x1xf32>
    %656 = vector.extract_strided_slice %634 {offsets = [3, 0], sizes = [1, 4], strides = [1, 1]} : vector<4x4xf32> to vector<1x4xf32>
    %657 = vector.shape_cast %656 : vector<1x4xf32> to vector<1x1x4xf32>
    %658 = vector.broadcast %655 : vector<2x16x1xf32> to vector<2x16x4xf32>
    %659 = vector.broadcast %657 : vector<1x1x4xf32> to vector<2x16x4xf32>
    %660 = arith.mulf %658, %659 : vector<2x16x4xf32>
    %661 = arith.addf %654, %660 : vector<2x16x4xf32>
    %662 = arith.addf %631, %661 : vector<2x16x4xf32>
    %c0_153 = arith.constant 0 : index
    %c12 = arith.constant 12 : index
    %c0_154 = arith.constant 0 : index
    %663 = vector.load %arg21[%c0_153, %c12, %c0_154] : memref<2x30x4xf32, #tpu.memory_space<vmem>>, vector<2x16x4xf32>
    %c12_155 = arith.constant 12 : index
    %c0_156 = arith.constant 0 : index
    %c0_157 = arith.constant 0 : index
    %664 = vector.load %arg7[%c12_155, %c0_156, %c0_157] : memref<15x4x4xf32, #tpu.memory_space<vmem>>, vector<1x4x4xf32>
    %665 = vector.shape_cast %664 : vector<1x4x4xf32> to vector<4x4xf32>
    %666 = vector.extract_strided_slice %663 {offsets = [0, 0, 0], sizes = [2, 16, 1], strides = [1, 1, 1]} : vector<2x16x4xf32> to vector<2x16x1xf32>
    %667 = vector.extract_strided_slice %665 {offsets = [0, 0], sizes = [1, 4], strides = [1, 1]} : vector<4x4xf32> to vector<1x4xf32>
    %668 = vector.shape_cast %667 : vector<1x4xf32> to vector<1x1x4xf32>
    %669 = vector.broadcast %666 : vector<2x16x1xf32> to vector<2x16x4xf32>
    %670 = vector.broadcast %668 : vector<1x1x4xf32> to vector<2x16x4xf32>
    %671 = arith.mulf %669, %670 : vector<2x16x4xf32>
    %672 = vector.extract_strided_slice %663 {offsets = [0, 0, 1], sizes = [2, 16, 1], strides = [1, 1, 1]} : vector<2x16x4xf32> to vector<2x16x1xf32>
    %673 = vector.extract_strided_slice %665 {offsets = [1, 0], sizes = [1, 4], strides = [1, 1]} : vector<4x4xf32> to vector<1x4xf32>
    %674 = vector.shape_cast %673 : vector<1x4xf32> to vector<1x1x4xf32>
    %675 = vector.broadcast %672 : vector<2x16x1xf32> to vector<2x16x4xf32>
    %676 = vector.broadcast %674 : vector<1x1x4xf32> to vector<2x16x4xf32>
    %677 = arith.mulf %675, %676 : vector<2x16x4xf32>
    %678 = arith.addf %671, %677 : vector<2x16x4xf32>
    %679 = vector.extract_strided_slice %663 {offsets = [0, 0, 2], sizes = [2, 16, 1], strides = [1, 1, 1]} : vector<2x16x4xf32> to vector<2x16x1xf32>
    %680 = vector.extract_strided_slice %665 {offsets = [2, 0], sizes = [1, 4], strides = [1, 1]} : vector<4x4xf32> to vector<1x4xf32>
    %681 = vector.shape_cast %680 : vector<1x4xf32> to vector<1x1x4xf32>
    %682 = vector.broadcast %679 : vector<2x16x1xf32> to vector<2x16x4xf32>
    %683 = vector.broadcast %681 : vector<1x1x4xf32> to vector<2x16x4xf32>
    %684 = arith.mulf %682, %683 : vector<2x16x4xf32>
    %685 = arith.addf %678, %684 : vector<2x16x4xf32>
    %686 = vector.extract_strided_slice %663 {offsets = [0, 0, 3], sizes = [2, 16, 1], strides = [1, 1, 1]} : vector<2x16x4xf32> to vector<2x16x1xf32>
    %687 = vector.extract_strided_slice %665 {offsets = [3, 0], sizes = [1, 4], strides = [1, 1]} : vector<4x4xf32> to vector<1x4xf32>
    %688 = vector.shape_cast %687 : vector<1x4xf32> to vector<1x1x4xf32>
    %689 = vector.broadcast %686 : vector<2x16x1xf32> to vector<2x16x4xf32>
    %690 = vector.broadcast %688 : vector<1x1x4xf32> to vector<2x16x4xf32>
    %691 = arith.mulf %689, %690 : vector<2x16x4xf32>
    %692 = arith.addf %685, %691 : vector<2x16x4xf32>
    %693 = arith.addf %662, %692 : vector<2x16x4xf32>
    %c0_158 = arith.constant 0 : index
    %c13 = arith.constant 13 : index
    %c0_159 = arith.constant 0 : index
    %694 = vector.load %arg21[%c0_158, %c13, %c0_159] : memref<2x30x4xf32, #tpu.memory_space<vmem>>, vector<2x16x4xf32>
    %c13_160 = arith.constant 13 : index
    %c0_161 = arith.constant 0 : index
    %c0_162 = arith.constant 0 : index
    %695 = vector.load %arg7[%c13_160, %c0_161, %c0_162] : memref<15x4x4xf32, #tpu.memory_space<vmem>>, vector<1x4x4xf32>
    %696 = vector.shape_cast %695 : vector<1x4x4xf32> to vector<4x4xf32>
    %697 = vector.extract_strided_slice %694 {offsets = [0, 0, 0], sizes = [2, 16, 1], strides = [1, 1, 1]} : vector<2x16x4xf32> to vector<2x16x1xf32>
    %698 = vector.extract_strided_slice %696 {offsets = [0, 0], sizes = [1, 4], strides = [1, 1]} : vector<4x4xf32> to vector<1x4xf32>
    %699 = vector.shape_cast %698 : vector<1x4xf32> to vector<1x1x4xf32>
    %700 = vector.broadcast %697 : vector<2x16x1xf32> to vector<2x16x4xf32>
    %701 = vector.broadcast %699 : vector<1x1x4xf32> to vector<2x16x4xf32>
    %702 = arith.mulf %700, %701 : vector<2x16x4xf32>
    %703 = vector.extract_strided_slice %694 {offsets = [0, 0, 1], sizes = [2, 16, 1], strides = [1, 1, 1]} : vector<2x16x4xf32> to vector<2x16x1xf32>
    %704 = vector.extract_strided_slice %696 {offsets = [1, 0], sizes = [1, 4], strides = [1, 1]} : vector<4x4xf32> to vector<1x4xf32>
    %705 = vector.shape_cast %704 : vector<1x4xf32> to vector<1x1x4xf32>
    %706 = vector.broadcast %703 : vector<2x16x1xf32> to vector<2x16x4xf32>
    %707 = vector.broadcast %705 : vector<1x1x4xf32> to vector<2x16x4xf32>
    %708 = arith.mulf %706, %707 : vector<2x16x4xf32>
    %709 = arith.addf %702, %708 : vector<2x16x4xf32>
    %710 = vector.extract_strided_slice %694 {offsets = [0, 0, 2], sizes = [2, 16, 1], strides = [1, 1, 1]} : vector<2x16x4xf32> to vector<2x16x1xf32>
    %711 = vector.extract_strided_slice %696 {offsets = [2, 0], sizes = [1, 4], strides = [1, 1]} : vector<4x4xf32> to vector<1x4xf32>
    %712 = vector.shape_cast %711 : vector<1x4xf32> to vector<1x1x4xf32>
    %713 = vector.broadcast %710 : vector<2x16x1xf32> to vector<2x16x4xf32>
    %714 = vector.broadcast %712 : vector<1x1x4xf32> to vector<2x16x4xf32>
    %715 = arith.mulf %713, %714 : vector<2x16x4xf32>
    %716 = arith.addf %709, %715 : vector<2x16x4xf32>
    %717 = vector.extract_strided_slice %694 {offsets = [0, 0, 3], sizes = [2, 16, 1], strides = [1, 1, 1]} : vector<2x16x4xf32> to vector<2x16x1xf32>
    %718 = vector.extract_strided_slice %696 {offsets = [3, 0], sizes = [1, 4], strides = [1, 1]} : vector<4x4xf32> to vector<1x4xf32>
    %719 = vector.shape_cast %718 : vector<1x4xf32> to vector<1x1x4xf32>
    %720 = vector.broadcast %717 : vector<2x16x1xf32> to vector<2x16x4xf32>
    %721 = vector.broadcast %719 : vector<1x1x4xf32> to vector<2x16x4xf32>
    %722 = arith.mulf %720, %721 : vector<2x16x4xf32>
    %723 = arith.addf %716, %722 : vector<2x16x4xf32>
    %724 = arith.addf %693, %723 : vector<2x16x4xf32>
    %c0_163 = arith.constant 0 : index
    %c14 = arith.constant 14 : index
    %c0_164 = arith.constant 0 : index
    %725 = vector.load %arg21[%c0_163, %c14, %c0_164] : memref<2x30x4xf32, #tpu.memory_space<vmem>>, vector<2x16x4xf32>
    %c14_165 = arith.constant 14 : index
    %c0_166 = arith.constant 0 : index
    %c0_167 = arith.constant 0 : index
    %726 = vector.load %arg7[%c14_165, %c0_166, %c0_167] : memref<15x4x4xf32, #tpu.memory_space<vmem>>, vector<1x4x4xf32>
    %727 = vector.shape_cast %726 : vector<1x4x4xf32> to vector<4x4xf32>
    %728 = vector.extract_strided_slice %725 {offsets = [0, 0, 0], sizes = [2, 16, 1], strides = [1, 1, 1]} : vector<2x16x4xf32> to vector<2x16x1xf32>
    %729 = vector.extract_strided_slice %727 {offsets = [0, 0], sizes = [1, 4], strides = [1, 1]} : vector<4x4xf32> to vector<1x4xf32>
    %730 = vector.shape_cast %729 : vector<1x4xf32> to vector<1x1x4xf32>
    %731 = vector.broadcast %728 : vector<2x16x1xf32> to vector<2x16x4xf32>
    %732 = vector.broadcast %730 : vector<1x1x4xf32> to vector<2x16x4xf32>
    %733 = arith.mulf %731, %732 : vector<2x16x4xf32>
    %734 = vector.extract_strided_slice %725 {offsets = [0, 0, 1], sizes = [2, 16, 1], strides = [1, 1, 1]} : vector<2x16x4xf32> to vector<2x16x1xf32>
    %735 = vector.extract_strided_slice %727 {offsets = [1, 0], sizes = [1, 4], strides = [1, 1]} : vector<4x4xf32> to vector<1x4xf32>
    %736 = vector.shape_cast %735 : vector<1x4xf32> to vector<1x1x4xf32>
    %737 = vector.broadcast %734 : vector<2x16x1xf32> to vector<2x16x4xf32>
    %738 = vector.broadcast %736 : vector<1x1x4xf32> to vector<2x16x4xf32>
    %739 = arith.mulf %737, %738 : vector<2x16x4xf32>
    %740 = arith.addf %733, %739 : vector<2x16x4xf32>
    %741 = vector.extract_strided_slice %725 {offsets = [0, 0, 2], sizes = [2, 16, 1], strides = [1, 1, 1]} : vector<2x16x4xf32> to vector<2x16x1xf32>
    %742 = vector.extract_strided_slice %727 {offsets = [2, 0], sizes = [1, 4], strides = [1, 1]} : vector<4x4xf32> to vector<1x4xf32>
    %743 = vector.shape_cast %742 : vector<1x4xf32> to vector<1x1x4xf32>
    %744 = vector.broadcast %741 : vector<2x16x1xf32> to vector<2x16x4xf32>
    %745 = vector.broadcast %743 : vector<1x1x4xf32> to vector<2x16x4xf32>
    %746 = arith.mulf %744, %745 : vector<2x16x4xf32>
    %747 = arith.addf %740, %746 : vector<2x16x4xf32>
    %748 = vector.extract_strided_slice %725 {offsets = [0, 0, 3], sizes = [2, 16, 1], strides = [1, 1, 1]} : vector<2x16x4xf32> to vector<2x16x1xf32>
    %749 = vector.extract_strided_slice %727 {offsets = [3, 0], sizes = [1, 4], strides = [1, 1]} : vector<4x4xf32> to vector<1x4xf32>
    %750 = vector.shape_cast %749 : vector<1x4xf32> to vector<1x1x4xf32>
    %751 = vector.broadcast %748 : vector<2x16x1xf32> to vector<2x16x4xf32>
    %752 = vector.broadcast %750 : vector<1x1x4xf32> to vector<2x16x4xf32>
    %753 = arith.mulf %751, %752 : vector<2x16x4xf32>
    %754 = arith.addf %747, %753 : vector<2x16x4xf32>
    %755 = arith.addf %724, %754 : vector<2x16x4xf32>
    %c0_168 = arith.constant 0 : index
    %c0_169 = arith.constant 0 : index
    %756 = vector.load %arg8[%c0_168, %c0_169] : memref<1x4xf32, #tpu.memory_space<vmem>>, vector<1x4xf32>
    %757 = vector.shape_cast %756 : vector<1x4xf32> to vector<1x1x4xf32>
    %758 = vector.broadcast %757 : vector<1x1x4xf32> to vector<2x16x4xf32>
    %759 = arith.addf %755, %758 : vector<2x16x4xf32>
    %cst_170 = arith.constant 0.000000e+00 : f32
    %760 = vector.broadcast %cst_170 : f32 to vector<2x16x4xf32>
    %761 = arith.cmpf oge, %759, %760 : vector<2x16x4xf32>
    %cst_171 = arith.constant 0.00999999977 : f32
    %762 = vector.broadcast %cst_171 : f32 to vector<2x16x4xf32>
    %763 = arith.mulf %762, %759 : vector<2x16x4xf32>
    %764 = arith.select %761, %759, %763 : vector<2x16x4xi1>, vector<2x16x4xf32>
    %cst_172 = arith.constant dense<0.000000e+00> : vector<2x4xf32>
    %765 = vector.multi_reduction <add>, %764, %cst_172 [1] : vector<2x16x4xf32> to vector<2x4xf32>
    %766 = vector.shape_cast %765 : vector<2x4xf32> to vector<2x1x4xf32>
    %cst_173 = arith.constant dense<0.000000e+00> : vector<1x4xf32>
    %767 = vector.multi_reduction <add>, %766, %cst_173 [0] : vector<2x1x4xf32> to vector<1x4xf32>
    %768 = vector.shape_cast %767 : vector<1x4xf32> to vector<1x1x4xf32>
    %cst_174 = arith.constant 3.200000e+01 : f32
    %769 = vector.broadcast %cst_174 : f32 to vector<1x1x4xf32>
    %770 = arith.divf %768, %769 : vector<1x1x4xf32>
    %771 = vector.broadcast %770 : vector<1x1x4xf32> to vector<2x16x4xf32>
    %772 = arith.subf %764, %771 : vector<2x16x4xf32>
    %773 = arith.mulf %772, %772 : vector<2x16x4xf32>
    %cst_175 = arith.constant dense<0.000000e+00> : vector<2x4xf32>
    %774 = vector.multi_reduction <add>, %773, %cst_175 [1] : vector<2x16x4xf32> to vector<2x4xf32>
    %775 = vector.shape_cast %774 : vector<2x4xf32> to vector<2x1x4xf32>
    %cst_176 = arith.constant dense<0.000000e+00> : vector<1x4xf32>
    %776 = vector.multi_reduction <add>, %775, %cst_176 [0] : vector<2x1x4xf32> to vector<1x4xf32>
    %777 = vector.shape_cast %776 : vector<1x4xf32> to vector<1x1x4xf32>
    %cst_177 = arith.constant 3.200000e+01 : f32
    %778 = vector.broadcast %cst_177 : f32 to vector<1x1x4xf32>
    %779 = arith.divf %777, %778 : vector<1x1x4xf32>
    %cst_178 = arith.constant 9.99999974E-6 : f32
    %780 = vector.broadcast %cst_178 : f32 to vector<1x1x4xf32>
    %781 = arith.addf %779, %780 : vector<1x1x4xf32>
    %782 = math.rsqrt %781 : vector<1x1x4xf32>
    %783 = vector.broadcast %782 : vector<1x1x4xf32> to vector<2x16x4xf32>
    %784 = arith.mulf %772, %783 : vector<2x16x4xf32>
    %c0_179 = arith.constant 0 : index
    %c0_180 = arith.constant 0 : index
    %785 = vector.load %arg9[%c0_179, %c0_180] : memref<1x4xf32, #tpu.memory_space<vmem>>, vector<1x4xf32>
    %786 = vector.shape_cast %785 : vector<1x4xf32> to vector<1x1x4xf32>
    %787 = vector.broadcast %786 : vector<1x1x4xf32> to vector<2x16x4xf32>
    %788 = arith.mulf %784, %787 : vector<2x16x4xf32>
    %c0_181 = arith.constant 0 : index
    %c0_182 = arith.constant 0 : index
    %789 = vector.load %arg10[%c0_181, %c0_182] : memref<1x4xf32, #tpu.memory_space<vmem>>, vector<1x4xf32>
    %790 = vector.shape_cast %789 : vector<1x4xf32> to vector<1x1x4xf32>
    %791 = vector.broadcast %790 : vector<1x1x4xf32> to vector<2x16x4xf32>
    %792 = arith.addf %788, %791 : vector<2x16x4xf32>
    %cst_183 = arith.constant 0.000000e+00 : f32
    %793 = vector.broadcast %cst_183 : f32 to vector<2x30x4xf32>
    %c0_184 = arith.constant 0 : index
    %c0_185 = arith.constant 0 : index
    %c0_186 = arith.constant 0 : index
    %794 = vector.load %arg21[%c0_184, %c0_185, %c0_186] : memref<2x30x4xf32, #tpu.memory_space<vmem>>, vector<2x30x4xf32>
    tpu.vector_store %arg21[%c0_184, %c0_185, %c0_186], %793 {strides = array<i32>} : memref<2x30x4xf32, #tpu.memory_space<vmem>>, vector<2x30x4xf32>,
    %c0_187 = arith.constant 0 : index
    %c3_188 = arith.constant 3 : index
    %c0_189 = arith.constant 0 : index
    %795 = vector.load %arg21[%c0_187, %c3_188, %c0_189] : memref<2x30x4xf32, #tpu.memory_space<vmem>>, vector<2x16x4xf32>
    tpu.vector_store %arg21[%c0_187, %c3_188, %c0_189], %792 {strides = array<i32>} : memref<2x30x4xf32, #tpu.memory_space<vmem>>, vector<2x16x4xf32>,
    %c0_190 = arith.constant 0 : index
    %c0_191 = arith.constant 0 : index
    %c0_192 = arith.constant 0 : index
    %796 = tpu.strided_load %arg21[%c0_190, %c0_191, %c0_192] {strides = array<i32: 1, 2, 1>} : memref<2x30x4xf32, #tpu.memory_space<vmem>>, vector<2x8x4xf32>
    %c0_193 = arith.constant 0 : index
    %c0_194 = arith.constant 0 : index
    %c0_195 = arith.constant 0 : index
    %797 = vector.load %arg11[%c0_193, %c0_194, %c0_195] : memref<7x4x6xf32, #tpu.memory_space<vmem>>, vector<1x4x6xf32>
    %798 = vector.shape_cast %797 : vector<1x4x6xf32> to vector<4x6xf32>
    %799 = vector.extract_strided_slice %796 {offsets = [0, 0, 0], sizes = [2, 8, 1], strides = [1, 1, 1]} : vector<2x8x4xf32> to vector<2x8x1xf32>
    %800 = vector.extract_strided_slice %798 {offsets = [0, 0], sizes = [1, 6], strides = [1, 1]} : vector<4x6xf32> to vector<1x6xf32>
    %801 = vector.shape_cast %800 : vector<1x6xf32> to vector<1x1x6xf32>
    %802 = vector.broadcast %799 : vector<2x8x1xf32> to vector<2x8x6xf32>
    %803 = vector.broadcast %801 : vector<1x1x6xf32> to vector<2x8x6xf32>
    %804 = arith.mulf %802, %803 : vector<2x8x6xf32>
    %805 = vector.extract_strided_slice %796 {offsets = [0, 0, 1], sizes = [2, 8, 1], strides = [1, 1, 1]} : vector<2x8x4xf32> to vector<2x8x1xf32>
    %806 = vector.extract_strided_slice %798 {offsets = [1, 0], sizes = [1, 6], strides = [1, 1]} : vector<4x6xf32> to vector<1x6xf32>
    %807 = vector.shape_cast %806 : vector<1x6xf32> to vector<1x1x6xf32>
    %808 = vector.broadcast %805 : vector<2x8x1xf32> to vector<2x8x6xf32>
    %809 = vector.broadcast %807 : vector<1x1x6xf32> to vector<2x8x6xf32>
    %810 = arith.mulf %808, %809 : vector<2x8x6xf32>
    %811 = arith.addf %804, %810 : vector<2x8x6xf32>
    %812 = vector.extract_strided_slice %796 {offsets = [0, 0, 2], sizes = [2, 8, 1], strides = [1, 1, 1]} : vector<2x8x4xf32> to vector<2x8x1xf32>
    %813 = vector.extract_strided_slice %798 {offsets = [2, 0], sizes = [1, 6], strides = [1, 1]} : vector<4x6xf32> to vector<1x6xf32>
    %814 = vector.shape_cast %813 : vector<1x6xf32> to vector<1x1x6xf32>
    %815 = vector.broadcast %812 : vector<2x8x1xf32> to vector<2x8x6xf32>
    %816 = vector.broadcast %814 : vector<1x1x6xf32> to vector<2x8x6xf32>
    %817 = arith.mulf %815, %816 : vector<2x8x6xf32>
    %818 = arith.addf %811, %817 : vector<2x8x6xf32>
    %819 = vector.extract_strided_slice %796 {offsets = [0, 0, 3], sizes = [2, 8, 1], strides = [1, 1, 1]} : vector<2x8x4xf32> to vector<2x8x1xf32>
    %820 = vector.extract_strided_slice %798 {offsets = [3, 0], sizes = [1, 6], strides = [1, 1]} : vector<4x6xf32> to vector<1x6xf32>
    %821 = vector.shape_cast %820 : vector<1x6xf32> to vector<1x1x6xf32>
    %822 = vector.broadcast %819 : vector<2x8x1xf32> to vector<2x8x6xf32>
    %823 = vector.broadcast %821 : vector<1x1x6xf32> to vector<2x8x6xf32>
    %824 = arith.mulf %822, %823 : vector<2x8x6xf32>
    %825 = arith.addf %818, %824 : vector<2x8x6xf32>
    %c0_196 = arith.constant 0 : index
    %c1_197 = arith.constant 1 : index
    %c0_198 = arith.constant 0 : index
    %826 = tpu.strided_load %arg21[%c0_196, %c1_197, %c0_198] {strides = array<i32: 1, 2, 1>} : memref<2x30x4xf32, #tpu.memory_space<vmem>>, vector<2x8x4xf32>
    %c1_199 = arith.constant 1 : index
    %c0_200 = arith.constant 0 : index
    %c0_201 = arith.constant 0 : index
    %827 = vector.load %arg11[%c1_199, %c0_200, %c0_201] : memref<7x4x6xf32, #tpu.memory_space<vmem>>, vector<1x4x6xf32>
    %828 = vector.shape_cast %827 : vector<1x4x6xf32> to vector<4x6xf32>
    %829 = vector.extract_strided_slice %826 {offsets = [0, 0, 0], sizes = [2, 8, 1], strides = [1, 1, 1]} : vector<2x8x4xf32> to vector<2x8x1xf32>
    %830 = vector.extract_strided_slice %828 {offsets = [0, 0], sizes = [1, 6], strides = [1, 1]} : vector<4x6xf32> to vector<1x6xf32>
    %831 = vector.shape_cast %830 : vector<1x6xf32> to vector<1x1x6xf32>
    %832 = vector.broadcast %829 : vector<2x8x1xf32> to vector<2x8x6xf32>
    %833 = vector.broadcast %831 : vector<1x1x6xf32> to vector<2x8x6xf32>
    %834 = arith.mulf %832, %833 : vector<2x8x6xf32>
    %835 = vector.extract_strided_slice %826 {offsets = [0, 0, 1], sizes = [2, 8, 1], strides = [1, 1, 1]} : vector<2x8x4xf32> to vector<2x8x1xf32>
    %836 = vector.extract_strided_slice %828 {offsets = [1, 0], sizes = [1, 6], strides = [1, 1]} : vector<4x6xf32> to vector<1x6xf32>
    %837 = vector.shape_cast %836 : vector<1x6xf32> to vector<1x1x6xf32>
    %838 = vector.broadcast %835 : vector<2x8x1xf32> to vector<2x8x6xf32>
    %839 = vector.broadcast %837 : vector<1x1x6xf32> to vector<2x8x6xf32>
    %840 = arith.mulf %838, %839 : vector<2x8x6xf32>
    %841 = arith.addf %834, %840 : vector<2x8x6xf32>
    %842 = vector.extract_strided_slice %826 {offsets = [0, 0, 2], sizes = [2, 8, 1], strides = [1, 1, 1]} : vector<2x8x4xf32> to vector<2x8x1xf32>
    %843 = vector.extract_strided_slice %828 {offsets = [2, 0], sizes = [1, 6], strides = [1, 1]} : vector<4x6xf32> to vector<1x6xf32>
    %844 = vector.shape_cast %843 : vector<1x6xf32> to vector<1x1x6xf32>
    %845 = vector.broadcast %842 : vector<2x8x1xf32> to vector<2x8x6xf32>
    %846 = vector.broadcast %844 : vector<1x1x6xf32> to vector<2x8x6xf32>
    %847 = arith.mulf %845, %846 : vector<2x8x6xf32>
    %848 = arith.addf %841, %847 : vector<2x8x6xf32>
    %849 = vector.extract_strided_slice %826 {offsets = [0, 0, 3], sizes = [2, 8, 1], strides = [1, 1, 1]} : vector<2x8x4xf32> to vector<2x8x1xf32>
    %850 = vector.extract_strided_slice %828 {offsets = [3, 0], sizes = [1, 6], strides = [1, 1]} : vector<4x6xf32> to vector<1x6xf32>
    %851 = vector.shape_cast %850 : vector<1x6xf32> to vector<1x1x6xf32>
    %852 = vector.broadcast %849 : vector<2x8x1xf32> to vector<2x8x6xf32>
    %853 = vector.broadcast %851 : vector<1x1x6xf32> to vector<2x8x6xf32>
    %854 = arith.mulf %852, %853 : vector<2x8x6xf32>
    %855 = arith.addf %848, %854 : vector<2x8x6xf32>
    %856 = arith.addf %825, %855 : vector<2x8x6xf32>
    %c0_202 = arith.constant 0 : index
    %c2_203 = arith.constant 2 : index
    %c0_204 = arith.constant 0 : index
    %857 = tpu.strided_load %arg21[%c0_202, %c2_203, %c0_204] {strides = array<i32: 1, 2, 1>} : memref<2x30x4xf32, #tpu.memory_space<vmem>>, vector<2x8x4xf32>
    %c2_205 = arith.constant 2 : index
    %c0_206 = arith.constant 0 : index
    %c0_207 = arith.constant 0 : index
    %858 = vector.load %arg11[%c2_205, %c0_206, %c0_207] : memref<7x4x6xf32, #tpu.memory_space<vmem>>, vector<1x4x6xf32>
    %859 = vector.shape_cast %858 : vector<1x4x6xf32> to vector<4x6xf32>
    %860 = vector.extract_strided_slice %857 {offsets = [0, 0, 0], sizes = [2, 8, 1], strides = [1, 1, 1]} : vector<2x8x4xf32> to vector<2x8x1xf32>
    %861 = vector.extract_strided_slice %859 {offsets = [0, 0], sizes = [1, 6], strides = [1, 1]} : vector<4x6xf32> to vector<1x6xf32>
    %862 = vector.shape_cast %861 : vector<1x6xf32> to vector<1x1x6xf32>
    %863 = vector.broadcast %860 : vector<2x8x1xf32> to vector<2x8x6xf32>
    %864 = vector.broadcast %862 : vector<1x1x6xf32> to vector<2x8x6xf32>
    %865 = arith.mulf %863, %864 : vector<2x8x6xf32>
    %866 = vector.extract_strided_slice %857 {offsets = [0, 0, 1], sizes = [2, 8, 1], strides = [1, 1, 1]} : vector<2x8x4xf32> to vector<2x8x1xf32>
    %867 = vector.extract_strided_slice %859 {offsets = [1, 0], sizes = [1, 6], strides = [1, 1]} : vector<4x6xf32> to vector<1x6xf32>
    %868 = vector.shape_cast %867 : vector<1x6xf32> to vector<1x1x6xf32>
    %869 = vector.broadcast %866 : vector<2x8x1xf32> to vector<2x8x6xf32>
    %870 = vector.broadcast %868 : vector<1x1x6xf32> to vector<2x8x6xf32>
    %871 = arith.mulf %869, %870 : vector<2x8x6xf32>
    %872 = arith.addf %865, %871 : vector<2x8x6xf32>
    %873 = vector.extract_strided_slice %857 {offsets = [0, 0, 2], sizes = [2, 8, 1], strides = [1, 1, 1]} : vector<2x8x4xf32> to vector<2x8x1xf32>
    %874 = vector.extract_strided_slice %859 {offsets = [2, 0], sizes = [1, 6], strides = [1, 1]} : vector<4x6xf32> to vector<1x6xf32>
    %875 = vector.shape_cast %874 : vector<1x6xf32> to vector<1x1x6xf32>
    %876 = vector.broadcast %873 : vector<2x8x1xf32> to vector<2x8x6xf32>
    %877 = vector.broadcast %875 : vector<1x1x6xf32> to vector<2x8x6xf32>
    %878 = arith.mulf %876, %877 : vector<2x8x6xf32>
    %879 = arith.addf %872, %878 : vector<2x8x6xf32>
    %880 = vector.extract_strided_slice %857 {offsets = [0, 0, 3], sizes = [2, 8, 1], strides = [1, 1, 1]} : vector<2x8x4xf32> to vector<2x8x1xf32>
    %881 = vector.extract_strided_slice %859 {offsets = [3, 0], sizes = [1, 6], strides = [1, 1]} : vector<4x6xf32> to vector<1x6xf32>
    %882 = vector.shape_cast %881 : vector<1x6xf32> to vector<1x1x6xf32>
    %883 = vector.broadcast %880 : vector<2x8x1xf32> to vector<2x8x6xf32>
    %884 = vector.broadcast %882 : vector<1x1x6xf32> to vector<2x8x6xf32>
    %885 = arith.mulf %883, %884 : vector<2x8x6xf32>
    %886 = arith.addf %879, %885 : vector<2x8x6xf32>
    %887 = arith.addf %856, %886 : vector<2x8x6xf32>
    %c0_208 = arith.constant 0 : index
    %c3_209 = arith.constant 3 : index
    %c0_210 = arith.constant 0 : index
    %888 = tpu.strided_load %arg21[%c0_208, %c3_209, %c0_210] {strides = array<i32: 1, 2, 1>} : memref<2x30x4xf32, #tpu.memory_space<vmem>>, vector<2x8x4xf32>
    %c3_211 = arith.constant 3 : index
    %c0_212 = arith.constant 0 : index
    %c0_213 = arith.constant 0 : index
    %889 = vector.load %arg11[%c3_211, %c0_212, %c0_213] : memref<7x4x6xf32, #tpu.memory_space<vmem>>, vector<1x4x6xf32>
    %890 = vector.shape_cast %889 : vector<1x4x6xf32> to vector<4x6xf32>
    %891 = vector.extract_strided_slice %888 {offsets = [0, 0, 0], sizes = [2, 8, 1], strides = [1, 1, 1]} : vector<2x8x4xf32> to vector<2x8x1xf32>
    %892 = vector.extract_strided_slice %890 {offsets = [0, 0], sizes = [1, 6], strides = [1, 1]} : vector<4x6xf32> to vector<1x6xf32>
    %893 = vector.shape_cast %892 : vector<1x6xf32> to vector<1x1x6xf32>
    %894 = vector.broadcast %891 : vector<2x8x1xf32> to vector<2x8x6xf32>
    %895 = vector.broadcast %893 : vector<1x1x6xf32> to vector<2x8x6xf32>
    %896 = arith.mulf %894, %895 : vector<2x8x6xf32>
    %897 = vector.extract_strided_slice %888 {offsets = [0, 0, 1], sizes = [2, 8, 1], strides = [1, 1, 1]} : vector<2x8x4xf32> to vector<2x8x1xf32>
    %898 = vector.extract_strided_slice %890 {offsets = [1, 0], sizes = [1, 6], strides = [1, 1]} : vector<4x6xf32> to vector<1x6xf32>
    %899 = vector.shape_cast %898 : vector<1x6xf32> to vector<1x1x6xf32>
    %900 = vector.broadcast %897 : vector<2x8x1xf32> to vector<2x8x6xf32>
    %901 = vector.broadcast %899 : vector<1x1x6xf32> to vector<2x8x6xf32>
    %902 = arith.mulf %900, %901 : vector<2x8x6xf32>
    %903 = arith.addf %896, %902 : vector<2x8x6xf32>
    %904 = vector.extract_strided_slice %888 {offsets = [0, 0, 2], sizes = [2, 8, 1], strides = [1, 1, 1]} : vector<2x8x4xf32> to vector<2x8x1xf32>
    %905 = vector.extract_strided_slice %890 {offsets = [2, 0], sizes = [1, 6], strides = [1, 1]} : vector<4x6xf32> to vector<1x6xf32>
    %906 = vector.shape_cast %905 : vector<1x6xf32> to vector<1x1x6xf32>
    %907 = vector.broadcast %904 : vector<2x8x1xf32> to vector<2x8x6xf32>
    %908 = vector.broadcast %906 : vector<1x1x6xf32> to vector<2x8x6xf32>
    %909 = arith.mulf %907, %908 : vector<2x8x6xf32>
    %910 = arith.addf %903, %909 : vector<2x8x6xf32>
    %911 = vector.extract_strided_slice %888 {offsets = [0, 0, 3], sizes = [2, 8, 1], strides = [1, 1, 1]} : vector<2x8x4xf32> to vector<2x8x1xf32>
    %912 = vector.extract_strided_slice %890 {offsets = [3, 0], sizes = [1, 6], strides = [1, 1]} : vector<4x6xf32> to vector<1x6xf32>
    %913 = vector.shape_cast %912 : vector<1x6xf32> to vector<1x1x6xf32>
    %914 = vector.broadcast %911 : vector<2x8x1xf32> to vector<2x8x6xf32>
    %915 = vector.broadcast %913 : vector<1x1x6xf32> to vector<2x8x6xf32>
    %916 = arith.mulf %914, %915 : vector<2x8x6xf32>
    %917 = arith.addf %910, %916 : vector<2x8x6xf32>
    %918 = arith.addf %887, %917 : vector<2x8x6xf32>
    %c0_214 = arith.constant 0 : index
    %c4_215 = arith.constant 4 : index
    %c0_216 = arith.constant 0 : index
    %919 = tpu.strided_load %arg21[%c0_214, %c4_215, %c0_216] {strides = array<i32: 1, 2, 1>} : memref<2x30x4xf32, #tpu.memory_space<vmem>>, vector<2x8x4xf32>
    %c4_217 = arith.constant 4 : index
    %c0_218 = arith.constant 0 : index
    %c0_219 = arith.constant 0 : index
    %920 = vector.load %arg11[%c4_217, %c0_218, %c0_219] : memref<7x4x6xf32, #tpu.memory_space<vmem>>, vector<1x4x6xf32>
    %921 = vector.shape_cast %920 : vector<1x4x6xf32> to vector<4x6xf32>
    %922 = vector.extract_strided_slice %919 {offsets = [0, 0, 0], sizes = [2, 8, 1], strides = [1, 1, 1]} : vector<2x8x4xf32> to vector<2x8x1xf32>
    %923 = vector.extract_strided_slice %921 {offsets = [0, 0], sizes = [1, 6], strides = [1, 1]} : vector<4x6xf32> to vector<1x6xf32>
    %924 = vector.shape_cast %923 : vector<1x6xf32> to vector<1x1x6xf32>
    %925 = vector.broadcast %922 : vector<2x8x1xf32> to vector<2x8x6xf32>
    %926 = vector.broadcast %924 : vector<1x1x6xf32> to vector<2x8x6xf32>
    %927 = arith.mulf %925, %926 : vector<2x8x6xf32>
    %928 = vector.extract_strided_slice %919 {offsets = [0, 0, 1], sizes = [2, 8, 1], strides = [1, 1, 1]} : vector<2x8x4xf32> to vector<2x8x1xf32>
    %929 = vector.extract_strided_slice %921 {offsets = [1, 0], sizes = [1, 6], strides = [1, 1]} : vector<4x6xf32> to vector<1x6xf32>
    %930 = vector.shape_cast %929 : vector<1x6xf32> to vector<1x1x6xf32>
    %931 = vector.broadcast %928 : vector<2x8x1xf32> to vector<2x8x6xf32>
    %932 = vector.broadcast %930 : vector<1x1x6xf32> to vector<2x8x6xf32>
    %933 = arith.mulf %931, %932 : vector<2x8x6xf32>
    %934 = arith.addf %927, %933 : vector<2x8x6xf32>
    %935 = vector.extract_strided_slice %919 {offsets = [0, 0, 2], sizes = [2, 8, 1], strides = [1, 1, 1]} : vector<2x8x4xf32> to vector<2x8x1xf32>
    %936 = vector.extract_strided_slice %921 {offsets = [2, 0], sizes = [1, 6], strides = [1, 1]} : vector<4x6xf32> to vector<1x6xf32>
    %937 = vector.shape_cast %936 : vector<1x6xf32> to vector<1x1x6xf32>
    %938 = vector.broadcast %935 : vector<2x8x1xf32> to vector<2x8x6xf32>
    %939 = vector.broadcast %937 : vector<1x1x6xf32> to vector<2x8x6xf32>
    %940 = arith.mulf %938, %939 : vector<2x8x6xf32>
    %941 = arith.addf %934, %940 : vector<2x8x6xf32>
    %942 = vector.extract_strided_slice %919 {offsets = [0, 0, 3], sizes = [2, 8, 1], strides = [1, 1, 1]} : vector<2x8x4xf32> to vector<2x8x1xf32>
    %943 = vector.extract_strided_slice %921 {offsets = [3, 0], sizes = [1, 6], strides = [1, 1]} : vector<4x6xf32> to vector<1x6xf32>
    %944 = vector.shape_cast %943 : vector<1x6xf32> to vector<1x1x6xf32>
    %945 = vector.broadcast %942 : vector<2x8x1xf32> to vector<2x8x6xf32>
    %946 = vector.broadcast %944 : vector<1x1x6xf32> to vector<2x8x6xf32>
    %947 = arith.mulf %945, %946 : vector<2x8x6xf32>
    %948 = arith.addf %941, %947 : vector<2x8x6xf32>
    %949 = arith.addf %918, %948 : vector<2x8x6xf32>
    %c0_220 = arith.constant 0 : index
    %c5_221 = arith.constant 5 : index
    %c0_222 = arith.constant 0 : index
    %950 = tpu.strided_load %arg21[%c0_220, %c5_221, %c0_222] {strides = array<i32: 1, 2, 1>} : memref<2x30x4xf32, #tpu.memory_space<vmem>>, vector<2x8x4xf32>
    %c5_223 = arith.constant 5 : index
    %c0_224 = arith.constant 0 : index
    %c0_225 = arith.constant 0 : index
    %951 = vector.load %arg11[%c5_223, %c0_224, %c0_225] : memref<7x4x6xf32, #tpu.memory_space<vmem>>, vector<1x4x6xf32>
    %952 = vector.shape_cast %951 : vector<1x4x6xf32> to vector<4x6xf32>
    %953 = vector.extract_strided_slice %950 {offsets = [0, 0, 0], sizes = [2, 8, 1], strides = [1, 1, 1]} : vector<2x8x4xf32> to vector<2x8x1xf32>
    %954 = vector.extract_strided_slice %952 {offsets = [0, 0], sizes = [1, 6], strides = [1, 1]} : vector<4x6xf32> to vector<1x6xf32>
    %955 = vector.shape_cast %954 : vector<1x6xf32> to vector<1x1x6xf32>
    %956 = vector.broadcast %953 : vector<2x8x1xf32> to vector<2x8x6xf32>
    %957 = vector.broadcast %955 : vector<1x1x6xf32> to vector<2x8x6xf32>
    %958 = arith.mulf %956, %957 : vector<2x8x6xf32>
    %959 = vector.extract_strided_slice %950 {offsets = [0, 0, 1], sizes = [2, 8, 1], strides = [1, 1, 1]} : vector<2x8x4xf32> to vector<2x8x1xf32>
    %960 = vector.extract_strided_slice %952 {offsets = [1, 0], sizes = [1, 6], strides = [1, 1]} : vector<4x6xf32> to vector<1x6xf32>
    %961 = vector.shape_cast %960 : vector<1x6xf32> to vector<1x1x6xf32>
    %962 = vector.broadcast %959 : vector<2x8x1xf32> to vector<2x8x6xf32>
    %963 = vector.broadcast %961 : vector<1x1x6xf32> to vector<2x8x6xf32>
    %964 = arith.mulf %962, %963 : vector<2x8x6xf32>
    %965 = arith.addf %958, %964 : vector<2x8x6xf32>
    %966 = vector.extract_strided_slice %950 {offsets = [0, 0, 2], sizes = [2, 8, 1], strides = [1, 1, 1]} : vector<2x8x4xf32> to vector<2x8x1xf32>
    %967 = vector.extract_strided_slice %952 {offsets = [2, 0], sizes = [1, 6], strides = [1, 1]} : vector<4x6xf32> to vector<1x6xf32>
    %968 = vector.shape_cast %967 : vector<1x6xf32> to vector<1x1x6xf32>
    %969 = vector.broadcast %966 : vector<2x8x1xf32> to vector<2x8x6xf32>
    %970 = vector.broadcast %968 : vector<1x1x6xf32> to vector<2x8x6xf32>
    %971 = arith.mulf %969, %970 : vector<2x8x6xf32>
    %972 = arith.addf %965, %971 : vector<2x8x6xf32>
    %973 = vector.extract_strided_slice %950 {offsets = [0, 0, 3], sizes = [2, 8, 1], strides = [1, 1, 1]} : vector<2x8x4xf32> to vector<2x8x1xf32>
    %974 = vector.extract_strided_slice %952 {offsets = [3, 0], sizes = [1, 6], strides = [1, 1]} : vector<4x6xf32> to vector<1x6xf32>
    %975 = vector.shape_cast %974 : vector<1x6xf32> to vector<1x1x6xf32>
    %976 = vector.broadcast %973 : vector<2x8x1xf32> to vector<2x8x6xf32>
    %977 = vector.broadcast %975 : vector<1x1x6xf32> to vector<2x8x6xf32>
    %978 = arith.mulf %976, %977 : vector<2x8x6xf32>
    %979 = arith.addf %972, %978 : vector<2x8x6xf32>
    %980 = arith.addf %949, %979 : vector<2x8x6xf32>
    %c0_226 = arith.constant 0 : index
    %c6_227 = arith.constant 6 : index
    %c0_228 = arith.constant 0 : index
    %981 = tpu.strided_load %arg21[%c0_226, %c6_227, %c0_228] {strides = array<i32: 1, 2, 1>} : memref<2x30x4xf32, #tpu.memory_space<vmem>>, vector<2x8x4xf32>
    %c6_229 = arith.constant 6 : index
    %c0_230 = arith.constant 0 : index
    %c0_231 = arith.constant 0 : index
    %982 = vector.load %arg11[%c6_229, %c0_230, %c0_231] : memref<7x4x6xf32, #tpu.memory_space<vmem>>, vector<1x4x6xf32>
    %983 = vector.shape_cast %982 : vector<1x4x6xf32> to vector<4x6xf32>
    %984 = vector.extract_strided_slice %981 {offsets = [0, 0, 0], sizes = [2, 8, 1], strides = [1, 1, 1]} : vector<2x8x4xf32> to vector<2x8x1xf32>
    %985 = vector.extract_strided_slice %983 {offsets = [0, 0], sizes = [1, 6], strides = [1, 1]} : vector<4x6xf32> to vector<1x6xf32>
    %986 = vector.shape_cast %985 : vector<1x6xf32> to vector<1x1x6xf32>
    %987 = vector.broadcast %984 : vector<2x8x1xf32> to vector<2x8x6xf32>
    %988 = vector.broadcast %986 : vector<1x1x6xf32> to vector<2x8x6xf32>
    %989 = arith.mulf %987, %988 : vector<2x8x6xf32>
    %990 = vector.extract_strided_slice %981 {offsets = [0, 0, 1], sizes = [2, 8, 1], strides = [1, 1, 1]} : vector<2x8x4xf32> to vector<2x8x1xf32>
    %991 = vector.extract_strided_slice %983 {offsets = [1, 0], sizes = [1, 6], strides = [1, 1]} : vector<4x6xf32> to vector<1x6xf32>
    %992 = vector.shape_cast %991 : vector<1x6xf32> to vector<1x1x6xf32>
    %993 = vector.broadcast %990 : vector<2x8x1xf32> to vector<2x8x6xf32>
    %994 = vector.broadcast %992 : vector<1x1x6xf32> to vector<2x8x6xf32>
    %995 = arith.mulf %993, %994 : vector<2x8x6xf32>
    %996 = arith.addf %989, %995 : vector<2x8x6xf32>
    %997 = vector.extract_strided_slice %981 {offsets = [0, 0, 2], sizes = [2, 8, 1], strides = [1, 1, 1]} : vector<2x8x4xf32> to vector<2x8x1xf32>
    %998 = vector.extract_strided_slice %983 {offsets = [2, 0], sizes = [1, 6], strides = [1, 1]} : vector<4x6xf32> to vector<1x6xf32>
    %999 = vector.shape_cast %998 : vector<1x6xf32> to vector<1x1x6xf32>
    %1000 = vector.broadcast %997 : vector<2x8x1xf32> to vector<2x8x6xf32>
    %1001 = vector.broadcast %999 : vector<1x1x6xf32> to vector<2x8x6xf32>
    %1002 = arith.mulf %1000, %1001 : vector<2x8x6xf32>
    %1003 = arith.addf %996, %1002 : vector<2x8x6xf32>
    %1004 = vector.extract_strided_slice %981 {offsets = [0, 0, 3], sizes = [2, 8, 1], strides = [1, 1, 1]} : vector<2x8x4xf32> to vector<2x8x1xf32>
    %1005 = vector.extract_strided_slice %983 {offsets = [3, 0], sizes = [1, 6], strides = [1, 1]} : vector<4x6xf32> to vector<1x6xf32>
    %1006 = vector.shape_cast %1005 : vector<1x6xf32> to vector<1x1x6xf32>
    %1007 = vector.broadcast %1004 : vector<2x8x1xf32> to vector<2x8x6xf32>
    %1008 = vector.broadcast %1006 : vector<1x1x6xf32> to vector<2x8x6xf32>
    %1009 = arith.mulf %1007, %1008 : vector<2x8x6xf32>
    %1010 = arith.addf %1003, %1009 : vector<2x8x6xf32>
    %1011 = arith.addf %980, %1010 : vector<2x8x6xf32>
    %c0_232 = arith.constant 0 : index
    %c0_233 = arith.constant 0 : index
    %1012 = vector.load %arg12[%c0_232, %c0_233] : memref<1x6xf32, #tpu.memory_space<vmem>>, vector<1x6xf32>
    %1013 = vector.shape_cast %1012 : vector<1x6xf32> to vector<1x1x6xf32>
    %1014 = vector.broadcast %1013 : vector<1x1x6xf32> to vector<2x8x6xf32>
    %1015 = arith.addf %1011, %1014 : vector<2x8x6xf32>
    %cst_234 = arith.constant 0.000000e+00 : f32
    %1016 = vector.broadcast %cst_234 : f32 to vector<2x8x6xf32>
    %1017 = arith.cmpf oge, %1015, %1016 : vector<2x8x6xf32>
    %cst_235 = arith.constant 0.00999999977 : f32
    %1018 = vector.broadcast %cst_235 : f32 to vector<2x8x6xf32>
    %1019 = arith.mulf %1018, %1015 : vector<2x8x6xf32>
    %1020 = arith.select %1017, %1015, %1019 : vector<2x8x6xi1>, vector<2x8x6xf32>
    %c0_236 = arith.constant 0 : index
    %c0_237 = arith.constant 0 : index
    %1021 = vector.load %arg13[%c0_236, %c0_237] : memref<4x6xf32, #tpu.memory_space<vmem>>, vector<4x6xf32>
    %1022 = vector.extract_strided_slice %260 {offsets = [0, 0, 0], sizes = [2, 8, 1], strides = [1, 1, 1]} : vector<2x8x4xf32> to vector<2x8x1xf32>
    %1023 = vector.extract_strided_slice %1021 {offsets = [0, 0], sizes = [1, 6], strides = [1, 1]} : vector<4x6xf32> to vector<1x6xf32>
    %1024 = vector.shape_cast %1023 : vector<1x6xf32> to vector<1x1x6xf32>
    %1025 = vector.broadcast %1022 : vector<2x8x1xf32> to vector<2x8x6xf32>
    %1026 = vector.broadcast %1024 : vector<1x1x6xf32> to vector<2x8x6xf32>
    %1027 = arith.mulf %1025, %1026 : vector<2x8x6xf32>
    %1028 = vector.extract_strided_slice %260 {offsets = [0, 0, 1], sizes = [2, 8, 1], strides = [1, 1, 1]} : vector<2x8x4xf32> to vector<2x8x1xf32>
    %1029 = vector.extract_strided_slice %1021 {offsets = [1, 0], sizes = [1, 6], strides = [1, 1]} : vector<4x6xf32> to vector<1x6xf32>
    %1030 = vector.shape_cast %1029 : vector<1x6xf32> to vector<1x1x6xf32>
    %1031 = vector.broadcast %1028 : vector<2x8x1xf32> to vector<2x8x6xf32>
    %1032 = vector.broadcast %1030 : vector<1x1x6xf32> to vector<2x8x6xf32>
    %1033 = arith.mulf %1031, %1032 : vector<2x8x6xf32>
    %1034 = arith.addf %1027, %1033 : vector<2x8x6xf32>
    %1035 = vector.extract_strided_slice %260 {offsets = [0, 0, 2], sizes = [2, 8, 1], strides = [1, 1, 1]} : vector<2x8x4xf32> to vector<2x8x1xf32>
    %1036 = vector.extract_strided_slice %1021 {offsets = [2, 0], sizes = [1, 6], strides = [1, 1]} : vector<4x6xf32> to vector<1x6xf32>
    %1037 = vector.shape_cast %1036 : vector<1x6xf32> to vector<1x1x6xf32>
    %1038 = vector.broadcast %1035 : vector<2x8x1xf32> to vector<2x8x6xf32>
    %1039 = vector.broadcast %1037 : vector<1x1x6xf32> to vector<2x8x6xf32>
    %1040 = arith.mulf %1038, %1039 : vector<2x8x6xf32>
    %1041 = arith.addf %1034, %1040 : vector<2x8x6xf32>
    %1042 = vector.extract_strided_slice %260 {offsets = [0, 0, 3], sizes = [2, 8, 1], strides = [1, 1, 1]} : vector<2x8x4xf32> to vector<2x8x1xf32>
    %1043 = vector.extract_strided_slice %1021 {offsets = [3, 0], sizes = [1, 6], strides = [1, 1]} : vector<4x6xf32> to vector<1x6xf32>
    %1044 = vector.shape_cast %1043 : vector<1x6xf32> to vector<1x1x6xf32>
    %1045 = vector.broadcast %1042 : vector<2x8x1xf32> to vector<2x8x6xf32>
    %1046 = vector.broadcast %1044 : vector<1x1x6xf32> to vector<2x8x6xf32>
    %1047 = arith.mulf %1045, %1046 : vector<2x8x6xf32>
    %1048 = arith.addf %1041, %1047 : vector<2x8x6xf32>
    %c0_238 = arith.constant 0 : index
    %c0_239 = arith.constant 0 : index
    %1049 = vector.load %arg14[%c0_238, %c0_239] : memref<6x6xf32, #tpu.memory_space<vmem>>, vector<6x6xf32>
    %1050 = vector.extract_strided_slice %1020 {offsets = [0, 0, 0], sizes = [2, 8, 1], strides = [1, 1, 1]} : vector<2x8x6xf32> to vector<2x8x1xf32>
    %1051 = vector.extract_strided_slice %1049 {offsets = [0, 0], sizes = [1, 6], strides = [1, 1]} : vector<6x6xf32> to vector<1x6xf32>
    %1052 = vector.shape_cast %1051 : vector<1x6xf32> to vector<1x1x6xf32>
    %1053 = vector.broadcast %1050 : vector<2x8x1xf32> to vector<2x8x6xf32>
    %1054 = vector.broadcast %1052 : vector<1x1x6xf32> to vector<2x8x6xf32>
    %1055 = arith.mulf %1053, %1054 : vector<2x8x6xf32>
    %1056 = vector.extract_strided_slice %1020 {offsets = [0, 0, 1], sizes = [2, 8, 1], strides = [1, 1, 1]} : vector<2x8x6xf32> to vector<2x8x1xf32>
    %1057 = vector.extract_strided_slice %1049 {offsets = [1, 0], sizes = [1, 6], strides = [1, 1]} : vector<6x6xf32> to vector<1x6xf32>
    %1058 = vector.shape_cast %1057 : vector<1x6xf32> to vector<1x1x6xf32>
    %1059 = vector.broadcast %1056 : vector<2x8x1xf32> to vector<2x8x6xf32>
    %1060 = vector.broadcast %1058 : vector<1x1x6xf32> to vector<2x8x6xf32>
    %1061 = arith.mulf %1059, %1060 : vector<2x8x6xf32>
    %1062 = arith.addf %1055, %1061 : vector<2x8x6xf32>
    %1063 = vector.extract_strided_slice %1020 {offsets = [0, 0, 2], sizes = [2, 8, 1], strides = [1, 1, 1]} : vector<2x8x6xf32> to vector<2x8x1xf32>
    %1064 = vector.extract_strided_slice %1049 {offsets = [2, 0], sizes = [1, 6], strides = [1, 1]} : vector<6x6xf32> to vector<1x6xf32>
    %1065 = vector.shape_cast %1064 : vector<1x6xf32> to vector<1x1x6xf32>
    %1066 = vector.broadcast %1063 : vector<2x8x1xf32> to vector<2x8x6xf32>
    %1067 = vector.broadcast %1065 : vector<1x1x6xf32> to vector<2x8x6xf32>
    %1068 = arith.mulf %1066, %1067 : vector<2x8x6xf32>
    %1069 = arith.addf %1062, %1068 : vector<2x8x6xf32>
    %1070 = vector.extract_strided_slice %1020 {offsets = [0, 0, 3], sizes = [2, 8, 1], strides = [1, 1, 1]} : vector<2x8x6xf32> to vector<2x8x1xf32>
    %1071 = vector.extract_strided_slice %1049 {offsets = [3, 0], sizes = [1, 6], strides = [1, 1]} : vector<6x6xf32> to vector<1x6xf32>
    %1072 = vector.shape_cast %1071 : vector<1x6xf32> to vector<1x1x6xf32>
    %1073 = vector.broadcast %1070 : vector<2x8x1xf32> to vector<2x8x6xf32>
    %1074 = vector.broadcast %1072 : vector<1x1x6xf32> to vector<2x8x6xf32>
    %1075 = arith.mulf %1073, %1074 : vector<2x8x6xf32>
    %1076 = arith.addf %1069, %1075 : vector<2x8x6xf32>
    %1077 = vector.extract_strided_slice %1020 {offsets = [0, 0, 4], sizes = [2, 8, 1], strides = [1, 1, 1]} : vector<2x8x6xf32> to vector<2x8x1xf32>
    %1078 = vector.extract_strided_slice %1049 {offsets = [4, 0], sizes = [1, 6], strides = [1, 1]} : vector<6x6xf32> to vector<1x6xf32>
    %1079 = vector.shape_cast %1078 : vector<1x6xf32> to vector<1x1x6xf32>
    %1080 = vector.broadcast %1077 : vector<2x8x1xf32> to vector<2x8x6xf32>
    %1081 = vector.broadcast %1079 : vector<1x1x6xf32> to vector<2x8x6xf32>
    %1082 = arith.mulf %1080, %1081 : vector<2x8x6xf32>
    %1083 = arith.addf %1076, %1082 : vector<2x8x6xf32>
    %1084 = vector.extract_strided_slice %1020 {offsets = [0, 0, 5], sizes = [2, 8, 1], strides = [1, 1, 1]} : vector<2x8x6xf32> to vector<2x8x1xf32>
    %1085 = vector.extract_strided_slice %1049 {offsets = [5, 0], sizes = [1, 6], strides = [1, 1]} : vector<6x6xf32> to vector<1x6xf32>
    %1086 = vector.shape_cast %1085 : vector<1x6xf32> to vector<1x1x6xf32>
    %1087 = vector.broadcast %1084 : vector<2x8x1xf32> to vector<2x8x6xf32>
    %1088 = vector.broadcast %1086 : vector<1x1x6xf32> to vector<2x8x6xf32>
    %1089 = arith.mulf %1087, %1088 : vector<2x8x6xf32>
    %1090 = arith.addf %1083, %1089 : vector<2x8x6xf32>
    %1091 = arith.addf %1048, %1090 : vector<2x8x6xf32>
    %c0_240 = arith.constant 0 : index
    %c0_241 = arith.constant 0 : index
    %1092 = vector.load %arg15[%c0_240, %c0_241] : memref<1x6xf32, #tpu.memory_space<vmem>>, vector<1x6xf32>
    %1093 = vector.shape_cast %1092 : vector<1x6xf32> to vector<1x1x6xf32>
    %1094 = vector.broadcast %1093 : vector<1x1x6xf32> to vector<2x8x6xf32>
    %1095 = arith.addf %1091, %1094 : vector<2x8x6xf32>
    %cst_242 = arith.constant 0.000000e+00 : f32
    %1096 = vector.broadcast %cst_242 : f32 to vector<2x8x6xf32>
    %1097 = arith.cmpf oge, %1095, %1096 : vector<2x8x6xf32>
    %cst_243 = arith.constant 0.00999999977 : f32
    %1098 = vector.broadcast %cst_243 : f32 to vector<2x8x6xf32>
    %1099 = arith.mulf %1098, %1095 : vector<2x8x6xf32>
    %1100 = arith.select %1097, %1095, %1099 : vector<2x8x6xi1>, vector<2x8x6xf32>
    %c0_244 = arith.constant 0 : index
    %c0_245 = arith.constant 0 : index
    %1101 = vector.load %arg16[%c0_244, %c0_245] : memref<6x6xf32, #tpu.memory_space<vmem>>, vector<6x6xf32>
    %1102 = vector.extract_strided_slice %1100 {offsets = [0, 0, 0], sizes = [2, 8, 1], strides = [1, 1, 1]} : vector<2x8x6xf32> to vector<2x8x1xf32>
    %1103 = vector.extract_strided_slice %1101 {offsets = [0, 0], sizes = [1, 6], strides = [1, 1]} : vector<6x6xf32> to vector<1x6xf32>
    %1104 = vector.shape_cast %1103 : vector<1x6xf32> to vector<1x1x6xf32>
    %1105 = vector.broadcast %1102 : vector<2x8x1xf32> to vector<2x8x6xf32>
    %1106 = vector.broadcast %1104 : vector<1x1x6xf32> to vector<2x8x6xf32>
    %1107 = arith.mulf %1105, %1106 : vector<2x8x6xf32>
    %1108 = vector.extract_strided_slice %1100 {offsets = [0, 0, 1], sizes = [2, 8, 1], strides = [1, 1, 1]} : vector<2x8x6xf32> to vector<2x8x1xf32>
    %1109 = vector.extract_strided_slice %1101 {offsets = [1, 0], sizes = [1, 6], strides = [1, 1]} : vector<6x6xf32> to vector<1x6xf32>
    %1110 = vector.shape_cast %1109 : vector<1x6xf32> to vector<1x1x6xf32>
    %1111 = vector.broadcast %1108 : vector<2x8x1xf32> to vector<2x8x6xf32>
    %1112 = vector.broadcast %1110 : vector<1x1x6xf32> to vector<2x8x6xf32>
    %1113 = arith.mulf %1111, %1112 : vector<2x8x6xf32>
    %1114 = arith.addf %1107, %1113 : vector<2x8x6xf32>
    %1115 = vector.extract_strided_slice %1100 {offsets = [0, 0, 2], sizes = [2, 8, 1], strides = [1, 1, 1]} : vector<2x8x6xf32> to vector<2x8x1xf32>
    %1116 = vector.extract_strided_slice %1101 {offsets = [2, 0], sizes = [1, 6], strides = [1, 1]} : vector<6x6xf32> to vector<1x6xf32>
    %1117 = vector.shape_cast %1116 : vector<1x6xf32> to vector<1x1x6xf32>
    %1118 = vector.broadcast %1115 : vector<2x8x1xf32> to vector<2x8x6xf32>
    %1119 = vector.broadcast %1117 : vector<1x1x6xf32> to vector<2x8x6xf32>
    %1120 = arith.mulf %1118, %1119 : vector<2x8x6xf32>
    %1121 = arith.addf %1114, %1120 : vector<2x8x6xf32>
    %1122 = vector.extract_strided_slice %1100 {offsets = [0, 0, 3], sizes = [2, 8, 1], strides = [1, 1, 1]} : vector<2x8x6xf32> to vector<2x8x1xf32>
    %1123 = vector.extract_strided_slice %1101 {offsets = [3, 0], sizes = [1, 6], strides = [1, 1]} : vector<6x6xf32> to vector<1x6xf32>
    %1124 = vector.shape_cast %1123 : vector<1x6xf32> to vector<1x1x6xf32>
    %1125 = vector.broadcast %1122 : vector<2x8x1xf32> to vector<2x8x6xf32>
    %1126 = vector.broadcast %1124 : vector<1x1x6xf32> to vector<2x8x6xf32>
    %1127 = arith.mulf %1125, %1126 : vector<2x8x6xf32>
    %1128 = arith.addf %1121, %1127 : vector<2x8x6xf32>
    %1129 = vector.extract_strided_slice %1100 {offsets = [0, 0, 4], sizes = [2, 8, 1], strides = [1, 1, 1]} : vector<2x8x6xf32> to vector<2x8x1xf32>
    %1130 = vector.extract_strided_slice %1101 {offsets = [4, 0], sizes = [1, 6], strides = [1, 1]} : vector<6x6xf32> to vector<1x6xf32>
    %1131 = vector.shape_cast %1130 : vector<1x6xf32> to vector<1x1x6xf32>
    %1132 = vector.broadcast %1129 : vector<2x8x1xf32> to vector<2x8x6xf32>
    %1133 = vector.broadcast %1131 : vector<1x1x6xf32> to vector<2x8x6xf32>
    %1134 = arith.mulf %1132, %1133 : vector<2x8x6xf32>
    %1135 = arith.addf %1128, %1134 : vector<2x8x6xf32>
    %1136 = vector.extract_strided_slice %1100 {offsets = [0, 0, 5], sizes = [2, 8, 1], strides = [1, 1, 1]} : vector<2x8x6xf32> to vector<2x8x1xf32>
    %1137 = vector.extract_strided_slice %1101 {offsets = [5, 0], sizes = [1, 6], strides = [1, 1]} : vector<6x6xf32> to vector<1x6xf32>
    %1138 = vector.shape_cast %1137 : vector<1x6xf32> to vector<1x1x6xf32>
    %1139 = vector.broadcast %1136 : vector<2x8x1xf32> to vector<2x8x6xf32>
    %1140 = vector.broadcast %1138 : vector<1x1x6xf32> to vector<2x8x6xf32>
    %1141 = arith.mulf %1139, %1140 : vector<2x8x6xf32>
    %1142 = arith.addf %1135, %1141 : vector<2x8x6xf32>
    %c0_246 = arith.constant 0 : index
    %c0_247 = arith.constant 0 : index
    %1143 = vector.load %arg17[%c0_246, %c0_247] : memref<1x6xf32, #tpu.memory_space<vmem>>, vector<1x6xf32>
    %1144 = vector.shape_cast %1143 : vector<1x6xf32> to vector<1x1x6xf32>
    %1145 = vector.broadcast %1144 : vector<1x1x6xf32> to vector<2x8x6xf32>
    %1146 = arith.addf %1142, %1145 : vector<2x8x6xf32>
    %cst_248 = arith.constant 0.000000e+00 : f32
    %1147 = vector.broadcast %cst_248 : f32 to vector<2x8x6xf32>
    %1148 = arith.cmpf oge, %1146, %1147 : vector<2x8x6xf32>
    %cst_249 = arith.constant 0.00999999977 : f32
    %1149 = vector.broadcast %cst_249 : f32 to vector<2x8x6xf32>
    %1150 = arith.mulf %1149, %1146 : vector<2x8x6xf32>
    %1151 = arith.select %1148, %1146, %1150 : vector<2x8x6xi1>, vector<2x8x6xf32>
    %c0_250 = arith.constant 0 : index
    %c0_251 = arith.constant 0 : index
    %1152 = vector.load %arg18[%c0_250, %c0_251] : memref<6x6xf32, #tpu.memory_space<vmem>>, vector<6x6xf32>
    %1153 = vector.extract_strided_slice %1151 {offsets = [0, 0, 0], sizes = [2, 8, 1], strides = [1, 1, 1]} : vector<2x8x6xf32> to vector<2x8x1xf32>
    %1154 = vector.extract_strided_slice %1152 {offsets = [0, 0], sizes = [1, 6], strides = [1, 1]} : vector<6x6xf32> to vector<1x6xf32>
    %1155 = vector.shape_cast %1154 : vector<1x6xf32> to vector<1x1x6xf32>
    %1156 = vector.broadcast %1153 : vector<2x8x1xf32> to vector<2x8x6xf32>
    %1157 = vector.broadcast %1155 : vector<1x1x6xf32> to vector<2x8x6xf32>
    %1158 = arith.mulf %1156, %1157 : vector<2x8x6xf32>
    %1159 = vector.extract_strided_slice %1151 {offsets = [0, 0, 1], sizes = [2, 8, 1], strides = [1, 1, 1]} : vector<2x8x6xf32> to vector<2x8x1xf32>
    %1160 = vector.extract_strided_slice %1152 {offsets = [1, 0], sizes = [1, 6], strides = [1, 1]} : vector<6x6xf32> to vector<1x6xf32>
    %1161 = vector.shape_cast %1160 : vector<1x6xf32> to vector<1x1x6xf32>
    %1162 = vector.broadcast %1159 : vector<2x8x1xf32> to vector<2x8x6xf32>
    %1163 = vector.broadcast %1161 : vector<1x1x6xf32> to vector<2x8x6xf32>
    %1164 = arith.mulf %1162, %1163 : vector<2x8x6xf32>
    %1165 = arith.addf %1158, %1164 : vector<2x8x6xf32>
    %1166 = vector.extract_strided_slice %1151 {offsets = [0, 0, 2], sizes = [2, 8, 1], strides = [1, 1, 1]} : vector<2x8x6xf32> to vector<2x8x1xf32>
    %1167 = vector.extract_strided_slice %1152 {offsets = [2, 0], sizes = [1, 6], strides = [1, 1]} : vector<6x6xf32> to vector<1x6xf32>
    %1168 = vector.shape_cast %1167 : vector<1x6xf32> to vector<1x1x6xf32>
    %1169 = vector.broadcast %1166 : vector<2x8x1xf32> to vector<2x8x6xf32>
    %1170 = vector.broadcast %1168 : vector<1x1x6xf32> to vector<2x8x6xf32>
    %1171 = arith.mulf %1169, %1170 : vector<2x8x6xf32>
    %1172 = arith.addf %1165, %1171 : vector<2x8x6xf32>
    %1173 = vector.extract_strided_slice %1151 {offsets = [0, 0, 3], sizes = [2, 8, 1], strides = [1, 1, 1]} : vector<2x8x6xf32> to vector<2x8x1xf32>
    %1174 = vector.extract_strided_slice %1152 {offsets = [3, 0], sizes = [1, 6], strides = [1, 1]} : vector<6x6xf32> to vector<1x6xf32>
    %1175 = vector.shape_cast %1174 : vector<1x6xf32> to vector<1x1x6xf32>
    %1176 = vector.broadcast %1173 : vector<2x8x1xf32> to vector<2x8x6xf32>
    %1177 = vector.broadcast %1175 : vector<1x1x6xf32> to vector<2x8x6xf32>
    %1178 = arith.mulf %1176, %1177 : vector<2x8x6xf32>
    %1179 = arith.addf %1172, %1178 : vector<2x8x6xf32>
    %1180 = vector.extract_strided_slice %1151 {offsets = [0, 0, 4], sizes = [2, 8, 1], strides = [1, 1, 1]} : vector<2x8x6xf32> to vector<2x8x1xf32>
    %1181 = vector.extract_strided_slice %1152 {offsets = [4, 0], sizes = [1, 6], strides = [1, 1]} : vector<6x6xf32> to vector<1x6xf32>
    %1182 = vector.shape_cast %1181 : vector<1x6xf32> to vector<1x1x6xf32>
    %1183 = vector.broadcast %1180 : vector<2x8x1xf32> to vector<2x8x6xf32>
    %1184 = vector.broadcast %1182 : vector<1x1x6xf32> to vector<2x8x6xf32>
    %1185 = arith.mulf %1183, %1184 : vector<2x8x6xf32>
    %1186 = arith.addf %1179, %1185 : vector<2x8x6xf32>
    %1187 = vector.extract_strided_slice %1151 {offsets = [0, 0, 5], sizes = [2, 8, 1], strides = [1, 1, 1]} : vector<2x8x6xf32> to vector<2x8x1xf32>
    %1188 = vector.extract_strided_slice %1152 {offsets = [5, 0], sizes = [1, 6], strides = [1, 1]} : vector<6x6xf32> to vector<1x6xf32>
    %1189 = vector.shape_cast %1188 : vector<1x6xf32> to vector<1x1x6xf32>
    %1190 = vector.broadcast %1187 : vector<2x8x1xf32> to vector<2x8x6xf32>
    %1191 = vector.broadcast %1189 : vector<1x1x6xf32> to vector<2x8x6xf32>
    %1192 = arith.mulf %1190, %1191 : vector<2x8x6xf32>
    %1193 = arith.addf %1186, %1192 : vector<2x8x6xf32>
    %c0_252 = arith.constant 0 : index
    %c0_253 = arith.constant 0 : index
    %1194 = vector.load %arg19[%c0_252, %c0_253] : memref<1x6xf32, #tpu.memory_space<vmem>>, vector<1x6xf32>
    %1195 = vector.shape_cast %1194 : vector<1x6xf32> to vector<1x1x6xf32>
    %1196 = vector.broadcast %1195 : vector<1x1x6xf32> to vector<2x8x6xf32>
    %1197 = arith.addf %1193, %1196 : vector<2x8x6xf32>
    %cst_254 = arith.constant 0.000000e+00 : f32
    %1198 = vector.broadcast %cst_254 : f32 to vector<2x8x6xf32>
    %1199 = arith.cmpf oge, %1197, %1198 : vector<2x8x6xf32>
    %cst_255 = arith.constant 0.00999999977 : f32
    %1200 = vector.broadcast %cst_255 : f32 to vector<2x8x6xf32>
    %1201 = arith.mulf %1200, %1197 : vector<2x8x6xf32>
    %1202 = arith.select %1199, %1197, %1201 : vector<2x8x6xi1>, vector<2x8x6xf32>
    %1203 = arith.addf %1020, %1202 : vector<2x8x6xf32>
    %c0_256 = arith.constant 0 : index
    %c0_257 = arith.constant 0 : index
    %c0_258 = arith.constant 0 : index
    %1204 = vector.load %arg20[%c0_256, %c0_257, %c0_258] : memref<2x8x6xf32, #tpu.memory_space<vmem>>, vector<2x8x6xf32>
    tpu.vector_store %arg20[%c0_256, %c0_257, %c0_258], %1203 {strides = array<i32>} : memref<2x8x6xf32, #tpu.memory_space<vmem>>, vector<2x8x6xf32>,
    return
  }
}

</mosaic_0001>

<llo_original>
// kernel: residual_block_forward.1
$region0: #{residual_block_forward.1}
  #allocation0 [shape = 'u32[]', space=smem, size = 0x4, offset = 0x4, fixed_abs, tag = 'smem constant byte address 0x4 - core index']
  #allocation1 [shape = 'u32[144,128]{1,0:T(1,128)}', space=vmem, size = 0x12000, scoped, tag = 'internal scratch']
  #allocation2 [shape = 'f32[2,30,4]{2,1,0:T(8,128)}', space=vmem, size = 0x8000, scoped, tag = 'scratch operand']
  #allocation3 [shape = 'f32[2,16,4]{2,1,0:T(8,128)}', space=vmem, size = 0x4000, scoped, tag = 'scratch operand']
  %s0 = inlined_call_operand.vmem [shape: f32[2,16,4], index: 0, kind: input, shape index: {}]
  %s1 = inlined_call_operand.vmem [shape: f32[1,4], index: 1, kind: input, shape index: {}, may-alias: {1,5,9}]
  %s2 = inlined_call_operand.vmem [shape: f32[1,4], index: 2, kind: input, shape index: {}, may-alias: {2,6,10}]
  %s3 = inlined_call_operand.hbm [shape: f32[7,4,4], index: 3, kind: input, shape index: {}]
  %s4 = inlined_call_operand.hbm [shape: f32[1,4], index: 4, kind: input, shape index: {}]
  %s5 = inlined_call_operand.vmem [shape: f32[1,4], index: 5, kind: input, shape index: {}, may-alias: {1,5,9}]
  %s6 = inlined_call_operand.vmem [shape: f32[1,4], index: 6, kind: input, shape index: {}, may-alias: {2,6,10}]
  %s7 = inlined_call_operand.vmem [shape: f32[15,4,4], index: 7, kind: input, shape index: {}]
  %s8 = inlined_call_operand.hbm [shape: f32[1,4], index: 8, kind: input, shape index: {}]
  %s9 = inlined_call_operand.vmem [shape: f32[1,4], index: 9, kind: input, shape index: {}, may-alias: {1,5,9}]
  %s10 = inlined_call_operand.vmem [shape: f32[1,4], index: 10, kind: input, shape index: {}, may-alias: {2,6,10}]
  %s11 = inlined_call_operand.vmem [shape: f32[7,4,6], index: 11, kind: input, shape index: {}]
  %s12 = inlined_call_operand.hbm [shape: f32[1,6], index: 12, kind: input, shape index: {}]
  %s13 = inlined_call_operand.hbm [shape: f32[4,6], index: 13, kind: input, shape index: {}]
  %s14 = inlined_call_operand.hbm [shape: f32[6,6], index: 14, kind: input, shape index: {}]
  %s15 = inlined_call_operand.hbm [shape: f32[1,6], index: 15, kind: input, shape index: {}]
  %s16 = inlined_call_operand.vmem [shape: f32[6,6], index: 16, kind: input, shape index: {}]
  %s17 = inlined_call_operand.hbm [shape: f32[1,6], index: 17, kind: input, shape index: {}]
  %s18 = inlined_call_operand.vmem [shape: f32[6,6], index: 18, kind: input, shape index: {}]
  %s19 = inlined_call_operand.hbm [shape: f32[1,6], index: 19, kind: input, shape index: {}]
  %s20 = inlined_call_operand.vmem [shape: f32[2,8,6], index: 20, kind: output, shape index: {}]
  %s21 = sld [smem:[#allocation0]]
  $region126: #{residual_block_forward.1} parent=0
    _
  %s23 = ssub.s32 1, %s21
  %s24 = scalar_select 0, %s23, %s21
  $region1: #{residual_block_forward.1} parent=0
    #allocation4 [shape = 'u8[14336]{0}', space=vmem, size = 0x3800, scoped, tag = 'input window, operand 3, single buffered']
    #allocation5 [shape = 's32[1]{0}', space=sflag, size = 0x4, scoped, tag = 'scoped memory for residual_block_forward.1']
    #allocation6 [shape = 'u8[512]{0}', space=vmem, size = 0x400, scoped, tag = 'input window, operand 4, single buffered']
    #allocation7 [shape = 's32[1]{0}', space=sflag, size = 0x4, scoped, tag = 'scoped memory for residual_block_forward.1']
    #allocation8 [shape = 'u8[512]{0}', space=vmem, size = 0x400, scoped, tag = 'input window, operand 8, single buffered']
    #allocation9 [shape = 'u8[512]{0}', space=vmem, size = 0x400, scoped, tag = 'input window, operand 12, single buffered']
    #allocation10 [shape = 's32[1]{0}', space=sflag, size = 0x4, scoped, tag = 'scoped memory for residual_block_forward.1']
    #allocation11 [shape = 'u8[2048]{0}', space=vmem, size = 0x800, scoped, tag = 'input window, operand 13, single buffered']
    #allocation12 [shape = 'u8[4096]{0}', space=vmem, size = 0x1000, scoped, tag = 'input window, operand 14, single buffered']
    #allocation13 [shape = 's32[1]{0}', space=sflag, size = 0x4, scoped, tag = 'scoped memory for residual_block_forward.1']
    #allocation14 [shape = 'u8[512]{0}', space=vmem, size = 0x400, scoped, tag = 'input window, operand 15, single buffered']
    #allocation15 [shape = 'u8[512]{0}', space=vmem, size = 0x400, scoped, tag = 'input window, operand 17, single buffered']
    #allocation16 [shape = 's32[1]{0}', space=sflag, size = 0x4, scoped, tag = 'scoped memory for residual_block_forward.1']
    #allocation17 [shape = 'u8[512]{0}', space=vmem, size = 0x400, scoped, tag = 'input window, operand 19, single buffered']
    %25 = vsyncpa [#allocation5], 0
    %26 = vsyncpa [#allocation7], 0
    %27 = vsyncpa [#allocation10], 0
    %28 = vsyncpa [#allocation13], 0
    %29 = vsyncpa [#allocation16], 0
    // Predicated region
    $region2: #{residual_block_forward.1} parent=1 // pred_check
      _
    $region3: #{residual_block_forward.1} parent=1 // pred_check_branch
      %31 = sbr.rel (0) target = $region5
    $region4: #{residual_block_forward.1} parent=1 // pred_region
      _
    $region5: #{residual_block_forward.1} parent=1 // pred_fallthru
      _
    // Predicated region
    $region6: #{residual_block_forward.1} parent=1 // pred_check
      _
    $region7: #{residual_block_forward.1} parent=1 // pred_check_branch
      %33 = sbr.rel (0) target = $region9
    $region8: #{residual_block_forward.1} parent=1 // pred_region
      _
    $region9: #{residual_block_forward.1} parent=1 // pred_fallthru
      _
    // Predicated region
    $region10: #{residual_block_forward.1} parent=1 // pred_check
      _
    $region11: #{residual_block_forward.1} parent=1 // pred_check_branch
      %35 = sbr.rel (0) target = $region13
    $region12: #{residual_block_forward.1} parent=1 // pred_region
      _
    $region13: #{residual_block_forward.1} parent=1 // pred_fallthru
      _
    // Predicated region
    $region14: #{residual_block_forward.1} parent=1 // pred_check
      _
    $region15: #{residual_block_forward.1} parent=1 // pred_check_branch
      %37 = sbr.rel (0) target = $region17
    $region16: #{residual_block_forward.1} parent=1 // pred_region
      %s39 = ssub.s32 448, 448
      %40 = vsyncadd [#allocation5], %s39
      %s41 = sshll.u32 [#allocation4], 4
      %s42 = int_to_ptr.vmem [resolvable:$true] %s41
      %47 = dma.hbm_to_vmem [thread:$0]  %s3, 448, %s42, [#allocation5], 64, 64, 4
    $region17: #{residual_block_forward.1} parent=1 // pred_fallthru
      _
    // Predicated region
    $region18: #{residual_block_forward.1} parent=1 // pred_check
      _
    $region19: #{residual_block_forward.1} parent=1 // pred_check_branch
      %49 = sbr.rel (0) target = $region21
    $region20: #{residual_block_forward.1} parent=1 // pred_region
      %s51 = ssub.s32 16, 16
      %52 = vsyncadd [#allocation7], %s51
      %s54 = sshll.u32 [#allocation6], 4
      %s55 = int_to_ptr.vmem [resolvable:$true] %s54
      %57 = dma.hbm_to_vmem [thread:$0]  %s4, 16, %s55, [#allocation7]
    $region21: #{residual_block_forward.1} parent=1 // pred_fallthru
      _
    // Predicated region
    $region22: #{residual_block_forward.1} parent=1 // pred_check
      _
    $region23: #{residual_block_forward.1} parent=1 // pred_check_branch
      %59 = sbr.rel (0) target = $region25
    $region24: #{residual_block_forward.1} parent=1 // pred_region
      _
    $region25: #{residual_block_forward.1} parent=1 // pred_fallthru
      _
    // Predicated region
    $region26: #{residual_block_forward.1} parent=1 // pred_check
      _
    $region27: #{residual_block_forward.1} parent=1 // pred_check_branch
      %61 = sbr.rel (0) target = $region29
    $region28: #{residual_block_forward.1} parent=1 // pred_region
      _
    $region29: #{residual_block_forward.1} parent=1 // pred_fallthru
      _
    // Predicated region
    $region30: #{residual_block_forward.1} parent=1 // pred_check
      _
    $region31: #{residual_block_forward.1} parent=1 // pred_check_branch
      %63 = sbr.rel (0) target = $region33
    $region32: #{residual_block_forward.1} parent=1 // pred_region
      _
    $region33: #{residual_block_forward.1} parent=1 // pred_fallthru
      _
    // Predicated region
    $region34: #{residual_block_forward.1} parent=1 // pred_check
      _
    $region35: #{residual_block_forward.1} parent=1 // pred_check_branch
      %65 = sbr.rel (0) target = $region37
    $region36: #{residual_block_forward.1} parent=1 // pred_region
      %s67 = ssub.s32 16, 16
      %68 = vsyncadd [#allocation7], %s67
      %s70 = sshll.u32 [#allocation8], 4
      %s71 = int_to_ptr.vmem [resolvable:$true] %s70
      %73 = dma.hbm_to_vmem [thread:$0]  %s8, 16, %s71, [#allocation7]
    $region37: #{residual_block_forward.1} parent=1 // pred_fallthru
      _
    // Predicated region
    $region38: #{residual_block_forward.1} parent=1 // pred_check
      _
    $region39: #{residual_block_forward.1} parent=1 // pred_check_branch
      %75 = sbr.rel (0) target = $region41
    $region40: #{residual_block_forward.1} parent=1 // pred_region
      _
    $region41: #{residual_block_forward.1} parent=1 // pred_fallthru
      _
    // Predicated region
    $region42: #{residual_block_forward.1} parent=1 // pred_check
      _
    $region43: #{residual_block_forward.1} parent=1 // pred_check_branch
      %77 = sbr.rel (0) target = $region45
    $region44: #{residual_block_forward.1} parent=1 // pred_region
      _
    $region45: #{residual_block_forward.1} parent=1 // pred_fallthru
      _
    // Predicated region
    $region46: #{residual_block_forward.1} parent=1 // pred_check
      _
    $region47: #{residual_block_forward.1} parent=1 // pred_check_branch
      %79 = sbr.rel (0) target = $region49
    $region48: #{residual_block_forward.1} parent=1 // pred_region
      _
    $region49: #{residual_block_forward.1} parent=1 // pred_fallthru
      _
    // Predicated region
    $region50: #{residual_block_forward.1} parent=1 // pred_check
      _
    $region51: #{residual_block_forward.1} parent=1 // pred_check_branch
      %81 = sbr.rel (0) target = $region53
    $region52: #{residual_block_forward.1} parent=1 // pred_region
      %s83 = ssub.s32 16, 16
      %84 = vsyncadd [#allocation10], %s83
      %s86 = sshll.u32 [#allocation9], 4
      %s87 = int_to_ptr.vmem [resolvable:$true] %s86
      %89 = dma.hbm_to_vmem [thread:$0]  %s12, 16, %s87, [#allocation10]
    $region53: #{residual_block_forward.1} parent=1 // pred_fallthru
      _
    // Predicated region
    $region54: #{residual_block_forward.1} parent=1 // pred_check
      _
    $region55: #{residual_block_forward.1} parent=1 // pred_check_branch
      %91 = sbr.rel (0) target = $region57
    $region56: #{residual_block_forward.1} parent=1 // pred_region
      %s93 = ssub.s32 64, 64
      %94 = vsyncadd [#allocation10], %s93
      %s96 = sshll.u32 [#allocation11], 4
      %s97 = int_to_ptr.vmem [resolvable:$true] %s96
      %99 = dma.hbm_to_vmem [thread:$0]  %s13, 64, %s97, [#allocation10]
    $region57: #{residual_block_forward.1} parent=1 // pred_fallthru
      _
    // Predicated region
    $region58: #{residual_block_forward.1} parent=1 // pred_check
      _
    $region59: #{residual_block_forward.1} parent=1 // pred_check_branch
      %101 = sbr.rel (0) target = $region61
    $region60: #{residual_block_forward.1} parent=1 // pred_region
      %s103 = ssub.s32 128, 128
      %104 = vsyncadd [#allocation13], %s103
      %s106 = sshll.u32 [#allocation12], 4
      %s107 = int_to_ptr.vmem [resolvable:$true] %s106
      %109 = dma.hbm_to_vmem [thread:$0]  %s14, 128, %s107, [#allocation13]
    $region61: #{residual_block_forward.1} parent=1 // pred_fallthru
      _
    // Predicated region
    $region62: #{residual_block_forward.1} parent=1 // pred_check
      _
    $region63: #{residual_block_forward.1} parent=1 // pred_check_branch
      %111 = sbr.rel (0) target = $region65
    $region64: #{residual_block_forward.1} parent=1 // pred_region
      %s113 = ssub.s32 16, 16
      %114 = vsyncadd [#allocation13], %s113
      %s116 = sshll.u32 [#allocation14], 4
      %s117 = int_to_ptr.vmem [resolvable:$true] %s116
      %119 = dma.hbm_to_vmem [thread:$0]  %s15, 16, %s117, [#allocation13]
    $region65: #{residual_block_forward.1} parent=1 // pred_fallthru
      _
    // Predicated region
    $region66: #{residual_block_forward.1} parent=1 // pred_check
      _
    $region67: #{residual_block_forward.1} parent=1 // pred_check_branch
      %121 = sbr.rel (0) target = $region69
    $region68: #{residual_block_forward.1} parent=1 // pred_region
      _
    $region69: #{residual_block_forward.1} parent=1 // pred_fallthru
      _
    // Predicated region
    $region70: #{residual_block_forward.1} parent=1 // pred_check
      _
    $region71: #{residual_block_forward.1} parent=1 // pred_check_branch
      %123 = sbr.rel (0) target = $region73
    $region72: #{residual_block_forward.1} parent=1 // pred_region
      %s125 = ssub.s32 16, 16
      %126 = vsyncadd [#allocation16], %s125
      %s128 = sshll.u32 [#allocation15], 4
      %s129 = int_to_ptr.vmem [resolvable:$true] %s128
      %131 = dma.hbm_to_vmem [thread:$0]  %s17, 16, %s129, [#allocation16]
    $region73: #{residual_block_forward.1} parent=1 // pred_fallthru
      _
    // Predicated region
    $region74: #{residual_block_forward.1} parent=1 // pred_check
      _
    $region75: #{residual_block_forward.1} parent=1 // pred_check_branch
      %133 = sbr.rel (0) target = $region77
    $region76: #{residual_block_forward.1} parent=1 // pred_region
      _
    $region77: #{residual_block_forward.1} parent=1 // pred_fallthru
      _
    // Predicated region
    $region78: #{residual_block_forward.1} parent=1 // pred_check
      _
    $region79: #{residual_block_forward.1} parent=1 // pred_check_branch
      %135 = sbr.rel (0) target = $region81
    $region80: #{residual_block_forward.1} parent=1 // pred_region
      %s137 = ssub.s32 16, 16
      %138 = vsyncadd [#allocation16], %s137
      %s140 = sshll.u32 [#allocation17], 4
      %s141 = int_to_ptr.vmem [resolvable:$true] %s140
      %143 = dma.hbm_to_vmem [thread:$0]  %s19, 16, %s141, [#allocation16]
    $region81: #{residual_block_forward.1} parent=1 // pred_fallthru
      _
    // Predicated region
    $region82: #{residual_block_forward.1} parent=1 // pred_check
      _
    $region83: #{residual_block_forward.1} parent=1 // pred_check_branch
      %145 = sbr.rel (0) target = $region85
    $region84: #{residual_block_forward.1} parent=1 // pred_region
      %146 = dma.done [#allocation5], 448
    $region85: #{residual_block_forward.1} parent=1 // pred_fallthru
      _
    // Predicated region
    $region86: #{residual_block_forward.1} parent=1 // pred_check
      _
    $region87: #{residual_block_forward.1} parent=1 // pred_check_branch
      %148 = sbr.rel (0) target = $region89
    $region88: #{residual_block_forward.1} parent=1 // pred_region
      %149 = dma.done [#allocation7], 16
    $region89: #{residual_block_forward.1} parent=1 // pred_fallthru
      _
    // Predicated region
    $region90: #{residual_block_forward.1} parent=1 // pred_check
      _
    $region91: #{residual_block_forward.1} parent=1 // pred_check_branch
      %151 = sbr.rel (0) target = $region93
    $region92: #{residual_block_forward.1} parent=1 // pred_region
      %152 = dma.done [#allocation7], 16
    $region93: #{residual_block_forward.1} parent=1 // pred_fallthru
      _
    // Predicated region
    $region94: #{residual_block_forward.1} parent=1 // pred_check
      _
    $region95: #{residual_block_forward.1} parent=1 // pred_check_branch
      %154 = sbr.rel (0) target = $region97
    $region96: #{residual_block_forward.1} parent=1 // pred_region
      %155 = dma.done [#allocation10], 16
    $region97: #{residual_block_forward.1} parent=1 // pred_fallthru
      _
    // Predicated region
    $region98: #{residual_block_forward.1} parent=1 // pred_check
      _
    $region99: #{residual_block_forward.1} parent=1 // pred_check_branch
      %157 = sbr.rel (0) target = $region101
    $region100: #{residual_block_forward.1} parent=1 // pred_region
      %158 = dma.done [#allocation10], 64
    $region101: #{residual_block_forward.1} parent=1 // pred_fallthru
      _
    // Predicated region
    $region102: #{residual_block_forward.1} parent=1 // pred_check
      _
    $region103: #{residual_block_forward.1} parent=1 // pred_check_branch
      %160 = sbr.rel (0) target = $region105
    $region104: #{residual_block_forward.1} parent=1 // pred_region
      %161 = dma.done [#allocation13], 128
    $region105: #{residual_block_forward.1} parent=1 // pred_fallthru
      _
    // Predicated region
    $region106: #{residual_block_forward.1} parent=1 // pred_check
      _
    $region107: #{residual_block_forward.1} parent=1 // pred_check_branch
      %163 = sbr.rel (0) target = $region109
    $region108: #{residual_block_forward.1} parent=1 // pred_region
      %164 = dma.done [#allocation13], 16
    $region109: #{residual_block_forward.1} parent=1 // pred_fallthru
      _
    // Predicated region
    $region110: #{residual_block_forward.1} parent=1 // pred_check
      _
    $region111: #{residual_block_forward.1} parent=1 // pred_check_branch
      %166 = sbr.rel (0) target = $region113
    $region112: #{residual_block_forward.1} parent=1 // pred_region
      %167 = dma.done [#allocation16], 16
    $region113: #{residual_block_forward.1} parent=1 // pred_fallthru
      _
    // Predicated region
    $region114: #{residual_block_forward.1} parent=1 // pred_check
      _
    $region115: #{residual_block_forward.1} parent=1 // pred_check_branch
      %169 = sbr.rel (0) target = $region117
    $region116: #{residual_block_forward.1} parent=1 // pred_region
      %170 = dma.done [#allocation16], 16
    $region117: #{residual_block_forward.1} parent=1 // pred_fallthru
      _
    %v171 = vld [vmem:[%s0] sm:$0xff]
    %v172 = vld [vmem:[%s0 + $0x8] sm:$0xff]
    %v173 = vld [vmem:[%s0 + $0x10] sm:$0xff]
    %v174 = vld [vmem:[%s0 + $0x18] sm:$0xff]
    %vm175 = vcmask 31744
    %v176 = vsel %vm175, %v171, 0.0
    %v177 = vsel %vm175, %v172, 0.0
    %v178 = vadd.f32 %v176, %v177
    %v179 = vrot.slane %v178, 4
    %v180 = vadd.f32 %v178, %v179
    %v181 = vrot.slane %v180, 2
    %v182 = vadd.f32 %v180, %v181
    %v183 = vrot.slane %v182, 1
    %v184 = vadd.f32 %v182, %v183
    %v185 = vsel %vm175, %v173, 0.0
    %v186 = vsel %vm175, %v174, 0.0
    %v187 = vadd.f32 %v185, %v186
    %v188 = vrot.slane %v187, 4
    %v189 = vadd.f32 %v187, %v188
    %v190 = vrot.slane %v189, 2
    %v191 = vadd.f32 %v189, %v190
    %v192 = vrot.slane %v191, 1
    %v193 = vadd.f32 %v191, %v192
    %v194 = vsel %vm175, %v184, 0.0
    %v195 = vsel %vm175, %v193, 0.0
    %v196 = vadd.f32 %v194, %v195
    %v197 = vrcp.pop 32.0
    %v198 = vmul.f32 %v196, %v197
    %v199 = vsub.f32 %v171, %v198
    %v200 = vsub.f32 %v172, %v198
    %v201 = vsub.f32 %v173, %v198
    %v202 = vsub.f32 %v174, %v198
    %v203 = vmul.f32 %v199, %v199
    %v204 = vmul.f32 %v200, %v200
    %v205 = vmul.f32 %v201, %v201
    %v206 = vmul.f32 %v202, %v202
    %v207 = vsel %vm175, %v203, 0.0
    %v208 = vsel %vm175, %v204, 0.0
    %v209 = vadd.f32 %v207, %v208
    %v210 = vrot.slane %v209, 4
    %v211 = vadd.f32 %v209, %v210
    %v212 = vrot.slane %v211, 2
    %v213 = vadd.f32 %v211, %v212
    %v214 = vrot.slane %v213, 1
    %v215 = vadd.f32 %v213, %v214
    %v216 = vsel %vm175, %v205, 0.0
    %v217 = vsel %vm175, %v206, 0.0
    %v218 = vadd.f32 %v216, %v217
    %v219 = vrot.slane %v218, 4
    %v220 = vadd.f32 %v218, %v219
    %v221 = vrot.slane %v220, 2
    %v222 = vadd.f32 %v220, %v221
    %v223 = vrot.slane %v222, 1
    %v224 = vadd.f32 %v222, %v223
    %v225 = vsel %vm175, %v215, 0.0
    %v226 = vsel %vm175, %v224, 0.0
    %v227 = vadd.f32 %v225, %v226
    %v228 = vmul.f32 %v227, %v197
    %v229 = vadd.f32 %v228, 1e-05
    %v230 = vrsqrt.pop %v229
    %v231 = vmul.f32 %v199, %v230
    %v232 = vmul.f32 %v200, %v230
    %v233 = vmul.f32 %v201, %v230
    %v234 = vmul.f32 %v202, %v230
    %v235 = vld [vmem:[%s1] sm:$0x1]
    %v237 = vlaneseq
    %v238 = vshrl.u32 %v237, 7
    %v239 = vsub.s32 0, %v238
    %v240 = vrot.slane %v235, %v239
    %v242 = vmul.f32 %v231, %v240
    %v243 = vmul.f32 %v232, %v240
    %v244 = vmul.f32 %v233, %v240
    %v245 = vmul.f32 %v234, %v240
    %v246 = vld [vmem:[%s2] sm:$0x1]
    %v248 = vlaneseq
    %v249 = vshrl.u32 %v248, 7
    %v250 = vsub.s32 0, %v249
    %v251 = vrot.slane %v246, %v250
    %v253 = vadd.f32 %v242, %v251
    %v254 = vadd.f32 %v243, %v251
    %v255 = vadd.f32 %v244, %v251
    %v256 = vadd.f32 %v245, %v251
    %257 = vst.msk [vmem:[#allocation2] sm:$0xff] %vm175, 0.0
    %258 = vst.msk [vmem:[#allocation2 + $0x8] sm:$0xff] %vm175, 0.0
    %259 = vst.msk [vmem:[#allocation2 + $0x10] sm:$0xff] %vm175, 0.0
    %vm260 = vcmask 29696
    %261 = vst.msk [vmem:[#allocation2 + $0x18] sm:$0x3f] %vm260, 0.0
    %262 = vst.msk [vmem:[#allocation2 + $0x20] sm:$0xff] %vm175, 0.0
    %263 = vst.msk [vmem:[#allocation2 + $0x28] sm:$0xff] %vm175, 0.0
    %264 = vst.msk [vmem:[#allocation2 + $0x30] sm:$0xff] %vm175, 0.0
    %265 = vst.msk [vmem:[#allocation2 + $0x38] sm:$0x3f] %vm260, 0.0
    %266 = vst.msk [vmem:[#allocation2 + $0x3] sm:$0xff] %vm175, %v253
    %267 = vst.msk [vmem:[#allocation2 + $0xb] sm:$0xff] %vm175, %v254
    %268 = vst.msk [vmem:[#allocation2 + $0x23] sm:$0xff] %vm175, %v255
    %269 = vst.msk [vmem:[#allocation2 + $0x2b] sm:$0xff] %vm175, %v256
    %v270 = vld [vmem:[#allocation2] sm:$0xff]
    %v271 = vld [vmem:[#allocation2 + $0x8] sm:$0xff]
    %v272 = vld [vmem:[#allocation2 + $0x20] sm:$0xff]
    %v273 = vld [vmem:[#allocation2 + $0x28] sm:$0xff]
    %v274 = vld [vmem:[#allocation4] sm:$0xf]
    %276 = vset.pattern.permute.xlu0 0
    %277 = vperm.xlu0 %276, %v270
    %v278 = vpop.permute.xlu0 %277
    %281 = vset.pattern.permute.xlu0 0
    %282 = vperm.xlu0 %281, %v271
    %v283 = vpop.permute.xlu0 %282
    %286 = vset.pattern.permute.xlu0 0
    %287 = vperm.xlu0 %286, %v272
    %v288 = vpop.permute.xlu0 %287
    %291 = vset.pattern.permute.xlu0 0
    %292 = vperm.xlu0 %291, %v273
    %v293 = vpop.permute.xlu0 %292
    %v295 = vlaneseq
    %v296 = vshrl.u32 %v295, 7
    %v297 = vsub.s32 0, %v296
    %v298 = vrot.slane %v274, %v297
    %v299 = vmul.f32 %v278, %v298
    %v300 = vmul.f32 %v283, %v298
    %v301 = vmul.f32 %v288, %v298
    %v302 = vmul.f32 %v293, %v298
    %303 = vset.pattern.permute.xlu0 1
    %304 = vperm.xlu0 %303, %v270
    %v305 = vpop.permute.xlu0 %304
    %307 = vset.pattern.permute.xlu0 1
    %308 = vperm.xlu0 %307, %v271
    %v309 = vpop.permute.xlu0 %308
    %311 = vset.pattern.permute.xlu0 1
    %312 = vperm.xlu0 %311, %v272
    %v313 = vpop.permute.xlu0 %312
    %315 = vset.pattern.permute.xlu0 1
    %316 = vperm.xlu0 %315, %v273
    %v317 = vpop.permute.xlu0 %316
    %v319 = vlaneseq
    %v320 = vshrl.u32 %v319, 7
    %v321 = vsub.s32 1, %v320
    %v322 = vrot.slane %v274, %v321
    %v323 = vmul.f32 %v305, %v322
    %v324 = vmul.f32 %v309, %v322
    %v325 = vmul.f32 %v313, %v322
    %v326 = vmul.f32 %v317, %v322
    %v327 = vadd.f32 %v299, %v323
    %v328 = vadd.f32 %v300, %v324
    %v329 = vadd.f32 %v301, %v325
    %v330 = vadd.f32 %v302, %v326
    %331 = vset.pattern.permute.xlu0 2
    %332 = vperm.xlu0 %331, %v270
    %v333 = vpop.permute.xlu0 %332
    %335 = vset.pattern.permute.xlu0 2
    %336 = vperm.xlu0 %335, %v271
    %v337 = vpop.permute.xlu0 %336
    %339 = vset.pattern.permute.xlu0 2
    %340 = vperm.xlu0 %339, %v272
    %v341 = vpop.permute.xlu0 %340
    %343 = vset.pattern.permute.xlu0 2
    %344 = vperm.xlu0 %343, %v273
    %v345 = vpop.permute.xlu0 %344
    %v347 = vlaneseq
    %v348 = vshrl.u32 %v347, 7
    %v349 = vsub.s32 2, %v348
    %v350 = vrot.slane %v274, %v349
    %v351 = vmul.f32 %v333, %v350
    %v352 = vmul.f32 %v337, %v350
    %v353 = vmul.f32 %v341, %v350
    %v354 = vmul.f32 %v345, %v350
    %v355 = vadd.f32 %v327, %v351
    %v356 = vadd.f32 %v328, %v352
    %v357 = vadd.f32 %v329, %v353
    %v358 = vadd.f32 %v330, %v354
    %359 = vset.pattern.permute.xlu0 3
    %360 = vperm.xlu0 %359, %v270
    %v361 = vpop.permute.xlu0 %360
    %363 = vset.pattern.permute.xlu0 3
    %364 = vperm.xlu0 %363, %v271
    %v365 = vpop.permute.xlu0 %364
    %367 = vset.pattern.permute.xlu0 3
    %368 = vperm.xlu0 %367, %v272
    %v369 = vpop.permute.xlu0 %368
    %371 = vset.pattern.permute.xlu0 3
    %372 = vperm.xlu0 %371, %v273
    %v373 = vpop.permute.xlu0 %372
    %v375 = vlaneseq
    %v376 = vshrl.u32 %v375, 7
    %v377 = vsub.s32 3, %v376
    %v378 = vrot.slane %v274, %v377
    %v379 = vmul.f32 %v361, %v378
    %v380 = vmul.f32 %v365, %v378
    %v381 = vmul.f32 %v369, %v378
    %v382 = vmul.f32 %v373, %v378
    %v383 = vadd.f32 %v355, %v379
    %v384 = vadd.f32 %v356, %v380
    %v385 = vadd.f32 %v357, %v381
    %v386 = vadd.f32 %v358, %v382
    %v387 = vld [vmem:[#allocation2 + $0x1] sm:$0xff]
    %v388 = vld [vmem:[#allocation2 + $0x9] sm:$0xff]
    %v389 = vld [vmem:[#allocation2 + $0x21] sm:$0xff]
    %v390 = vld [vmem:[#allocation2 + $0x29] sm:$0xff]
    %s391 = scalar_lea.vmem [#allocation4], 4
    %v392 = vld [vmem:[%s391] sm:$0xf]
    %394 = vset.pattern.permute.xlu0 0
    %395 = vperm.xlu0 %394, %v387
    %v396 = vpop.permute.xlu0 %395
    %399 = vset.pattern.permute.xlu0 0
    %400 = vperm.xlu0 %399, %v388
    %v401 = vpop.permute.xlu0 %400
    %404 = vset.pattern.permute.xlu0 0
    %405 = vperm.xlu0 %404, %v389
    %v406 = vpop.permute.xlu0 %405
    %409 = vset.pattern.permute.xlu0 0
    %410 = vperm.xlu0 %409, %v390
    %v411 = vpop.permute.xlu0 %410
    %v413 = vlaneseq
    %v414 = vshrl.u32 %v413, 7
    %v415 = vsub.s32 0, %v414
    %v416 = vrot.slane %v392, %v415
    %v417 = vmul.f32 %v396, %v416
    %v418 = vmul.f32 %v401, %v416
    %v419 = vmul.f32 %v406, %v416
    %v420 = vmul.f32 %v411, %v416
    %421 = vset.pattern.permute.xlu0 1
    %422 = vperm.xlu0 %421, %v387
    %v423 = vpop.permute.xlu0 %422
    %425 = vset.pattern.permute.xlu0 1
    %426 = vperm.xlu0 %425, %v388
    %v427 = vpop.permute.xlu0 %426
    %429 = vset.pattern.permute.xlu0 1
    %430 = vperm.xlu0 %429, %v389
    %v431 = vpop.permute.xlu0 %430
    %433 = vset.pattern.permute.xlu0 1
    %434 = vperm.xlu0 %433, %v390
    %v435 = vpop.permute.xlu0 %434
    %v437 = vlaneseq
    %v438 = vshrl.u32 %v437, 7
    %v439 = vsub.s32 1, %v438
    %v440 = vrot.slane %v392, %v439
    %v441 = vmul.f32 %v423, %v440
    %v442 = vmul.f32 %v427, %v440
    %v443 = vmul.f32 %v431, %v440
    %v444 = vmul.f32 %v435, %v440
    %v445 = vadd.f32 %v417, %v441
    %v446 = vadd.f32 %v418, %v442
    %v447 = vadd.f32 %v419, %v443
    %v448 = vadd.f32 %v420, %v444
    %449 = vset.pattern.permute.xlu0 2
    %450 = vperm.xlu0 %449, %v387
    %v451 = vpop.permute.xlu0 %450
    %453 = vset.pattern.permute.xlu0 2
    %454 = vperm.xlu0 %453, %v388
    %v455 = vpop.permute.xlu0 %454
    %457 = vset.pattern.permute.xlu0 2
    %458 = vperm.xlu0 %457, %v389
    %v459 = vpop.permute.xlu0 %458
    %461 = vset.pattern.permute.xlu0 2
    %462 = vperm.xlu0 %461, %v390
    %v463 = vpop.permute.xlu0 %462
    %v465 = vlaneseq
    %v466 = vshrl.u32 %v465, 7
    %v467 = vsub.s32 2, %v466
    %v468 = vrot.slane %v392, %v467
    %v469 = vmul.f32 %v451, %v468
    %v470 = vmul.f32 %v455, %v468
    %v471 = vmul.f32 %v459, %v468
    %v472 = vmul.f32 %v463, %v468
    %v473 = vadd.f32 %v445, %v469
    %v474 = vadd.f32 %v446, %v470
    %v475 = vadd.f32 %v447, %v471
    %v476 = vadd.f32 %v448, %v472
    %477 = vset.pattern.permute.xlu0 3
    %478 = vperm.xlu0 %477, %v387
    %v479 = vpop.permute.xlu0 %478
    %481 = vset.pattern.permute.xlu0 3
    %482 = vperm.xlu0 %481, %v388
    %v483 = vpop.permute.xlu0 %482
    %485 = vset.pattern.permute.xlu0 3
    %486 = vperm.xlu0 %485, %v389
    %v487 = vpop.permute.xlu0 %486
    %489 = vset.pattern.permute.xlu0 3
    %490 = vperm.xlu0 %489, %v390
    %v491 = vpop.permute.xlu0 %490
    %v493 = vlaneseq
    %v494 = vshrl.u32 %v493, 7
    %v495 = vsub.s32 3, %v494
    %v496 = vrot.slane %v392, %v495
    %v497 = vmul.f32 %v479, %v496
    %v498 = vmul.f32 %v483, %v496
    %v499 = vmul.f32 %v487, %v496
    %v500 = vmul.f32 %v491, %v496
    %v501 = vadd.f32 %v473, %v497
    %v502 = vadd.f32 %v474, %v498
    %v503 = vadd.f32 %v475, %v499
    %v504 = vadd.f32 %v476, %v500
    %v505 = vadd.f32 %v383, %v501
    %v506 = vadd.f32 %v384, %v502
    %v507 = vadd.f32 %v385, %v503
    %v508 = vadd.f32 %v386, %v504
    %v509 = vld [vmem:[#allocation2 + $0x2] sm:$0xff]
    %v510 = vld [vmem:[#allocation2 + $0xa] sm:$0xff]
    %v511 = vld [vmem:[#allocation2 + $0x22] sm:$0xff]
    %v512 = vld [vmem:[#allocation2 + $0x2a] sm:$0xff]
    %s513 = scalar_lea.vmem [#allocation4], 8
    %v514 = vld [vmem:[%s513] sm:$0xf]
    %516 = vset.pattern.permute.xlu0 0
    %517 = vperm.xlu0 %516, %v509
    %v518 = vpop.permute.xlu0 %517
    %521 = vset.pattern.permute.xlu0 0
    %522 = vperm.xlu0 %521, %v510
    %v523 = vpop.permute.xlu0 %522
    %526 = vset.pattern.permute.xlu0 0
    %527 = vperm.xlu0 %526, %v511
    %v528 = vpop.permute.xlu0 %527
    %531 = vset.pattern.permute.xlu0 0
    %532 = vperm.xlu0 %531, %v512
    %v533 = vpop.permute.xlu0 %532
    %v535 = vlaneseq
    %v536 = vshrl.u32 %v535, 7
    %v537 = vsub.s32 0, %v536
    %v538 = vrot.slane %v514, %v537
    %v539 = vmul.f32 %v518, %v538
    %v540 = vmul.f32 %v523, %v538
    %v541 = vmul.f32 %v528, %v538
    %v542 = vmul.f32 %v533, %v538
    %543 = vset.pattern.permute.xlu0 1
    %544 = vperm.xlu0 %543, %v509
    %v545 = vpop.permute.xlu0 %544
    %547 = vset.pattern.permute.xlu0 1
    %548 = vperm.xlu0 %547, %v510
    %v549 = vpop.permute.xlu0 %548
    %551 = vset.pattern.permute.xlu0 1
    %552 = vperm.xlu0 %551, %v511
    %v553 = vpop.permute.xlu0 %552
    %555 = vset.pattern.permute.xlu0 1
    %556 = vperm.xlu0 %555, %v512
    %v557 = vpop.permute.xlu0 %556
    %v559 = vlaneseq
    %v560 = vshrl.u32 %v559, 7
    %v561 = vsub.s32 1, %v560
    %v562 = vrot.slane %v514, %v561
    %v563 = vmul.f32 %v545, %v562
    %v564 = vmul.f32 %v549, %v562
    %v565 = vmul.f32 %v553, %v562
    %v566 = vmul.f32 %v557, %v562
    %v567 = vadd.f32 %v539, %v563
    %v568 = vadd.f32 %v540, %v564
    %v569 = vadd.f32 %v541, %v565
    %v570 = vadd.f32 %v542, %v566
    %571 = vset.pattern.permute.xlu0 2
    %572 = vperm.xlu0 %571, %v509
    %v573 = vpop.permute.xlu0 %572
    %575 = vset.pattern.permute.xlu0 2
    %576 = vperm.xlu0 %575, %v510
    %v577 = vpop.permute.xlu0 %576
    %579 = vset.pattern.permute.xlu0 2
    %580 = vperm.xlu0 %579, %v511
    %v581 = vpop.permute.xlu0 %580
    %583 = vset.pattern.permute.xlu0 2
    %584 = vperm.xlu0 %583, %v512
    %v585 = vpop.permute.xlu0 %584
    %v587 = vlaneseq
    %v588 = vshrl.u32 %v587, 7
    %v589 = vsub.s32 2, %v588
    %v590 = vrot.slane %v514, %v589
    %v591 = vmul.f32 %v573, %v590
    %v592 = vmul.f32 %v577, %v590
    %v593 = vmul.f32 %v581, %v590
    %v594 = vmul.f32 %v585, %v590
    %v595 = vadd.f32 %v567, %v591
    %v596 = vadd.f32 %v568, %v592
    %v597 = vadd.f32 %v569, %v593
    %v598 = vadd.f32 %v570, %v594
    %599 = vset.pattern.permute.xlu0 3
    %600 = vperm.xlu0 %599, %v509
    %v601 = vpop.permute.xlu0 %600
    %603 = vset.pattern.permute.xlu0 3
    %604 = vperm.xlu0 %603, %v510
    %v605 = vpop.permute.xlu0 %604
    %607 = vset.pattern.permute.xlu0 3
    %608 = vperm.xlu0 %607, %v511
    %v609 = vpop.permute.xlu0 %608
    %611 = vset.pattern.permute.xlu0 3
    %612 = vperm.xlu0 %611, %v512
    %v613 = vpop.permute.xlu0 %612
    %v615 = vlaneseq
    %v616 = vshrl.u32 %v615, 7
    %v617 = vsub.s32 3, %v616
    %v618 = vrot.slane %v514, %v617
    %v619 = vmul.f32 %v601, %v618
    %v620 = vmul.f32 %v605, %v618
    %v621 = vmul.f32 %v609, %v618
    %v622 = vmul.f32 %v613, %v618
    %v623 = vadd.f32 %v595, %v619
    %v624 = vadd.f32 %v596, %v620
    %v625 = vadd.f32 %v597, %v621
    %v626 = vadd.f32 %v598, %v622
    %v627 = vadd.f32 %v505, %v623
    %v628 = vadd.f32 %v506, %v624
    %v629 = vadd.f32 %v507, %v625
    %v630 = vadd.f32 %v508, %v626
    %v631 = vld [vmem:[#allocation2 + $0x3] sm:$0xff]
    %v632 = vld [vmem:[#allocation2 + $0xb] sm:$0xff]
    %v633 = vld [vmem:[#allocation2 + $0x23] sm:$0xff]
    %v634 = vld [vmem:[#allocation2 + $0x2b] sm:$0xff]
    %s635 = scalar_lea.vmem [#allocation4], 12
    %v636 = vld [vmem:[%s635] sm:$0xf]
    %638 = vset.pattern.permute.xlu0 0
    %639 = vperm.xlu0 %638, %v631
    %v640 = vpop.permute.xlu0 %639
    %643 = vset.pattern.permute.xlu0 0
    %644 = vperm.xlu0 %643, %v632
    %v645 = vpop.permute.xlu0 %644
    %648 = vset.pattern.permute.xlu0 0
    %649 = vperm.xlu0 %648, %v633
    %v650 = vpop.permute.xlu0 %649
    %653 = vset.pattern.permute.xlu0 0
    %654 = vperm.xlu0 %653, %v634
    %v655 = vpop.permute.xlu0 %654
    %v657 = vlaneseq
    %v658 = vshrl.u32 %v657, 7
    %v659 = vsub.s32 0, %v658
    %v660 = vrot.slane %v636, %v659
    %v661 = vmul.f32 %v640, %v660
    %v662 = vmul.f32 %v645, %v660
    %v663 = vmul.f32 %v650, %v660
    %v664 = vmul.f32 %v655, %v660
    %665 = vset.pattern.permute.xlu0 1
    %666 = vperm.xlu0 %665, %v631
    %v667 = vpop.permute.xlu0 %666
    %669 = vset.pattern.permute.xlu0 1
    %670 = vperm.xlu0 %669, %v632
    %v671 = vpop.permute.xlu0 %670
    %673 = vset.pattern.permute.xlu0 1
    %674 = vperm.xlu0 %673, %v633
    %v675 = vpop.permute.xlu0 %674
    %677 = vset.pattern.permute.xlu0 1
    %678 = vperm.xlu0 %677, %v634
    %v679 = vpop.permute.xlu0 %678
    %v681 = vlaneseq
    %v682 = vshrl.u32 %v681, 7
    %v683 = vsub.s32 1, %v682
    %v684 = vrot.slane %v636, %v683
    %v685 = vmul.f32 %v667, %v684
    %v686 = vmul.f32 %v671, %v684
    %v687 = vmul.f32 %v675, %v684
    %v688 = vmul.f32 %v679, %v684
    %v689 = vadd.f32 %v661, %v685
    %v690 = vadd.f32 %v662, %v686
    %v691 = vadd.f32 %v663, %v687
    %v692 = vadd.f32 %v664, %v688
    %693 = vset.pattern.permute.xlu0 2
    %694 = vperm.xlu0 %693, %v631
    %v695 = vpop.permute.xlu0 %694
    %697 = vset.pattern.permute.xlu0 2
    %698 = vperm.xlu0 %697, %v632
    %v699 = vpop.permute.xlu0 %698
    %701 = vset.pattern.permute.xlu0 2
    %702 = vperm.xlu0 %701, %v633
    %v703 = vpop.permute.xlu0 %702
    %705 = vset.pattern.permute.xlu0 2
    %706 = vperm.xlu0 %705, %v634
    %v707 = vpop.permute.xlu0 %706
    %v709 = vlaneseq
    %v710 = vshrl.u32 %v709, 7
    %v711 = vsub.s32 2, %v710
    %v712 = vrot.slane %v636, %v711
    %v713 = vmul.f32 %v695, %v712
    %v714 = vmul.f32 %v699, %v712
    %v715 = vmul.f32 %v703, %v712
    %v716 = vmul.f32 %v707, %v712
    %v717 = vadd.f32 %v689, %v713
    %v718 = vadd.f32 %v690, %v714
    %v719 = vadd.f32 %v691, %v715
    %v720 = vadd.f32 %v692, %v716
    %721 = vset.pattern.permute.xlu0 3
    %722 = vperm.xlu0 %721, %v631
    %v723 = vpop.permute.xlu0 %722
    %725 = vset.pattern.permute.xlu0 3
    %726 = vperm.xlu0 %725, %v632
    %v727 = vpop.permute.xlu0 %726
    %729 = vset.pattern.permute.xlu0 3
    %730 = vperm.xlu0 %729, %v633
    %v731 = vpop.permute.xlu0 %730
    %733 = vset.pattern.permute.xlu0 3
    %734 = vperm.xlu0 %733, %v634
    %v735 = vpop.permute.xlu0 %734
    %v737 = vlaneseq
    %v738 = vshrl.u32 %v737, 7
    %v739 = vsub.s32 3, %v738
    %v740 = vrot.slane %v636, %v739
    %v741 = vmul.f32 %v723, %v740
    %v742 = vmul.f32 %v727, %v740
    %v743 = vmul.f32 %v731, %v740
    %v744 = vmul.f32 %v735, %v740
    %v745 = vadd.f32 %v717, %v741
    %v746 = vadd.f32 %v718, %v742
    %v747 = vadd.f32 %v719, %v743
    %v748 = vadd.f32 %v720, %v744
    %v749 = vadd.f32 %v627, %v745
    %v750 = vadd.f32 %v628, %v746
    %v751 = vadd.f32 %v629, %v747
    %v752 = vadd.f32 %v630, %v748
    %v753 = vld [vmem:[#allocation2 + $0x4] sm:$0xff]
    %v754 = vld [vmem:[#allocation2 + $0xc] sm:$0xff]
    %v755 = vld [vmem:[#allocation2 + $0x24] sm:$0xff]
    %v756 = vld [vmem:[#allocation2 + $0x2c] sm:$0xff]
    %s757 = scalar_lea.vmem [#allocation4], 16
    %v758 = vld [vmem:[%s757] sm:$0xf]
    %760 = vset.pattern.permute.xlu0 0
    %761 = vperm.xlu0 %760, %v753
    %v762 = vpop.permute.xlu0 %761
    %765 = vset.pattern.permute.xlu0 0
    %766 = vperm.xlu0 %765, %v754
    %v767 = vpop.permute.xlu0 %766
    %770 = vset.pattern.permute.xlu0 0
    %771 = vperm.xlu0 %770, %v755
    %v772 = vpop.permute.xlu0 %771
    %775 = vset.pattern.permute.xlu0 0
    %776 = vperm.xlu0 %775, %v756
    %v777 = vpop.permute.xlu0 %776
    %v779 = vlaneseq
    %v780 = vshrl.u32 %v779, 7
    %v781 = vsub.s32 0, %v780
    %v782 = vrot.slane %v758, %v781
    %v783 = vmul.f32 %v762, %v782
    %v784 = vmul.f32 %v767, %v782
    %v785 = vmul.f32 %v772, %v782
    %v786 = vmul.f32 %v777, %v782
    %787 = vset.pattern.permute.xlu0 1
    %788 = vperm.xlu0 %787, %v753
    %v789 = vpop.permute.xlu0 %788
    %791 = vset.pattern.permute.xlu0 1
    %792 = vperm.xlu0 %791, %v754
    %v793 = vpop.permute.xlu0 %792
    %795 = vset.pattern.permute.xlu0 1
    %796 = vperm.xlu0 %795, %v755
    %v797 = vpop.permute.xlu0 %796
    %799 = vset.pattern.permute.xlu0 1
    %800 = vperm.xlu0 %799, %v756
    %v801 = vpop.permute.xlu0 %800
    %v803 = vlaneseq
    %v804 = vshrl.u32 %v803, 7
    %v805 = vsub.s32 1, %v804
    %v806 = vrot.slane %v758, %v805
    %v807 = vmul.f32 %v789, %v806
    %v808 = vmul.f32 %v793, %v806
    %v809 = vmul.f32 %v797, %v806
    %v810 = vmul.f32 %v801, %v806
    %v811 = vadd.f32 %v783, %v807
    %v812 = vadd.f32 %v784, %v808
    %v813 = vadd.f32 %v785, %v809
    %v814 = vadd.f32 %v786, %v810
    %815 = vset.pattern.permute.xlu0 2
    %816 = vperm.xlu0 %815, %v753
    %v817 = vpop.permute.xlu0 %816
    %819 = vset.pattern.permute.xlu0 2
    %820 = vperm.xlu0 %819, %v754
    %v821 = vpop.permute.xlu0 %820
    %823 = vset.pattern.permute.xlu0 2
    %824 = vperm.xlu0 %823, %v755
    %v825 = vpop.permute.xlu0 %824
    %827 = vset.pattern.permute.xlu0 2
    %828 = vperm.xlu0 %827, %v756
    %v829 = vpop.permute.xlu0 %828
    %v831 = vlaneseq
    %v832 = vshrl.u32 %v831, 7
    %v833 = vsub.s32 2, %v832
    %v834 = vrot.slane %v758, %v833
    %v835 = vmul.f32 %v817, %v834
    %v836 = vmul.f32 %v821, %v834
    %v837 = vmul.f32 %v825, %v834
    %v838 = vmul.f32 %v829, %v834
    %v839 = vadd.f32 %v811, %v835
    %v840 = vadd.f32 %v812, %v836
    %v841 = vadd.f32 %v813, %v837
    %v842 = vadd.f32 %v814, %v838
    %843 = vset.pattern.permute.xlu0 3
    %844 = vperm.xlu0 %843, %v753
    %v845 = vpop.permute.xlu0 %844
    %847 = vset.pattern.permute.xlu0 3
    %848 = vperm.xlu0 %847, %v754
    %v849 = vpop.permute.xlu0 %848
    %851 = vset.pattern.permute.xlu0 3
    %852 = vperm.xlu0 %851, %v755
    %v853 = vpop.permute.xlu0 %852
    %855 = vset.pattern.permute.xlu0 3
    %856 = vperm.xlu0 %855, %v756
    %v857 = vpop.permute.xlu0 %856
    %v859 = vlaneseq
    %v860 = vshrl.u32 %v859, 7
    %v861 = vsub.s32 3, %v860
    %v862 = vrot.slane %v758, %v861
    %v863 = vmul.f32 %v845, %v862
    %v864 = vmul.f32 %v849, %v862
    %v865 = vmul.f32 %v853, %v862
    %v866 = vmul.f32 %v857, %v862
    %v867 = vadd.f32 %v839, %v863
    %v868 = vadd.f32 %v840, %v864
    %v869 = vadd.f32 %v841, %v865
    %v870 = vadd.f32 %v842, %v866
    %v871 = vadd.f32 %v749, %v867
    %v872 = vadd.f32 %v750, %v868
    %v873 = vadd.f32 %v751, %v869
    %v874 = vadd.f32 %v752, %v870
    %v875 = vld [vmem:[#allocation2 + $0x5] sm:$0xff]
    %v876 = vld [vmem:[#allocation2 + $0xd] sm:$0xff]
    %v877 = vld [vmem:[#allocation2 + $0x25] sm:$0xff]
    %v878 = vld [vmem:[#allocation2 + $0x2d] sm:$0xff]
    %s879 = scalar_lea.vmem [#allocation4], 20
    %v880 = vld [vmem:[%s879] sm:$0xf]
    %882 = vset.pattern.permute.xlu0 0
    %883 = vperm.xlu0 %882, %v875
    %v884 = vpop.permute.xlu0 %883
    %887 = vset.pattern.permute.xlu0 0
    %888 = vperm.xlu0 %887, %v876
    %v889 = vpop.permute.xlu0 %888
    %892 = vset.pattern.permute.xlu0 0
    %893 = vperm.xlu0 %892, %v877
    %v894 = vpop.permute.xlu0 %893
    %897 = vset.pattern.permute.xlu0 0
    %898 = vperm.xlu0 %897, %v878
    %v899 = vpop.permute.xlu0 %898
    %v901 = vlaneseq
    %v902 = vshrl.u32 %v901, 7
    %v903 = vsub.s32 0, %v902
    %v904 = vrot.slane %v880, %v903
    %v905 = vmul.f32 %v884, %v904
    %v906 = vmul.f32 %v889, %v904
    %v907 = vmul.f32 %v894, %v904
    %v908 = vmul.f32 %v899, %v904
    %909 = vset.pattern.permute.xlu0 1
    %910 = vperm.xlu0 %909, %v875
    %v911 = vpop.permute.xlu0 %910
    %913 = vset.pattern.permute.xlu0 1
    %914 = vperm.xlu0 %913, %v876
    %v915 = vpop.permute.xlu0 %914
    %917 = vset.pattern.permute.xlu0 1
    %918 = vperm.xlu0 %917, %v877
    %v919 = vpop.permute.xlu0 %918
    %921 = vset.pattern.permute.xlu0 1
    %922 = vperm.xlu0 %921, %v878
    %v923 = vpop.permute.xlu0 %922
    %v925 = vlaneseq
    %v926 = vshrl.u32 %v925, 7
    %v927 = vsub.s32 1, %v926
    %v928 = vrot.slane %v880, %v927
    %v929 = vmul.f32 %v911, %v928
    %v930 = vmul.f32 %v915, %v928
    %v931 = vmul.f32 %v919, %v928
    %v932 = vmul.f32 %v923, %v928
    %v933 = vadd.f32 %v905, %v929
    %v934 = vadd.f32 %v906, %v930
    %v935 = vadd.f32 %v907, %v931
    %v936 = vadd.f32 %v908, %v932
    %937 = vset.pattern.permute.xlu0 2
    %938 = vperm.xlu0 %937, %v875
    %v939 = vpop.permute.xlu0 %938
    %941 = vset.pattern.permute.xlu0 2
    %942 = vperm.xlu0 %941, %v876
    %v943 = vpop.permute.xlu0 %942
    %945 = vset.pattern.permute.xlu0 2
    %946 = vperm.xlu0 %945, %v877
    %v947 = vpop.permute.xlu0 %946
    %949 = vset.pattern.permute.xlu0 2
    %950 = vperm.xlu0 %949, %v878
    %v951 = vpop.permute.xlu0 %950
    %v953 = vlaneseq
    %v954 = vshrl.u32 %v953, 7
    %v955 = vsub.s32 2, %v954
    %v956 = vrot.slane %v880, %v955
    %v957 = vmul.f32 %v939, %v956
    %v958 = vmul.f32 %v943, %v956
    %v959 = vmul.f32 %v947, %v956
    %v960 = vmul.f32 %v951, %v956
    %v961 = vadd.f32 %v933, %v957
    %v962 = vadd.f32 %v934, %v958
    %v963 = vadd.f32 %v935, %v959
    %v964 = vadd.f32 %v936, %v960
    %965 = vset.pattern.permute.xlu0 3
    %966 = vperm.xlu0 %965, %v875
    %v967 = vpop.permute.xlu0 %966
    %969 = vset.pattern.permute.xlu0 3
    %970 = vperm.xlu0 %969, %v876
    %v971 = vpop.permute.xlu0 %970
    %973 = vset.pattern.permute.xlu0 3
    %974 = vperm.xlu0 %973, %v877
    %v975 = vpop.permute.xlu0 %974
    %977 = vset.pattern.permute.xlu0 3
    %978 = vperm.xlu0 %977, %v878
    %v979 = vpop.permute.xlu0 %978
    %v981 = vlaneseq
    %v982 = vshrl.u32 %v981, 7
    %v983 = vsub.s32 3, %v982
    %v984 = vrot.slane %v880, %v983
    %v985 = vmul.f32 %v967, %v984
    %v986 = vmul.f32 %v971, %v984
    %v987 = vmul.f32 %v975, %v984
    %v988 = vmul.f32 %v979, %v984
    %v989 = vadd.f32 %v961, %v985
    %v990 = vadd.f32 %v962, %v986
    %v991 = vadd.f32 %v963, %v987
    %v992 = vadd.f32 %v964, %v988
    %v993 = vadd.f32 %v871, %v989
    %v994 = vadd.f32 %v872, %v990
    %v995 = vadd.f32 %v873, %v991
    %v996 = vadd.f32 %v874, %v992
    %v997 = vld [vmem:[#allocation2 + $0x6] sm:$0xff]
    %v998 = vld [vmem:[#allocation2 + $0xe] sm:$0xff]
    %v999 = vld [vmem:[#allocation2 + $0x26] sm:$0xff]
    %v1000 = vld [vmem:[#allocation2 + $0x2e] sm:$0xff]
    %s1001 = scalar_lea.vmem [#allocation4], 24
    %v1002 = vld [vmem:[%s1001] sm:$0xf]
    %1004 = vset.pattern.permute.xlu0 0
    %1005 = vperm.xlu0 %1004, %v997
    %v1006 = vpop.permute.xlu0 %1005
    %1009 = vset.pattern.permute.xlu0 0
    %1010 = vperm.xlu0 %1009, %v998
    %v1011 = vpop.permute.xlu0 %1010
    %1014 = vset.pattern.permute.xlu0 0
    %1015 = vperm.xlu0 %1014, %v999
    %v1016 = vpop.permute.xlu0 %1015
    %1019 = vset.pattern.permute.xlu0 0
    %1020 = vperm.xlu0 %1019, %v1000
    %v1021 = vpop.permute.xlu0 %1020
    %v1023 = vlaneseq
    %v1024 = vshrl.u32 %v1023, 7
    %v1025 = vsub.s32 0, %v1024
    %v1026 = vrot.slane %v1002, %v1025
    %v1027 = vmul.f32 %v1006, %v1026
    %v1028 = vmul.f32 %v1011, %v1026
    %v1029 = vmul.f32 %v1016, %v1026
    %v1030 = vmul.f32 %v1021, %v1026
    %1031 = vset.pattern.permute.xlu0 1
    %1032 = vperm.xlu0 %1031, %v997
    %v1033 = vpop.permute.xlu0 %1032
    %1035 = vset.pattern.permute.xlu0 1
    %1036 = vperm.xlu0 %1035, %v998
    %v1037 = vpop.permute.xlu0 %1036
    %1039 = vset.pattern.permute.xlu0 1
    %1040 = vperm.xlu0 %1039, %v999
    %v1041 = vpop.permute.xlu0 %1040
    %1043 = vset.pattern.permute.xlu0 1
    %1044 = vperm.xlu0 %1043, %v1000
    %v1045 = vpop.permute.xlu0 %1044
    %v1047 = vlaneseq
    %v1048 = vshrl.u32 %v1047, 7
    %v1049 = vsub.s32 1, %v1048
    %v1050 = vrot.slane %v1002, %v1049
    %v1051 = vmul.f32 %v1033, %v1050
    %v1052 = vmul.f32 %v1037, %v1050
    %v1053 = vmul.f32 %v1041, %v1050
    %v1054 = vmul.f32 %v1045, %v1050
    %v1055 = vadd.f32 %v1027, %v1051
    %v1056 = vadd.f32 %v1028, %v1052
    %v1057 = vadd.f32 %v1029, %v1053
    %v1058 = vadd.f32 %v1030, %v1054
    %1059 = vset.pattern.permute.xlu0 2
    %1060 = vperm.xlu0 %1059, %v997
    %v1061 = vpop.permute.xlu0 %1060
    %1063 = vset.pattern.permute.xlu0 2
    %1064 = vperm.xlu0 %1063, %v998
    %v1065 = vpop.permute.xlu0 %1064
    %1067 = vset.pattern.permute.xlu0 2
    %1068 = vperm.xlu0 %1067, %v999
    %v1069 = vpop.permute.xlu0 %1068
    %1071 = vset.pattern.permute.xlu0 2
    %1072 = vperm.xlu0 %1071, %v1000
    %v1073 = vpop.permute.xlu0 %1072
    %v1075 = vlaneseq
    %v1076 = vshrl.u32 %v1075, 7
    %v1077 = vsub.s32 2, %v1076
    %v1078 = vrot.slane %v1002, %v1077
    %v1079 = vmul.f32 %v1061, %v1078
    %v1080 = vmul.f32 %v1065, %v1078
    %v1081 = vmul.f32 %v1069, %v1078
    %v1082 = vmul.f32 %v1073, %v1078
    %v1083 = vadd.f32 %v1055, %v1079
    %v1084 = vadd.f32 %v1056, %v1080
    %v1085 = vadd.f32 %v1057, %v1081
    %v1086 = vadd.f32 %v1058, %v1082
    %1087 = vset.pattern.permute.xlu0 3
    %1088 = vperm.xlu0 %1087, %v997
    %v1089 = vpop.permute.xlu0 %1088
    %1091 = vset.pattern.permute.xlu0 3
    %1092 = vperm.xlu0 %1091, %v998
    %v1093 = vpop.permute.xlu0 %1092
    %1095 = vset.pattern.permute.xlu0 3
    %1096 = vperm.xlu0 %1095, %v999
    %v1097 = vpop.permute.xlu0 %1096
    %1099 = vset.pattern.permute.xlu0 3
    %1100 = vperm.xlu0 %1099, %v1000
    %v1101 = vpop.permute.xlu0 %1100
    %v1103 = vlaneseq
    %v1104 = vshrl.u32 %v1103, 7
    %v1105 = vsub.s32 3, %v1104
    %v1106 = vrot.slane %v1002, %v1105
    %v1107 = vmul.f32 %v1089, %v1106
    %v1108 = vmul.f32 %v1093, %v1106
    %v1109 = vmul.f32 %v1097, %v1106
    %v1110 = vmul.f32 %v1101, %v1106
    %v1111 = vadd.f32 %v1083, %v1107
    %v1112 = vadd.f32 %v1084, %v1108
    %v1113 = vadd.f32 %v1085, %v1109
    %v1114 = vadd.f32 %v1086, %v1110
    %v1115 = vadd.f32 %v993, %v1111
    %v1116 = vadd.f32 %v994, %v1112
    %v1117 = vadd.f32 %v995, %v1113
    %v1118 = vadd.f32 %v996, %v1114
    %v1119 = vld [vmem:[#allocation6] sm:$0x1]
    %v1121 = vlaneseq
    %v1122 = vshrl.u32 %v1121, 7
    %v1123 = vsub.s32 0, %v1122
    %v1124 = vrot.slane %v1119, %v1123
    %v1126 = vadd.f32 %v1115, %v1124
    %v1127 = vadd.f32 %v1116, %v1124
    %v1128 = vadd.f32 %v1117, %v1124
    %v1129 = vadd.f32 %v1118, %v1124
    %vm1130 = vcmp.ge.f32.partialorder %v1126, 0.0
    %vm1131 = vcmp.ge.f32.partialorder %v1127, 0.0
    %vm1132 = vcmp.ge.f32.partialorder %v1128, 0.0
    %vm1133 = vcmp.ge.f32.partialorder %v1129, 0.0
    %v1134 = vmul.f32 %v1126, 0.01
    %v1135 = vmul.f32 %v1127, 0.01
    %v1136 = vmul.f32 %v1128, 0.01
    %v1137 = vmul.f32 %v1129, 0.01
    %v1138 = vsel %vm1130, %v1126, %v1134
    %v1139 = vsel %vm1131, %v1127, %v1135
    %v1140 = vsel %vm1132, %v1128, %v1136
    %v1141 = vsel %vm1133, %v1129, %v1137
    %1142 = vst.msk [vmem:[#allocation3] sm:$0xff] %vm175, %v1138
    %1143 = vst.msk [vmem:[#allocation3 + $0x8] sm:$0xff] %vm175, %v1139
    %1144 = vst.msk [vmem:[#allocation3 + $0x10] sm:$0xff] %vm175, %v1140
    %1145 = vst.msk [vmem:[#allocation3 + $0x18] sm:$0xff] %vm175, %v1141
    %v1146 = vld [vmem:[#allocation3] ss:$2 sm:$0xff]
    %s1147 = scalar_lea.vmem [#allocation3], 16
    %v1148 = vld [vmem:[%s1147] ss:$2 sm:$0xff]
    %s1149 = scalar_lea.vmem [#allocation3], 1
    %v1150 = vld [vmem:[%s1149] ss:$2 sm:$0xff]
    %s1151 = scalar_lea.vmem [#allocation3], 17
    %v1152 = vld [vmem:[%s1151] ss:$2 sm:$0xff]
    %v1153 = vmax.f32 %v1146, %v1150
    %v1154 = vmax.f32 %v1148, %v1152
    %v1155 = vsel %vm175, %v1138, 0.0
    %v1156 = vsel %vm175, %v1139, 0.0
    %v1157 = vadd.f32 %v1155, %v1156
    %v1158 = vrot.slane %v1157, 4
    %v1159 = vadd.f32 %v1157, %v1158
    %v1160 = vrot.slane %v1159, 2
    %v1161 = vadd.f32 %v1159, %v1160
    %v1162 = vrot.slane %v1161, 1
    %v1163 = vadd.f32 %v1161, %v1162
    %v1164 = vsel %vm175, %v1140, 0.0
    %v1165 = vsel %vm175, %v1141, 0.0
    %v1166 = vadd.f32 %v1164, %v1165
    %v1167 = vrot.slane %v1166, 4
    %v1168 = vadd.f32 %v1166, %v1167
    %v1169 = vrot.slane %v1168, 2
    %v1170 = vadd.f32 %v1168, %v1169
    %v1171 = vrot.slane %v1170, 1
    %v1172 = vadd.f32 %v1170, %v1171
    %v1173 = vsel %vm175, %v1163, 0.0
    %v1174 = vsel %vm175, %v1172, 0.0
    %v1175 = vadd.f32 %v1173, %v1174
    %v1176 = vmul.f32 %v1175, %v197
    %v1177 = vsub.f32 %v1138, %v1176
    %v1178 = vsub.f32 %v1139, %v1176
    %v1179 = vsub.f32 %v1140, %v1176
    %v1180 = vsub.f32 %v1141, %v1176
    %v1181 = vmul.f32 %v1177, %v1177
    %v1182 = vmul.f32 %v1178, %v1178
    %v1183 = vmul.f32 %v1179, %v1179
    %v1184 = vmul.f32 %v1180, %v1180
    %v1185 = vsel %vm175, %v1181, 0.0
    %v1186 = vsel %vm175, %v1182, 0.0
    %v1187 = vadd.f32 %v1185, %v1186
    %v1188 = vrot.slane %v1187, 4
    %v1189 = vadd.f32 %v1187, %v1188
    %v1190 = vrot.slane %v1189, 2
    %v1191 = vadd.f32 %v1189, %v1190
    %v1192 = vrot.slane %v1191, 1
    %v1193 = vadd.f32 %v1191, %v1192
    %v1194 = vsel %vm175, %v1183, 0.0
    %v1195 = vsel %vm175, %v1184, 0.0
    %v1196 = vadd.f32 %v1194, %v1195
    %v1197 = vrot.slane %v1196, 4
    %v1198 = vadd.f32 %v1196, %v1197
    %v1199 = vrot.slane %v1198, 2
    %v1200 = vadd.f32 %v1198, %v1199
    %v1201 = vrot.slane %v1200, 1
    %v1202 = vadd.f32 %v1200, %v1201
    %v1203 = vsel %vm175, %v1193, 0.0
    %v1204 = vsel %vm175, %v1202, 0.0
    %v1205 = vadd.f32 %v1203, %v1204
    %v1206 = vmul.f32 %v1205, %v197
    %v1207 = vadd.f32 %v1206, 1e-05
    %v1208 = vrsqrt.pop %v1207
    %v1209 = vmul.f32 %v1177, %v1208
    %v1210 = vmul.f32 %v1178, %v1208
    %v1211 = vmul.f32 %v1179, %v1208
    %v1212 = vmul.f32 %v1180, %v1208
    %v1213 = vld [vmem:[%s5] sm:$0x1]
    %v1215 = vlaneseq
    %v1216 = vshrl.u32 %v1215, 7
    %v1217 = vsub.s32 0, %v1216
    %v1218 = vrot.slane %v1213, %v1217
    %v1220 = vmul.f32 %v1209, %v1218
    %v1221 = vmul.f32 %v1210, %v1218
    %v1222 = vmul.f32 %v1211, %v1218
    %v1223 = vmul.f32 %v1212, %v1218
    %v1224 = vld [vmem:[%s6] sm:$0x1]
    %v1226 = vlaneseq
    %v1227 = vshrl.u32 %v1226, 7
    %v1228 = vsub.s32 0, %v1227
    %v1229 = vrot.slane %v1224, %v1228
    %v1231 = vadd.f32 %v1220, %v1229
    %v1232 = vadd.f32 %v1221, %v1229
    %v1233 = vadd.f32 %v1222, %v1229
    %v1234 = vadd.f32 %v1223, %v1229
    %1235 = vst.msk [vmem:[#allocation2] sm:$0xff] %vm175, 0.0
    %1236 = vst.msk [vmem:[#allocation2 + $0x8] sm:$0xff] %vm175, 0.0
    %1237 = vst.msk [vmem:[#allocation2 + $0x10] sm:$0xff] %vm175, 0.0
    %1238 = vst.msk [vmem:[#allocation2 + $0x18] sm:$0x3f] %vm260, 0.0
    %1239 = vst.msk [vmem:[#allocation2 + $0x20] sm:$0xff] %vm175, 0.0
    %1240 = vst.msk [vmem:[#allocation2 + $0x28] sm:$0xff] %vm175, 0.0
    %1241 = vst.msk [vmem:[#allocation2 + $0x30] sm:$0xff] %vm175, 0.0
    %1242 = vst.msk [vmem:[#allocation2 + $0x38] sm:$0x3f] %vm260, 0.0
    %1243 = vst.msk [vmem:[#allocation2 + $0x7] sm:$0xff] %vm175, %v1231
    %1244 = vst.msk [vmem:[#allocation2 + $0xf] sm:$0xff] %vm175, %v1232
    %1245 = vst.msk [vmem:[#allocation2 + $0x27] sm:$0xff] %vm175, %v1233
    %1246 = vst.msk [vmem:[#allocation2 + $0x2f] sm:$0xff] %vm175, %v1234
    %v1247 = vld [vmem:[#allocation2] sm:$0xff]
    %v1248 = vld [vmem:[#allocation2 + $0x8] sm:$0xff]
    %v1249 = vld [vmem:[#allocation2 + $0x20] sm:$0xff]
    %v1250 = vld [vmem:[#allocation2 + $0x28] sm:$0xff]
    %v1251 = vld [vmem:[%s7] sm:$0xf]
    %1253 = vset.pattern.permute.xlu0 0
    %1254 = vperm.xlu0 %1253, %v1247
    %v1255 = vpop.permute.xlu0 %1254
    %1258 = vset.pattern.permute.xlu0 0
    %1259 = vperm.xlu0 %1258, %v1248
    %v1260 = vpop.permute.xlu0 %1259
    %1263 = vset.pattern.permute.xlu0 0
    %1264 = vperm.xlu0 %1263, %v1249
    %v1265 = vpop.permute.xlu0 %1264
    %1268 = vset.pattern.permute.xlu0 0
    %1269 = vperm.xlu0 %1268, %v1250
    %v1270 = vpop.permute.xlu0 %1269
    %v1272 = vlaneseq
    %v1273 = vshrl.u32 %v1272, 7
    %v1274 = vsub.s32 0, %v1273
    %v1275 = vrot.slane %v1251, %v1274
    %v1276 = vmul.f32 %v1255, %v1275
    %v1277 = vmul.f32 %v1260, %v1275
    %v1278 = vmul.f32 %v1265, %v1275
    %v1279 = vmul.f32 %v1270, %v1275
    %1280 = vset.pattern.permute.xlu0 1
    %1281 = vperm.xlu0 %1280, %v1247
    %v1282 = vpop.permute.xlu0 %1281
    %1284 = vset.pattern.permute.xlu0 1
    %1285 = vperm.xlu0 %1284, %v1248
    %v1286 = vpop.permute.xlu0 %1285
    %1288 = vset.pattern.permute.xlu0 1
    %1289 = vperm.xlu0 %1288, %v1249
    %v1290 = vpop.permute.xlu0 %1289
    %1292 = vset.pattern.permute.xlu0 1
    %1293 = vperm.xlu0 %1292, %v1250
    %v1294 = vpop.permute.xlu0 %1293
    %v1296 = vlaneseq
    %v1297 = vshrl.u32 %v1296, 7
    %v1298 = vsub.s32 1, %v1297
    %v1299 = vrot.slane %v1251, %v1298
    %v1300 = vmul.f32 %v1282, %v1299
    %v1301 = vmul.f32 %v1286, %v1299
    %v1302 = vmul.f32 %v1290, %v1299
    %v1303 = vmul.f32 %v1294, %v1299
    %v1304 = vadd.f32 %v1276, %v1300
    %v1305 = vadd.f32 %v1277, %v1301
    %v1306 = vadd.f32 %v1278, %v1302
    %v1307 = vadd.f32 %v1279, %v1303
    %1308 = vset.pattern.permute.xlu0 2
    %1309 = vperm.xlu0 %1308, %v1247
    %v1310 = vpop.permute.xlu0 %1309
    %1312 = vset.pattern.permute.xlu0 2
    %1313 = vperm.xlu0 %1312, %v1248
    %v1314 = vpop.permute.xlu0 %1313
    %1316 = vset.pattern.permute.xlu0 2
    %1317 = vperm.xlu0 %1316, %v1249
    %v1318 = vpop.permute.xlu0 %1317
    %1320 = vset.pattern.permute.xlu0 2
    %1321 = vperm.xlu0 %1320, %v1250
    %v1322 = vpop.permute.xlu0 %1321
    %v1324 = vlaneseq
    %v1325 = vshrl.u32 %v1324, 7
    %v1326 = vsub.s32 2, %v1325
    %v1327 = vrot.slane %v1251, %v1326
    %v1328 = vmul.f32 %v1310, %v1327
    %v1329 = vmul.f32 %v1314, %v1327
    %v1330 = vmul.f32 %v1318, %v1327
    %v1331 = vmul.f32 %v1322, %v1327
    %v1332 = vadd.f32 %v1304, %v1328
    %v1333 = vadd.f32 %v1305, %v1329
    %v1334 = vadd.f32 %v1306, %v1330
    %v1335 = vadd.f32 %v1307, %v1331
    %1336 = vset.pattern.permute.xlu0 3
    %1337 = vperm.xlu0 %1336, %v1247
    %v1338 = vpop.permute.xlu0 %1337
    %1340 = vset.pattern.permute.xlu0 3
    %1341 = vperm.xlu0 %1340, %v1248
    %v1342 = vpop.permute.xlu0 %1341
    %1344 = vset.pattern.permute.xlu0 3
    %1345 = vperm.xlu0 %1344, %v1249
    %v1346 = vpop.permute.xlu0 %1345
    %1348 = vset.pattern.permute.xlu0 3
    %1349 = vperm.xlu0 %1348, %v1250
    %v1350 = vpop.permute.xlu0 %1349
    %v1352 = vlaneseq
    %v1353 = vshrl.u32 %v1352, 7
    %v1354 = vsub.s32 3, %v1353
    %v1355 = vrot.slane %v1251, %v1354
    %v1356 = vmul.f32 %v1338, %v1355
    %v1357 = vmul.f32 %v1342, %v1355
    %v1358 = vmul.f32 %v1346, %v1355
    %v1359 = vmul.f32 %v1350, %v1355
    %v1360 = vadd.f32 %v1332, %v1356
    %v1361 = vadd.f32 %v1333, %v1357
    %v1362 = vadd.f32 %v1334, %v1358
    %v1363 = vadd.f32 %v1335, %v1359
    %v1364 = vld [vmem:[#allocation2 + $0x1] sm:$0xff]
    %v1365 = vld [vmem:[#allocation2 + $0x9] sm:$0xff]
    %v1366 = vld [vmem:[#allocation2 + $0x21] sm:$0xff]
    %v1367 = vld [vmem:[#allocation2 + $0x29] sm:$0xff]
    %s1368 = scalar_lea.vmem %s7, 4
    %v1369 = vld [vmem:[%s1368] sm:$0xf]
    %1371 = vset.pattern.permute.xlu0 0
    %1372 = vperm.xlu0 %1371, %v1364
    %v1373 = vpop.permute.xlu0 %1372
    %1376 = vset.pattern.permute.xlu0 0
    %1377 = vperm.xlu0 %1376, %v1365
    %v1378 = vpop.permute.xlu0 %1377
    %1381 = vset.pattern.permute.xlu0 0
    %1382 = vperm.xlu0 %1381, %v1366
    %v1383 = vpop.permute.xlu0 %1382
    %1386 = vset.pattern.permute.xlu0 0
    %1387 = vperm.xlu0 %1386, %v1367
    %v1388 = vpop.permute.xlu0 %1387
    %v1390 = vlaneseq
    %v1391 = vshrl.u32 %v1390, 7
    %v1392 = vsub.s32 0, %v1391
    %v1393 = vrot.slane %v1369, %v1392
    %v1394 = vmul.f32 %v1373, %v1393
    %v1395 = vmul.f32 %v1378, %v1393
    %v1396 = vmul.f32 %v1383, %v1393
    %v1397 = vmul.f32 %v1388, %v1393
    %1398 = vset.pattern.permute.xlu0 1
    %1399 = vperm.xlu0 %1398, %v1364
    %v1400 = vpop.permute.xlu0 %1399
    %1402 = vset.pattern.permute.xlu0 1
    %1403 = vperm.xlu0 %1402, %v1365
    %v1404 = vpop.permute.xlu0 %1403
    %1406 = vset.pattern.permute.xlu0 1
    %1407 = vperm.xlu0 %1406, %v1366
    %v1408 = vpop.permute.xlu0 %1407
    %1410 = vset.pattern.permute.xlu0 1
    %1411 = vperm.xlu0 %1410, %v1367
    %v1412 = vpop.permute.xlu0 %1411
    %v1414 = vlaneseq
    %v1415 = vshrl.u32 %v1414, 7
    %v1416 = vsub.s32 1, %v1415
    %v1417 = vrot.slane %v1369, %v1416
    %v1418 = vmul.f32 %v1400, %v1417
    %v1419 = vmul.f32 %v1404, %v1417
    %v1420 = vmul.f32 %v1408, %v1417
    %v1421 = vmul.f32 %v1412, %v1417
    %v1422 = vadd.f32 %v1394, %v1418
    %v1423 = vadd.f32 %v1395, %v1419
    %v1424 = vadd.f32 %v1396, %v1420
    %v1425 = vadd.f32 %v1397, %v1421
    %1426 = vset.pattern.permute.xlu0 2
    %1427 = vperm.xlu0 %1426, %v1364
    %v1428 = vpop.permute.xlu0 %1427
    %1430 = vset.pattern.permute.xlu0 2
    %1431 = vperm.xlu0 %1430, %v1365
    %v1432 = vpop.permute.xlu0 %1431
    %1434 = vset.pattern.permute.xlu0 2
    %1435 = vperm.xlu0 %1434, %v1366
    %v1436 = vpop.permute.xlu0 %1435
    %1438 = vset.pattern.permute.xlu0 2
    %1439 = vperm.xlu0 %1438, %v1367
    %v1440 = vpop.permute.xlu0 %1439
    %v1442 = vlaneseq
    %v1443 = vshrl.u32 %v1442, 7
    %v1444 = vsub.s32 2, %v1443
    %v1445 = vrot.slane %v1369, %v1444
    %v1446 = vmul.f32 %v1428, %v1445
    %v1447 = vmul.f32 %v1432, %v1445
    %v1448 = vmul.f32 %v1436, %v1445
    %v1449 = vmul.f32 %v1440, %v1445
    %v1450 = vadd.f32 %v1422, %v1446
    %v1451 = vadd.f32 %v1423, %v1447
    %v1452 = vadd.f32 %v1424, %v1448
    %v1453 = vadd.f32 %v1425, %v1449
    %1454 = vset.pattern.permute.xlu0 3
    %1455 = vperm.xlu0 %1454, %v1364
    %v1456 = vpop.permute.xlu0 %1455
    %1458 = vset.pattern.permute.xlu0 3
    %1459 = vperm.xlu0 %1458, %v1365
    %v1460 = vpop.permute.xlu0 %1459
    %1462 = vset.pattern.permute.xlu0 3
    %1463 = vperm.xlu0 %1462, %v1366
    %v1464 = vpop.permute.xlu0 %1463
    %1466 = vset.pattern.permute.xlu0 3
    %1467 = vperm.xlu0 %1466, %v1367
    %v1468 = vpop.permute.xlu0 %1467
    %v1470 = vlaneseq
    %v1471 = vshrl.u32 %v1470, 7
    %v1472 = vsub.s32 3, %v1471
    %v1473 = vrot.slane %v1369, %v1472
    %v1474 = vmul.f32 %v1456, %v1473
    %v1475 = vmul.f32 %v1460, %v1473
    %v1476 = vmul.f32 %v1464, %v1473
    %v1477 = vmul.f32 %v1468, %v1473
    %v1478 = vadd.f32 %v1450, %v1474
    %v1479 = vadd.f32 %v1451, %v1475
    %v1480 = vadd.f32 %v1452, %v1476
    %v1481 = vadd.f32 %v1453, %v1477
    %v1482 = vadd.f32 %v1360, %v1478
    %v1483 = vadd.f32 %v1361, %v1479
    %v1484 = vadd.f32 %v1362, %v1480
    %v1485 = vadd.f32 %v1363, %v1481
    %v1486 = vld [vmem:[#allocation2 + $0x2] sm:$0xff]
    %v1487 = vld [vmem:[#allocation2 + $0xa] sm:$0xff]
    %v1488 = vld [vmem:[#allocation2 + $0x22] sm:$0xff]
    %v1489 = vld [vmem:[#allocation2 + $0x2a] sm:$0xff]
    %s1490 = scalar_lea.vmem %s7, 8
    %v1491 = vld [vmem:[%s1490] sm:$0xf]
    %1493 = vset.pattern.permute.xlu0 0
    %1494 = vperm.xlu0 %1493, %v1486
    %v1495 = vpop.permute.xlu0 %1494
    %1498 = vset.pattern.permute.xlu0 0
    %1499 = vperm.xlu0 %1498, %v1487
    %v1500 = vpop.permute.xlu0 %1499
    %1503 = vset.pattern.permute.xlu0 0
    %1504 = vperm.xlu0 %1503, %v1488
    %v1505 = vpop.permute.xlu0 %1504
    %1508 = vset.pattern.permute.xlu0 0
    %1509 = vperm.xlu0 %1508, %v1489
    %v1510 = vpop.permute.xlu0 %1509
    %v1512 = vlaneseq
    %v1513 = vshrl.u32 %v1512, 7
    %v1514 = vsub.s32 0, %v1513
    %v1515 = vrot.slane %v1491, %v1514
    %v1516 = vmul.f32 %v1495, %v1515
    %v1517 = vmul.f32 %v1500, %v1515
    %v1518 = vmul.f32 %v1505, %v1515
    %v1519 = vmul.f32 %v1510, %v1515
    %1520 = vset.pattern.permute.xlu0 1
    %1521 = vperm.xlu0 %1520, %v1486
    %v1522 = vpop.permute.xlu0 %1521
    %1524 = vset.pattern.permute.xlu0 1
    %1525 = vperm.xlu0 %1524, %v1487
    %v1526 = vpop.permute.xlu0 %1525
    %1528 = vset.pattern.permute.xlu0 1
    %1529 = vperm.xlu0 %1528, %v1488
    %v1530 = vpop.permute.xlu0 %1529
    %1532 = vset.pattern.permute.xlu0 1
    %1533 = vperm.xlu0 %1532, %v1489
    %v1534 = vpop.permute.xlu0 %1533
    %v1536 = vlaneseq
    %v1537 = vshrl.u32 %v1536, 7
    %v1538 = vsub.s32 1, %v1537
    %v1539 = vrot.slane %v1491, %v1538
    %v1540 = vmul.f32 %v1522, %v1539
    %v1541 = vmul.f32 %v1526, %v1539
    %v1542 = vmul.f32 %v1530, %v1539
    %v1543 = vmul.f32 %v1534, %v1539
    %v1544 = vadd.f32 %v1516, %v1540
    %v1545 = vadd.f32 %v1517, %v1541
    %v1546 = vadd.f32 %v1518, %v1542
    %v1547 = vadd.f32 %v1519, %v1543
    %1548 = vset.pattern.permute.xlu0 2
    %1549 = vperm.xlu0 %1548, %v1486
    %v1550 = vpop.permute.xlu0 %1549
    %1552 = vset.pattern.permute.xlu0 2
    %1553 = vperm.xlu0 %1552, %v1487
    %v1554 = vpop.permute.xlu0 %1553
    %1556 = vset.pattern.permute.xlu0 2
    %1557 = vperm.xlu0 %1556, %v1488
    %v1558 = vpop.permute.xlu0 %1557
    %1560 = vset.pattern.permute.xlu0 2
    %1561 = vperm.xlu0 %1560, %v1489
    %v1562 = vpop.permute.xlu0 %1561
    %v1564 = vlaneseq
    %v1565 = vshrl.u32 %v1564, 7
    %v1566 = vsub.s32 2, %v1565
    %v1567 = vrot.slane %v1491, %v1566
    %v1568 = vmul.f32 %v1550, %v1567
    %v1569 = vmul.f32 %v1554, %v1567
    %v1570 = vmul.f32 %v1558, %v1567
    %v1571 = vmul.f32 %v1562, %v1567
    %v1572 = vadd.f32 %v1544, %v1568
    %v1573 = vadd.f32 %v1545, %v1569
    %v1574 = vadd.f32 %v1546, %v1570
    %v1575 = vadd.f32 %v1547, %v1571
    %1576 = vset.pattern.permute.xlu0 3
    %1577 = vperm.xlu0 %1576, %v1486
    %v1578 = vpop.permute.xlu0 %1577
    %1580 = vset.pattern.permute.xlu0 3
    %1581 = vperm.xlu0 %1580, %v1487
    %v1582 = vpop.permute.xlu0 %1581
    %1584 = vset.pattern.permute.xlu0 3
    %1585 = vperm.xlu0 %1584, %v1488
    %v1586 = vpop.permute.xlu0 %1585
    %1588 = vset.pattern.permute.xlu0 3
    %1589 = vperm.xlu0 %1588, %v1489
    %v1590 = vpop.permute.xlu0 %1589
    %v1592 = vlaneseq
    %v1593 = vshrl.u32 %v1592, 7
    %v1594 = vsub.s32 3, %v1593
    %v1595 = vrot.slane %v1491, %v1594
    %v1596 = vmul.f32 %v1578, %v1595
    %v1597 = vmul.f32 %v1582, %v1595
    %v1598 = vmul.f32 %v1586, %v1595
    %v1599 = vmul.f32 %v1590, %v1595
    %v1600 = vadd.f32 %v1572, %v1596
    %v1601 = vadd.f32 %v1573, %v1597
    %v1602 = vadd.f32 %v1574, %v1598
    %v1603 = vadd.f32 %v1575, %v1599
    %v1604 = vadd.f32 %v1482, %v1600
    %v1605 = vadd.f32 %v1483, %v1601
    %v1606 = vadd.f32 %v1484, %v1602
    %v1607 = vadd.f32 %v1485, %v1603
    %v1608 = vld [vmem:[#allocation2 + $0x3] sm:$0xff]
    %v1609 = vld [vmem:[#allocation2 + $0xb] sm:$0xff]
    %v1610 = vld [vmem:[#allocation2 + $0x23] sm:$0xff]
    %v1611 = vld [vmem:[#allocation2 + $0x2b] sm:$0xff]
    %s1612 = scalar_lea.vmem %s7, 12
    %v1613 = vld [vmem:[%s1612] sm:$0xf]
    %1615 = vset.pattern.permute.xlu0 0
    %1616 = vperm.xlu0 %1615, %v1608
    %v1617 = vpop.permute.xlu0 %1616
    %1620 = vset.pattern.permute.xlu0 0
    %1621 = vperm.xlu0 %1620, %v1609
    %v1622 = vpop.permute.xlu0 %1621
    %1625 = vset.pattern.permute.xlu0 0
    %1626 = vperm.xlu0 %1625, %v1610
    %v1627 = vpop.permute.xlu0 %1626
    %1630 = vset.pattern.permute.xlu0 0
    %1631 = vperm.xlu0 %1630, %v1611
    %v1632 = vpop.permute.xlu0 %1631
    %v1634 = vlaneseq
    %v1635 = vshrl.u32 %v1634, 7
    %v1636 = vsub.s32 0, %v1635
    %v1637 = vrot.slane %v1613, %v1636
    %v1638 = vmul.f32 %v1617, %v1637
    %v1639 = vmul.f32 %v1622, %v1637
    %v1640 = vmul.f32 %v1627, %v1637
    %v1641 = vmul.f32 %v1632, %v1637
    %1642 = vset.pattern.permute.xlu0 1
    %1643 = vperm.xlu0 %1642, %v1608
    %v1644 = vpop.permute.xlu0 %1643
    %1646 = vset.pattern.permute.xlu0 1
    %1647 = vperm.xlu0 %1646, %v1609
    %v1648 = vpop.permute.xlu0 %1647
    %1650 = vset.pattern.permute.xlu0 1
    %1651 = vperm.xlu0 %1650, %v1610
    %v1652 = vpop.permute.xlu0 %1651
    %1654 = vset.pattern.permute.xlu0 1
    %1655 = vperm.xlu0 %1654, %v1611
    %v1656 = vpop.permute.xlu0 %1655
    %v1658 = vlaneseq
    %v1659 = vshrl.u32 %v1658, 7
    %v1660 = vsub.s32 1, %v1659
    %v1661 = vrot.slane %v1613, %v1660
    %v1662 = vmul.f32 %v1644, %v1661
    %v1663 = vmul.f32 %v1648, %v1661
    %v1664 = vmul.f32 %v1652, %v1661
    %v1665 = vmul.f32 %v1656, %v1661
    %v1666 = vadd.f32 %v1638, %v1662
    %v1667 = vadd.f32 %v1639, %v1663
    %v1668 = vadd.f32 %v1640, %v1664
    %v1669 = vadd.f32 %v1641, %v1665
    %1670 = vset.pattern.permute.xlu0 2
    %1671 = vperm.xlu0 %1670, %v1608
    %v1672 = vpop.permute.xlu0 %1671
    %1674 = vset.pattern.permute.xlu0 2
    %1675 = vperm.xlu0 %1674, %v1609
    %v1676 = vpop.permute.xlu0 %1675
    %1678 = vset.pattern.permute.xlu0 2
    %1679 = vperm.xlu0 %1678, %v1610
    %v1680 = vpop.permute.xlu0 %1679
    %1682 = vset.pattern.permute.xlu0 2
    %1683 = vperm.xlu0 %1682, %v1611
    %v1684 = vpop.permute.xlu0 %1683
    %v1686 = vlaneseq
    %v1687 = vshrl.u32 %v1686, 7
    %v1688 = vsub.s32 2, %v1687
    %v1689 = vrot.slane %v1613, %v1688
    %v1690 = vmul.f32 %v1672, %v1689
    %v1691 = vmul.f32 %v1676, %v1689
    %v1692 = vmul.f32 %v1680, %v1689
    %v1693 = vmul.f32 %v1684, %v1689
    %v1694 = vadd.f32 %v1666, %v1690
    %v1695 = vadd.f32 %v1667, %v1691
    %v1696 = vadd.f32 %v1668, %v1692
    %v1697 = vadd.f32 %v1669, %v1693
    %1698 = vset.pattern.permute.xlu0 3
    %1699 = vperm.xlu0 %1698, %v1608
    %v1700 = vpop.permute.xlu0 %1699
    %1702 = vset.pattern.permute.xlu0 3
    %1703 = vperm.xlu0 %1702, %v1609
    %v1704 = vpop.permute.xlu0 %1703
    %1706 = vset.pattern.permute.xlu0 3
    %1707 = vperm.xlu0 %1706, %v1610
    %v1708 = vpop.permute.xlu0 %1707
    %1710 = vset.pattern.permute.xlu0 3
    %1711 = vperm.xlu0 %1710, %v1611
    %v1712 = vpop.permute.xlu0 %1711
    %v1714 = vlaneseq
    %v1715 = vshrl.u32 %v1714, 7
    %v1716 = vsub.s32 3, %v1715
    %v1717 = vrot.slane %v1613, %v1716
    %v1718 = vmul.f32 %v1700, %v1717
    %v1719 = vmul.f32 %v1704, %v1717
    %v1720 = vmul.f32 %v1708, %v1717
    %v1721 = vmul.f32 %v1712, %v1717
    %v1722 = vadd.f32 %v1694, %v1718
    %v1723 = vadd.f32 %v1695, %v1719
    %v1724 = vadd.f32 %v1696, %v1720
    %v1725 = vadd.f32 %v1697, %v1721
    %v1726 = vadd.f32 %v1604, %v1722
    %v1727 = vadd.f32 %v1605, %v1723
    %v1728 = vadd.f32 %v1606, %v1724
    %v1729 = vadd.f32 %v1607, %v1725
    %v1730 = vld [vmem:[#allocation2 + $0x4] sm:$0xff]
    %v1731 = vld [vmem:[#allocation2 + $0xc] sm:$0xff]
    %v1732 = vld [vmem:[#allocation2 + $0x24] sm:$0xff]
    %v1733 = vld [vmem:[#allocation2 + $0x2c] sm:$0xff]
    %s1734 = scalar_lea.vmem %s7, 16
    %v1735 = vld [vmem:[%s1734] sm:$0xf]
    %1737 = vset.pattern.permute.xlu0 0
    %1738 = vperm.xlu0 %1737, %v1730
    %v1739 = vpop.permute.xlu0 %1738
    %1742 = vset.pattern.permute.xlu0 0
    %1743 = vperm.xlu0 %1742, %v1731
    %v1744 = vpop.permute.xlu0 %1743
    %1747 = vset.pattern.permute.xlu0 0
    %1748 = vperm.xlu0 %1747, %v1732
    %v1749 = vpop.permute.xlu0 %1748
    %1752 = vset.pattern.permute.xlu0 0
    %1753 = vperm.xlu0 %1752, %v1733
    %v1754 = vpop.permute.xlu0 %1753
    %v1756 = vlaneseq
    %v1757 = vshrl.u32 %v1756, 7
    %v1758 = vsub.s32 0, %v1757
    %v1759 = vrot.slane %v1735, %v1758
    %v1760 = vmul.f32 %v1739, %v1759
    %v1761 = vmul.f32 %v1744, %v1759
    %v1762 = vmul.f32 %v1749, %v1759
    %v1763 = vmul.f32 %v1754, %v1759
    %1764 = vset.pattern.permute.xlu0 1
    %1765 = vperm.xlu0 %1764, %v1730
    %v1766 = vpop.permute.xlu0 %1765
    %1768 = vset.pattern.permute.xlu0 1
    %1769 = vperm.xlu0 %1768, %v1731
    %v1770 = vpop.permute.xlu0 %1769
    %1772 = vset.pattern.permute.xlu0 1
    %1773 = vperm.xlu0 %1772, %v1732
    %v1774 = vpop.permute.xlu0 %1773
    %1776 = vset.pattern.permute.xlu0 1
    %1777 = vperm.xlu0 %1776, %v1733
    %v1778 = vpop.permute.xlu0 %1777
    %v1780 = vlaneseq
    %v1781 = vshrl.u32 %v1780, 7
    %v1782 = vsub.s32 1, %v1781
    %v1783 = vrot.slane %v1735, %v1782
    %v1784 = vmul.f32 %v1766, %v1783
    %v1785 = vmul.f32 %v1770, %v1783
    %v1786 = vmul.f32 %v1774, %v1783
    %v1787 = vmul.f32 %v1778, %v1783
    %v1788 = vadd.f32 %v1760, %v1784
    %v1789 = vadd.f32 %v1761, %v1785
    %v1790 = vadd.f32 %v1762, %v1786
    %v1791 = vadd.f32 %v1763, %v1787
    %1792 = vset.pattern.permute.xlu0 2
    %1793 = vperm.xlu0 %1792, %v1730
    %v1794 = vpop.permute.xlu0 %1793
    %1796 = vset.pattern.permute.xlu0 2
    %1797 = vperm.xlu0 %1796, %v1731
    %v1798 = vpop.permute.xlu0 %1797
    %1800 = vset.pattern.permute.xlu0 2
    %1801 = vperm.xlu0 %1800, %v1732
    %v1802 = vpop.permute.xlu0 %1801
    %1804 = vset.pattern.permute.xlu0 2
    %1805 = vperm.xlu0 %1804, %v1733
    %v1806 = vpop.permute.xlu0 %1805
    %v1808 = vlaneseq
    %v1809 = vshrl.u32 %v1808, 7
    %v1810 = vsub.s32 2, %v1809
    %v1811 = vrot.slane %v1735, %v1810
    %v1812 = vmul.f32 %v1794, %v1811
    %v1813 = vmul.f32 %v1798, %v1811
    %v1814 = vmul.f32 %v1802, %v1811
    %v1815 = vmul.f32 %v1806, %v1811
    %v1816 = vadd.f32 %v1788, %v1812
    %v1817 = vadd.f32 %v1789, %v1813
    %v1818 = vadd.f32 %v1790, %v1814
    %v1819 = vadd.f32 %v1791, %v1815
    %1820 = vset.pattern.permute.xlu0 3
    %1821 = vperm.xlu0 %1820, %v1730
    %v1822 = vpop.permute.xlu0 %1821
    %1824 = vset.pattern.permute.xlu0 3
    %1825 = vperm.xlu0 %1824, %v1731
    %v1826 = vpop.permute.xlu0 %1825
    %1828 = vset.pattern.permute.xlu0 3
    %1829 = vperm.xlu0 %1828, %v1732
    %v1830 = vpop.permute.xlu0 %1829
    %1832 = vset.pattern.permute.xlu0 3
    %1833 = vperm.xlu0 %1832, %v1733
    %v1834 = vpop.permute.xlu0 %1833
    %v1836 = vlaneseq
    %v1837 = vshrl.u32 %v1836, 7
    %v1838 = vsub.s32 3, %v1837
    %v1839 = vrot.slane %v1735, %v1838
    %v1840 = vmul.f32 %v1822, %v1839
    %v1841 = vmul.f32 %v1826, %v1839
    %v1842 = vmul.f32 %v1830, %v1839
    %v1843 = vmul.f32 %v1834, %v1839
    %v1844 = vadd.f32 %v1816, %v1840
    %v1845 = vadd.f32 %v1817, %v1841
    %v1846 = vadd.f32 %v1818, %v1842
    %v1847 = vadd.f32 %v1819, %v1843
    %v1848 = vadd.f32 %v1726, %v1844
    %v1849 = vadd.f32 %v1727, %v1845
    %v1850 = vadd.f32 %v1728, %v1846
    %v1851 = vadd.f32 %v1729, %v1847
    %v1852 = vld [vmem:[#allocation2 + $0x5] sm:$0xff]
    %v1853 = vld [vmem:[#allocation2 + $0xd] sm:$0xff]
    %v1854 = vld [vmem:[#allocation2 + $0x25] sm:$0xff]
    %v1855 = vld [vmem:[#allocation2 + $0x2d] sm:$0xff]
    %s1856 = scalar_lea.vmem %s7, 20
    %v1857 = vld [vmem:[%s1856] sm:$0xf]
    %1859 = vset.pattern.permute.xlu0 0
    %1860 = vperm.xlu0 %1859, %v1852
    %v1861 = vpop.permute.xlu0 %1860
    %1864 = vset.pattern.permute.xlu0 0
    %1865 = vperm.xlu0 %1864, %v1853
    %v1866 = vpop.permute.xlu0 %1865
    %1869 = vset.pattern.permute.xlu0 0
    %1870 = vperm.xlu0 %1869, %v1854
    %v1871 = vpop.permute.xlu0 %1870
    %1874 = vset.pattern.permute.xlu0 0
    %1875 = vperm.xlu0 %1874, %v1855
    %v1876 = vpop.permute.xlu0 %1875
    %v1878 = vlaneseq
    %v1879 = vshrl.u32 %v1878, 7
    %v1880 = vsub.s32 0, %v1879
    %v1881 = vrot.slane %v1857, %v1880
    %v1882 = vmul.f32 %v1861, %v1881
    %v1883 = vmul.f32 %v1866, %v1881
    %v1884 = vmul.f32 %v1871, %v1881
    %v1885 = vmul.f32 %v1876, %v1881
    %1886 = vset.pattern.permute.xlu0 1
    %1887 = vperm.xlu0 %1886, %v1852
    %v1888 = vpop.permute.xlu0 %1887
    %1890 = vset.pattern.permute.xlu0 1
    %1891 = vperm.xlu0 %1890, %v1853
    %v1892 = vpop.permute.xlu0 %1891
    %1894 = vset.pattern.permute.xlu0 1
    %1895 = vperm.xlu0 %1894, %v1854
    %v1896 = vpop.permute.xlu0 %1895
    %1898 = vset.pattern.permute.xlu0 1
    %1899 = vperm.xlu0 %1898, %v1855
    %v1900 = vpop.permute.xlu0 %1899
    %v1902 = vlaneseq
    %v1903 = vshrl.u32 %v1902, 7
    %v1904 = vsub.s32 1, %v1903
    %v1905 = vrot.slane %v1857, %v1904
    %v1906 = vmul.f32 %v1888, %v1905
    %v1907 = vmul.f32 %v1892, %v1905
    %v1908 = vmul.f32 %v1896, %v1905
    %v1909 = vmul.f32 %v1900, %v1905
    %v1910 = vadd.f32 %v1882, %v1906
    %v1911 = vadd.f32 %v1883, %v1907
    %v1912 = vadd.f32 %v1884, %v1908
    %v1913 = vadd.f32 %v1885, %v1909
    %1914 = vset.pattern.permute.xlu0 2
    %1915 = vperm.xlu0 %1914, %v1852
    %v1916 = vpop.permute.xlu0 %1915
    %1918 = vset.pattern.permute.xlu0 2
    %1919 = vperm.xlu0 %1918, %v1853
    %v1920 = vpop.permute.xlu0 %1919
    %1922 = vset.pattern.permute.xlu0 2
    %1923 = vperm.xlu0 %1922, %v1854
    %v1924 = vpop.permute.xlu0 %1923
    %1926 = vset.pattern.permute.xlu0 2
    %1927 = vperm.xlu0 %1926, %v1855
    %v1928 = vpop.permute.xlu0 %1927
    %v1930 = vlaneseq
    %v1931 = vshrl.u32 %v1930, 7
    %v1932 = vsub.s32 2, %v1931
    %v1933 = vrot.slane %v1857, %v1932
    %v1934 = vmul.f32 %v1916, %v1933
    %v1935 = vmul.f32 %v1920, %v1933
    %v1936 = vmul.f32 %v1924, %v1933
    %v1937 = vmul.f32 %v1928, %v1933
    %v1938 = vadd.f32 %v1910, %v1934
    %v1939 = vadd.f32 %v1911, %v1935
    %v1940 = vadd.f32 %v1912, %v1936
    %v1941 = vadd.f32 %v1913, %v1937
    %1942 = vset.pattern.permute.xlu0 3
    %1943 = vperm.xlu0 %1942, %v1852
    %v1944 = vpop.permute.xlu0 %1943
    %1946 = vset.pattern.permute.xlu0 3
    %1947 = vperm.xlu0 %1946, %v1853
    %v1948 = vpop.permute.xlu0 %1947
    %1950 = vset.pattern.permute.xlu0 3
    %1951 = vperm.xlu0 %1950, %v1854
    %v1952 = vpop.permute.xlu0 %1951
    %1954 = vset.pattern.permute.xlu0 3
    %1955 = vperm.xlu0 %1954, %v1855
    %v1956 = vpop.permute.xlu0 %1955
    %v1958 = vlaneseq
    %v1959 = vshrl.u32 %v1958, 7
    %v1960 = vsub.s32 3, %v1959
    %v1961 = vrot.slane %v1857, %v1960
    %v1962 = vmul.f32 %v1944, %v1961
    %v1963 = vmul.f32 %v1948, %v1961
    %v1964 = vmul.f32 %v1952, %v1961
    %v1965 = vmul.f32 %v1956, %v1961
    %v1966 = vadd.f32 %v1938, %v1962
    %v1967 = vadd.f32 %v1939, %v1963
    %v1968 = vadd.f32 %v1940, %v1964
    %v1969 = vadd.f32 %v1941, %v1965
    %v1970 = vadd.f32 %v1848, %v1966
    %v1971 = vadd.f32 %v1849, %v1967
    %v1972 = vadd.f32 %v1850, %v1968
    %v1973 = vadd.f32 %v1851, %v1969
    %v1974 = vld [vmem:[#allocation2 + $0x6] sm:$0xff]
    %v1975 = vld [vmem:[#allocation2 + $0xe] sm:$0xff]
    %v1976 = vld [vmem:[#allocation2 + $0x26] sm:$0xff]
    %v1977 = vld [vmem:[#allocation2 + $0x2e] sm:$0xff]
    %s1978 = scalar_lea.vmem %s7, 24
    %v1979 = vld [vmem:[%s1978] sm:$0xf]
    %1981 = vset.pattern.permute.xlu0 0
    %1982 = vperm.xlu0 %1981, %v1974
    %v1983 = vpop.permute.xlu0 %1982
    %1986 = vset.pattern.permute.xlu0 0
    %1987 = vperm.xlu0 %1986, %v1975
    %v1988 = vpop.permute.xlu0 %1987
    %1991 = vset.pattern.permute.xlu0 0
    %1992 = vperm.xlu0 %1991, %v1976
    %v1993 = vpop.permute.xlu0 %1992
    %1996 = vset.pattern.permute.xlu0 0
    %1997 = vperm.xlu0 %1996, %v1977
    %v1998 = vpop.permute.xlu0 %1997
    %v2000 = vlaneseq
    %v2001 = vshrl.u32 %v2000, 7
    %v2002 = vsub.s32 0, %v2001
    %v2003 = vrot.slane %v1979, %v2002
    %v2004 = vmul.f32 %v1983, %v2003
    %v2005 = vmul.f32 %v1988, %v2003
    %v2006 = vmul.f32 %v1993, %v2003
    %v2007 = vmul.f32 %v1998, %v2003
    %2008 = vset.pattern.permute.xlu0 1
    %2009 = vperm.xlu0 %2008, %v1974
    %v2010 = vpop.permute.xlu0 %2009
    %2012 = vset.pattern.permute.xlu0 1
    %2013 = vperm.xlu0 %2012, %v1975
    %v2014 = vpop.permute.xlu0 %2013
    %2016 = vset.pattern.permute.xlu0 1
    %2017 = vperm.xlu0 %2016, %v1976
    %v2018 = vpop.permute.xlu0 %2017
    %2020 = vset.pattern.permute.xlu0 1
    %2021 = vperm.xlu0 %2020, %v1977
    %v2022 = vpop.permute.xlu0 %2021
    %v2024 = vlaneseq
    %v2025 = vshrl.u32 %v2024, 7
    %v2026 = vsub.s32 1, %v2025
    %v2027 = vrot.slane %v1979, %v2026
    %v2028 = vmul.f32 %v2010, %v2027
    %v2029 = vmul.f32 %v2014, %v2027
    %v2030 = vmul.f32 %v2018, %v2027
    %v2031 = vmul.f32 %v2022, %v2027
    %v2032 = vadd.f32 %v2004, %v2028
    %v2033 = vadd.f32 %v2005, %v2029
    %v2034 = vadd.f32 %v2006, %v2030
    %v2035 = vadd.f32 %v2007, %v2031
    %2036 = vset.pattern.permute.xlu0 2
    %2037 = vperm.xlu0 %2036, %v1974
    %v2038 = vpop.permute.xlu0 %2037
    %2040 = vset.pattern.permute.xlu0 2
    %2041 = vperm.xlu0 %2040, %v1975
    %v2042 = vpop.permute.xlu0 %2041
    %2044 = vset.pattern.permute.xlu0 2
    %2045 = vperm.xlu0 %2044, %v1976
    %v2046 = vpop.permute.xlu0 %2045
    %2048 = vset.pattern.permute.xlu0 2
    %2049 = vperm.xlu0 %2048, %v1977
    %v2050 = vpop.permute.xlu0 %2049
    %v2052 = vlaneseq
    %v2053 = vshrl.u32 %v2052, 7
    %v2054 = vsub.s32 2, %v2053
    %v2055 = vrot.slane %v1979, %v2054
    %v2056 = vmul.f32 %v2038, %v2055
    %v2057 = vmul.f32 %v2042, %v2055
    %v2058 = vmul.f32 %v2046, %v2055
    %v2059 = vmul.f32 %v2050, %v2055
    %v2060 = vadd.f32 %v2032, %v2056
    %v2061 = vadd.f32 %v2033, %v2057
    %v2062 = vadd.f32 %v2034, %v2058
    %v2063 = vadd.f32 %v2035, %v2059
    %2064 = vset.pattern.permute.xlu0 3
    %2065 = vperm.xlu0 %2064, %v1974
    %v2066 = vpop.permute.xlu0 %2065
    %2068 = vset.pattern.permute.xlu0 3
    %2069 = vperm.xlu0 %2068, %v1975
    %v2070 = vpop.permute.xlu0 %2069
    %2072 = vset.pattern.permute.xlu0 3
    %2073 = vperm.xlu0 %2072, %v1976
    %v2074 = vpop.permute.xlu0 %2073
    %2076 = vset.pattern.permute.xlu0 3
    %2077 = vperm.xlu0 %2076, %v1977
    %v2078 = vpop.permute.xlu0 %2077
    %v2080 = vlaneseq
    %v2081 = vshrl.u32 %v2080, 7
    %v2082 = vsub.s32 3, %v2081
    %v2083 = vrot.slane %v1979, %v2082
    %v2084 = vmul.f32 %v2066, %v2083
    %v2085 = vmul.f32 %v2070, %v2083
    %v2086 = vmul.f32 %v2074, %v2083
    %v2087 = vmul.f32 %v2078, %v2083
    %v2088 = vadd.f32 %v2060, %v2084
    %v2089 = vadd.f32 %v2061, %v2085
    %v2090 = vadd.f32 %v2062, %v2086
    %v2091 = vadd.f32 %v2063, %v2087
    %v2092 = vadd.f32 %v1970, %v2088
    %v2093 = vadd.f32 %v1971, %v2089
    %v2094 = vadd.f32 %v1972, %v2090
    %v2095 = vadd.f32 %v1973, %v2091
    %v2096 = vld [vmem:[#allocation2 + $0x7] sm:$0xff]
    %v2097 = vld [vmem:[#allocation2 + $0xf] sm:$0xff]
    %v2098 = vld [vmem:[#allocation2 + $0x27] sm:$0xff]
    %v2099 = vld [vmem:[#allocation2 + $0x2f] sm:$0xff]
    %s2100 = scalar_lea.vmem %s7, 28
    %v2101 = vld [vmem:[%s2100] sm:$0xf]
    %2103 = vset.pattern.permute.xlu0 0
    %2104 = vperm.xlu0 %2103, %v2096
    %v2105 = vpop.permute.xlu0 %2104
    %2108 = vset.pattern.permute.xlu0 0
    %2109 = vperm.xlu0 %2108, %v2097
    %v2110 = vpop.permute.xlu0 %2109
    %2113 = vset.pattern.permute.xlu0 0
    %2114 = vperm.xlu0 %2113, %v2098
    %v2115 = vpop.permute.xlu0 %2114
    %2118 = vset.pattern.permute.xlu0 0
    %2119 = vperm.xlu0 %2118, %v2099
    %v2120 = vpop.permute.xlu0 %2119
    %v2122 = vlaneseq
    %v2123 = vshrl.u32 %v2122, 7
    %v2124 = vsub.s32 0, %v2123
    %v2125 = vrot.slane %v2101, %v2124
    %v2126 = vmul.f32 %v2105, %v2125
    %v2127 = vmul.f32 %v2110, %v2125
    %v2128 = vmul.f32 %v2115, %v2125
    %v2129 = vmul.f32 %v2120, %v2125
    %2130 = vset.pattern.permute.xlu0 1
    %2131 = vperm.xlu0 %2130, %v2096
    %v2132 = vpop.permute.xlu0 %2131
    %2134 = vset.pattern.permute.xlu0 1
    %2135 = vperm.xlu0 %2134, %v2097
    %v2136 = vpop.permute.xlu0 %2135
    %2138 = vset.pattern.permute.xlu0 1
    %2139 = vperm.xlu0 %2138, %v2098
    %v2140 = vpop.permute.xlu0 %2139
    %2142 = vset.pattern.permute.xlu0 1
    %2143 = vperm.xlu0 %2142, %v2099
    %v2144 = vpop.permute.xlu0 %2143
    %v2146 = vlaneseq
    %v2147 = vshrl.u32 %v2146, 7
    %v2148 = vsub.s32 1, %v2147
    %v2149 = vrot.slane %v2101, %v2148
    %v2150 = vmul.f32 %v2132, %v2149
    %v2151 = vmul.f32 %v2136, %v2149
    %v2152 = vmul.f32 %v2140, %v2149
    %v2153 = vmul.f32 %v2144, %v2149
    %v2154 = vadd.f32 %v2126, %v2150
    %v2155 = vadd.f32 %v2127, %v2151
    %v2156 = vadd.f32 %v2128, %v2152
    %v2157 = vadd.f32 %v2129, %v2153
    %2158 = vset.pattern.permute.xlu0 2
    %2159 = vperm.xlu0 %2158, %v2096
    %v2160 = vpop.permute.xlu0 %2159
    %2162 = vset.pattern.permute.xlu0 2
    %2163 = vperm.xlu0 %2162, %v2097
    %v2164 = vpop.permute.xlu0 %2163
    %2166 = vset.pattern.permute.xlu0 2
    %2167 = vperm.xlu0 %2166, %v2098
    %v2168 = vpop.permute.xlu0 %2167
    %2170 = vset.pattern.permute.xlu0 2
    %2171 = vperm.xlu0 %2170, %v2099
    %v2172 = vpop.permute.xlu0 %2171
    %v2174 = vlaneseq
    %v2175 = vshrl.u32 %v2174, 7
    %v2176 = vsub.s32 2, %v2175
    %v2177 = vrot.slane %v2101, %v2176
    %v2178 = vmul.f32 %v2160, %v2177
    %v2179 = vmul.f32 %v2164, %v2177
    %v2180 = vmul.f32 %v2168, %v2177
    %v2181 = vmul.f32 %v2172, %v2177
    %v2182 = vadd.f32 %v2154, %v2178
    %v2183 = vadd.f32 %v2155, %v2179
    %v2184 = vadd.f32 %v2156, %v2180
    %v2185 = vadd.f32 %v2157, %v2181
    %2186 = vset.pattern.permute.xlu0 3
    %2187 = vperm.xlu0 %2186, %v2096
    %v2188 = vpop.permute.xlu0 %2187
    %2190 = vset.pattern.permute.xlu0 3
    %2191 = vperm.xlu0 %2190, %v2097
    %v2192 = vpop.permute.xlu0 %2191
    %2194 = vset.pattern.permute.xlu0 3
    %2195 = vperm.xlu0 %2194, %v2098
    %v2196 = vpop.permute.xlu0 %2195
    %2198 = vset.pattern.permute.xlu0 3
    %2199 = vperm.xlu0 %2198, %v2099
    %v2200 = vpop.permute.xlu0 %2199
    %v2202 = vlaneseq
    %v2203 = vshrl.u32 %v2202, 7
    %v2204 = vsub.s32 3, %v2203
    %v2205 = vrot.slane %v2101, %v2204
    %v2206 = vmul.f32 %v2188, %v2205
    %v2207 = vmul.f32 %v2192, %v2205
    %v2208 = vmul.f32 %v2196, %v2205
    %v2209 = vmul.f32 %v2200, %v2205
    %v2210 = vadd.f32 %v2182, %v2206
    %v2211 = vadd.f32 %v2183, %v2207
    %v2212 = vadd.f32 %v2184, %v2208
    %v2213 = vadd.f32 %v2185, %v2209
    %v2214 = vadd.f32 %v2092, %v2210
    %v2215 = vadd.f32 %v2093, %v2211
    %v2216 = vadd.f32 %v2094, %v2212
    %v2217 = vadd.f32 %v2095, %v2213
    %v2218 = vld [vmem:[#allocation2 + $0x8] sm:$0xff]
    %v2219 = vld [vmem:[#allocation2 + $0x10] sm:$0xff]
    %v2220 = vld [vmem:[#allocation2 + $0x28] sm:$0xff]
    %v2221 = vld [vmem:[#allocation2 + $0x30] sm:$0xff]
    %s2222 = scalar_lea.vmem %s7, 32
    %v2223 = vld [vmem:[%s2222] sm:$0xf]
    %2225 = vset.pattern.permute.xlu0 0
    %2226 = vperm.xlu0 %2225, %v2218
    %v2227 = vpop.permute.xlu0 %2226
    %2230 = vset.pattern.permute.xlu0 0
    %2231 = vperm.xlu0 %2230, %v2219
    %v2232 = vpop.permute.xlu0 %2231
    %2235 = vset.pattern.permute.xlu0 0
    %2236 = vperm.xlu0 %2235, %v2220
    %v2237 = vpop.permute.xlu0 %2236
    %2240 = vset.pattern.permute.xlu0 0
    %2241 = vperm.xlu0 %2240, %v2221
    %v2242 = vpop.permute.xlu0 %2241
    %v2244 = vlaneseq
    %v2245 = vshrl.u32 %v2244, 7
    %v2246 = vsub.s32 0, %v2245
    %v2247 = vrot.slane %v2223, %v2246
    %v2248 = vmul.f32 %v2227, %v2247
    %v2249 = vmul.f32 %v2232, %v2247
    %v2250 = vmul.f32 %v2237, %v2247
    %v2251 = vmul.f32 %v2242, %v2247
    %2252 = vset.pattern.permute.xlu0 1
    %2253 = vperm.xlu0 %2252, %v2218
    %v2254 = vpop.permute.xlu0 %2253
    %2256 = vset.pattern.permute.xlu0 1
    %2257 = vperm.xlu0 %2256, %v2219
    %v2258 = vpop.permute.xlu0 %2257
    %2260 = vset.pattern.permute.xlu0 1
    %2261 = vperm.xlu0 %2260, %v2220
    %v2262 = vpop.permute.xlu0 %2261
    %2264 = vset.pattern.permute.xlu0 1
    %2265 = vperm.xlu0 %2264, %v2221
    %v2266 = vpop.permute.xlu0 %2265
    %v2268 = vlaneseq
    %v2269 = vshrl.u32 %v2268, 7
    %v2270 = vsub.s32 1, %v2269
    %v2271 = vrot.slane %v2223, %v2270
    %v2272 = vmul.f32 %v2254, %v2271
    %v2273 = vmul.f32 %v2258, %v2271
    %v2274 = vmul.f32 %v2262, %v2271
    %v2275 = vmul.f32 %v2266, %v2271
    %v2276 = vadd.f32 %v2248, %v2272
    %v2277 = vadd.f32 %v2249, %v2273
    %v2278 = vadd.f32 %v2250, %v2274
    %v2279 = vadd.f32 %v2251, %v2275
    %2280 = vset.pattern.permute.xlu0 2
    %2281 = vperm.xlu0 %2280, %v2218
    %v2282 = vpop.permute.xlu0 %2281
    %2284 = vset.pattern.permute.xlu0 2
    %2285 = vperm.xlu0 %2284, %v2219
    %v2286 = vpop.permute.xlu0 %2285
    %2288 = vset.pattern.permute.xlu0 2
    %2289 = vperm.xlu0 %2288, %v2220
    %v2290 = vpop.permute.xlu0 %2289
    %2292 = vset.pattern.permute.xlu0 2
    %2293 = vperm.xlu0 %2292, %v2221
    %v2294 = vpop.permute.xlu0 %2293
    %v2296 = vlaneseq
    %v2297 = vshrl.u32 %v2296, 7
    %v2298 = vsub.s32 2, %v2297
    %v2299 = vrot.slane %v2223, %v2298
    %v2300 = vmul.f32 %v2282, %v2299
    %v2301 = vmul.f32 %v2286, %v2299
    %v2302 = vmul.f32 %v2290, %v2299
    %v2303 = vmul.f32 %v2294, %v2299
    %v2304 = vadd.f32 %v2276, %v2300
    %v2305 = vadd.f32 %v2277, %v2301
    %v2306 = vadd.f32 %v2278, %v2302
    %v2307 = vadd.f32 %v2279, %v2303
    %2308 = vset.pattern.permute.xlu0 3
    %2309 = vperm.xlu0 %2308, %v2218
    %v2310 = vpop.permute.xlu0 %2309
    %2312 = vset.pattern.permute.xlu0 3
    %2313 = vperm.xlu0 %2312, %v2219
    %v2314 = vpop.permute.xlu0 %2313
    %2316 = vset.pattern.permute.xlu0 3
    %2317 = vperm.xlu0 %2316, %v2220
    %v2318 = vpop.permute.xlu0 %2317
    %2320 = vset.pattern.permute.xlu0 3
    %2321 = vperm.xlu0 %2320, %v2221
    %v2322 = vpop.permute.xlu0 %2321
    %v2324 = vlaneseq
    %v2325 = vshrl.u32 %v2324, 7
    %v2326 = vsub.s32 3, %v2325
    %v2327 = vrot.slane %v2223, %v2326
    %v2328 = vmul.f32 %v2310, %v2327
    %v2329 = vmul.f32 %v2314, %v2327
    %v2330 = vmul.f32 %v2318, %v2327
    %v2331 = vmul.f32 %v2322, %v2327
    %v2332 = vadd.f32 %v2304, %v2328
    %v2333 = vadd.f32 %v2305, %v2329
    %v2334 = vadd.f32 %v2306, %v2330
    %v2335 = vadd.f32 %v2307, %v2331
    %v2336 = vadd.f32 %v2214, %v2332
    %v2337 = vadd.f32 %v2215, %v2333
    %v2338 = vadd.f32 %v2216, %v2334
    %v2339 = vadd.f32 %v2217, %v2335
    %v2340 = vld [vmem:[#allocation2 + $0x9] sm:$0xff]
    %v2341 = vld [vmem:[#allocation2 + $0x11] sm:$0xff]
    %v2342 = vld [vmem:[#allocation2 + $0x29] sm:$0xff]
    %v2343 = vld [vmem:[#allocation2 + $0x31] sm:$0xff]
    %s2344 = scalar_lea.vmem %s7, 36
    %v2345 = vld [vmem:[%s2344] sm:$0xf]
    %2347 = vset.pattern.permute.xlu0 0
    %2348 = vperm.xlu0 %2347, %v2340
    %v2349 = vpop.permute.xlu0 %2348
    %2352 = vset.pattern.permute.xlu0 0
    %2353 = vperm.xlu0 %2352, %v2341
    %v2354 = vpop.permute.xlu0 %2353
    %2357 = vset.pattern.permute.xlu0 0
    %2358 = vperm.xlu0 %2357, %v2342
    %v2359 = vpop.permute.xlu0 %2358
    %2362 = vset.pattern.permute.xlu0 0
    %2363 = vperm.xlu0 %2362, %v2343
    %v2364 = vpop.permute.xlu0 %2363
    %v2366 = vlaneseq
    %v2367 = vshrl.u32 %v2366, 7
    %v2368 = vsub.s32 0, %v2367
    %v2369 = vrot.slane %v2345, %v2368
    %v2370 = vmul.f32 %v2349, %v2369
    %v2371 = vmul.f32 %v2354, %v2369
    %v2372 = vmul.f32 %v2359, %v2369
    %v2373 = vmul.f32 %v2364, %v2369
    %2374 = vset.pattern.permute.xlu0 1
    %2375 = vperm.xlu0 %2374, %v2340
    %v2376 = vpop.permute.xlu0 %2375
    %2378 = vset.pattern.permute.xlu0 1
    %2379 = vperm.xlu0 %2378, %v2341
    %v2380 = vpop.permute.xlu0 %2379
    %2382 = vset.pattern.permute.xlu0 1
    %2383 = vperm.xlu0 %2382, %v2342
    %v2384 = vpop.permute.xlu0 %2383
    %2386 = vset.pattern.permute.xlu0 1
    %2387 = vperm.xlu0 %2386, %v2343
    %v2388 = vpop.permute.xlu0 %2387
    %v2390 = vlaneseq
    %v2391 = vshrl.u32 %v2390, 7
    %v2392 = vsub.s32 1, %v2391
    %v2393 = vrot.slane %v2345, %v2392
    %v2394 = vmul.f32 %v2376, %v2393
    %v2395 = vmul.f32 %v2380, %v2393
    %v2396 = vmul.f32 %v2384, %v2393
    %v2397 = vmul.f32 %v2388, %v2393
    %v2398 = vadd.f32 %v2370, %v2394
    %v2399 = vadd.f32 %v2371, %v2395
    %v2400 = vadd.f32 %v2372, %v2396
    %v2401 = vadd.f32 %v2373, %v2397
    %2402 = vset.pattern.permute.xlu0 2
    %2403 = vperm.xlu0 %2402, %v2340
    %v2404 = vpop.permute.xlu0 %2403
    %2406 = vset.pattern.permute.xlu0 2
    %2407 = vperm.xlu0 %2406, %v2341
    %v2408 = vpop.permute.xlu0 %2407
    %2410 = vset.pattern.permute.xlu0 2
    %2411 = vperm.xlu0 %2410, %v2342
    %v2412 = vpop.permute.xlu0 %2411
    %2414 = vset.pattern.permute.xlu0 2
    %2415 = vperm.xlu0 %2414, %v2343
    %v2416 = vpop.permute.xlu0 %2415
    %v2418 = vlaneseq
    %v2419 = vshrl.u32 %v2418, 7
    %v2420 = vsub.s32 2, %v2419
    %v2421 = vrot.slane %v2345, %v2420
    %v2422 = vmul.f32 %v2404, %v2421
    %v2423 = vmul.f32 %v2408, %v2421
    %v2424 = vmul.f32 %v2412, %v2421
    %v2425 = vmul.f32 %v2416, %v2421
    %v2426 = vadd.f32 %v2398, %v2422
    %v2427 = vadd.f32 %v2399, %v2423
    %v2428 = vadd.f32 %v2400, %v2424
    %v2429 = vadd.f32 %v2401, %v2425
    %2430 = vset.pattern.permute.xlu0 3
    %2431 = vperm.xlu0 %2430, %v2340
    %v2432 = vpop.permute.xlu0 %2431
    %2434 = vset.pattern.permute.xlu0 3
    %2435 = vperm.xlu0 %2434, %v2341
    %v2436 = vpop.permute.xlu0 %2435
    %2438 = vset.pattern.permute.xlu0 3
    %2439 = vperm.xlu0 %2438, %v2342
    %v2440 = vpop.permute.xlu0 %2439
    %2442 = vset.pattern.permute.xlu0 3
    %2443 = vperm.xlu0 %2442, %v2343
    %v2444 = vpop.permute.xlu0 %2443
    %v2446 = vlaneseq
    %v2447 = vshrl.u32 %v2446, 7
    %v2448 = vsub.s32 3, %v2447
    %v2449 = vrot.slane %v2345, %v2448
    %v2450 = vmul.f32 %v2432, %v2449
    %v2451 = vmul.f32 %v2436, %v2449
    %v2452 = vmul.f32 %v2440, %v2449
    %v2453 = vmul.f32 %v2444, %v2449
    %v2454 = vadd.f32 %v2426, %v2450
    %v2455 = vadd.f32 %v2427, %v2451
    %v2456 = vadd.f32 %v2428, %v2452
    %v2457 = vadd.f32 %v2429, %v2453
    %v2458 = vadd.f32 %v2336, %v2454
    %v2459 = vadd.f32 %v2337, %v2455
    %v2460 = vadd.f32 %v2338, %v2456
    %v2461 = vadd.f32 %v2339, %v2457
    %v2462 = vld [vmem:[#allocation2 + $0xa] sm:$0xff]
    %v2463 = vld [vmem:[#allocation2 + $0x12] sm:$0xff]
    %v2464 = vld [vmem:[#allocation2 + $0x2a] sm:$0xff]
    %v2465 = vld [vmem:[#allocation2 + $0x32] sm:$0xff]
    %s2466 = scalar_lea.vmem %s7, 40
    %v2467 = vld [vmem:[%s2466] sm:$0xf]
    %2469 = vset.pattern.permute.xlu0 0
    %2470 = vperm.xlu0 %2469, %v2462
    %v2471 = vpop.permute.xlu0 %2470
    %2474 = vset.pattern.permute.xlu0 0
    %2475 = vperm.xlu0 %2474, %v2463
    %v2476 = vpop.permute.xlu0 %2475
    %2479 = vset.pattern.permute.xlu0 0
    %2480 = vperm.xlu0 %2479, %v2464
    %v2481 = vpop.permute.xlu0 %2480
    %2484 = vset.pattern.permute.xlu0 0
    %2485 = vperm.xlu0 %2484, %v2465
    %v2486 = vpop.permute.xlu0 %2485
    %v2488 = vlaneseq
    %v2489 = vshrl.u32 %v2488, 7
    %v2490 = vsub.s32 0, %v2489
    %v2491 = vrot.slane %v2467, %v2490
    %v2492 = vmul.f32 %v2471, %v2491
    %v2493 = vmul.f32 %v2476, %v2491
    %v2494 = vmul.f32 %v2481, %v2491
    %v2495 = vmul.f32 %v2486, %v2491
    %2496 = vset.pattern.permute.xlu0 1
    %2497 = vperm.xlu0 %2496, %v2462
    %v2498 = vpop.permute.xlu0 %2497
    %2500 = vset.pattern.permute.xlu0 1
    %2501 = vperm.xlu0 %2500, %v2463
    %v2502 = vpop.permute.xlu0 %2501
    %2504 = vset.pattern.permute.xlu0 1
    %2505 = vperm.xlu0 %2504, %v2464
    %v2506 = vpop.permute.xlu0 %2505
    %2508 = vset.pattern.permute.xlu0 1
    %2509 = vperm.xlu0 %2508, %v2465
    %v2510 = vpop.permute.xlu0 %2509
    %v2512 = vlaneseq
    %v2513 = vshrl.u32 %v2512, 7
    %v2514 = vsub.s32 1, %v2513
    %v2515 = vrot.slane %v2467, %v2514
    %v2516 = vmul.f32 %v2498, %v2515
    %v2517 = vmul.f32 %v2502, %v2515
    %v2518 = vmul.f32 %v2506, %v2515
    %v2519 = vmul.f32 %v2510, %v2515
    %v2520 = vadd.f32 %v2492, %v2516
    %v2521 = vadd.f32 %v2493, %v2517
    %v2522 = vadd.f32 %v2494, %v2518
    %v2523 = vadd.f32 %v2495, %v2519
    %2524 = vset.pattern.permute.xlu0 2
    %2525 = vperm.xlu0 %2524, %v2462
    %v2526 = vpop.permute.xlu0 %2525
    %2528 = vset.pattern.permute.xlu0 2
    %2529 = vperm.xlu0 %2528, %v2463
    %v2530 = vpop.permute.xlu0 %2529
    %2532 = vset.pattern.permute.xlu0 2
    %2533 = vperm.xlu0 %2532, %v2464
    %v2534 = vpop.permute.xlu0 %2533
    %2536 = vset.pattern.permute.xlu0 2
    %2537 = vperm.xlu0 %2536, %v2465
    %v2538 = vpop.permute.xlu0 %2537
    %v2540 = vlaneseq
    %v2541 = vshrl.u32 %v2540, 7
    %v2542 = vsub.s32 2, %v2541
    %v2543 = vrot.slane %v2467, %v2542
    %v2544 = vmul.f32 %v2526, %v2543
    %v2545 = vmul.f32 %v2530, %v2543
    %v2546 = vmul.f32 %v2534, %v2543
    %v2547 = vmul.f32 %v2538, %v2543
    %v2548 = vadd.f32 %v2520, %v2544
    %v2549 = vadd.f32 %v2521, %v2545
    %v2550 = vadd.f32 %v2522, %v2546
    %v2551 = vadd.f32 %v2523, %v2547
    %2552 = vset.pattern.permute.xlu0 3
    %2553 = vperm.xlu0 %2552, %v2462
    %v2554 = vpop.permute.xlu0 %2553
    %2556 = vset.pattern.permute.xlu0 3
    %2557 = vperm.xlu0 %2556, %v2463
    %v2558 = vpop.permute.xlu0 %2557
    %2560 = vset.pattern.permute.xlu0 3
    %2561 = vperm.xlu0 %2560, %v2464
    %v2562 = vpop.permute.xlu0 %2561
    %2564 = vset.pattern.permute.xlu0 3
    %2565 = vperm.xlu0 %2564, %v2465
    %v2566 = vpop.permute.xlu0 %2565
    %v2568 = vlaneseq
    %v2569 = vshrl.u32 %v2568, 7
    %v2570 = vsub.s32 3, %v2569
    %v2571 = vrot.slane %v2467, %v2570
    %v2572 = vmul.f32 %v2554, %v2571
    %v2573 = vmul.f32 %v2558, %v2571
    %v2574 = vmul.f32 %v2562, %v2571
    %v2575 = vmul.f32 %v2566, %v2571
    %v2576 = vadd.f32 %v2548, %v2572
    %v2577 = vadd.f32 %v2549, %v2573
    %v2578 = vadd.f32 %v2550, %v2574
    %v2579 = vadd.f32 %v2551, %v2575
    %v2580 = vadd.f32 %v2458, %v2576
    %v2581 = vadd.f32 %v2459, %v2577
    %v2582 = vadd.f32 %v2460, %v2578
    %v2583 = vadd.f32 %v2461, %v2579
    %v2584 = vld [vmem:[#allocation2 + $0xb] sm:$0xff]
    %v2585 = vld [vmem:[#allocation2 + $0x13] sm:$0xff]
    %v2586 = vld [vmem:[#allocation2 + $0x2b] sm:$0xff]
    %v2587 = vld [vmem:[#allocation2 + $0x33] sm:$0xff]
    %s2588 = scalar_lea.vmem %s7, 44
    %v2589 = vld [vmem:[%s2588] sm:$0xf]
    %2591 = vset.pattern.permute.xlu0 0
    %2592 = vperm.xlu0 %2591, %v2584
    %v2593 = vpop.permute.xlu0 %2592
    %2596 = vset.pattern.permute.xlu0 0
    %2597 = vperm.xlu0 %2596, %v2585
    %v2598 = vpop.permute.xlu0 %2597
    %2601 = vset.pattern.permute.xlu0 0
    %2602 = vperm.xlu0 %2601, %v2586
    %v2603 = vpop.permute.xlu0 %2602
    %2606 = vset.pattern.permute.xlu0 0
    %2607 = vperm.xlu0 %2606, %v2587
    %v2608 = vpop.permute.xlu0 %2607
    %v2610 = vlaneseq
    %v2611 = vshrl.u32 %v2610, 7
    %v2612 = vsub.s32 0, %v2611
    %v2613 = vrot.slane %v2589, %v2612
    %v2614 = vmul.f32 %v2593, %v2613
    %v2615 = vmul.f32 %v2598, %v2613
    %v2616 = vmul.f32 %v2603, %v2613
    %v2617 = vmul.f32 %v2608, %v2613
    %2618 = vset.pattern.permute.xlu0 1
    %2619 = vperm.xlu0 %2618, %v2584
    %v2620 = vpop.permute.xlu0 %2619
    %2622 = vset.pattern.permute.xlu0 1
    %2623 = vperm.xlu0 %2622, %v2585
    %v2624 = vpop.permute.xlu0 %2623
    %2626 = vset.pattern.permute.xlu0 1
    %2627 = vperm.xlu0 %2626, %v2586
    %v2628 = vpop.permute.xlu0 %2627
    %2630 = vset.pattern.permute.xlu0 1
    %2631 = vperm.xlu0 %2630, %v2587
    %v2632 = vpop.permute.xlu0 %2631
    %v2634 = vlaneseq
    %v2635 = vshrl.u32 %v2634, 7
    %v2636 = vsub.s32 1, %v2635
    %v2637 = vrot.slane %v2589, %v2636
    %v2638 = vmul.f32 %v2620, %v2637
    %v2639 = vmul.f32 %v2624, %v2637
    %v2640 = vmul.f32 %v2628, %v2637
    %v2641 = vmul.f32 %v2632, %v2637
    %v2642 = vadd.f32 %v2614, %v2638
    %v2643 = vadd.f32 %v2615, %v2639
    %v2644 = vadd.f32 %v2616, %v2640
    %v2645 = vadd.f32 %v2617, %v2641
    %2646 = vset.pattern.permute.xlu0 2
    %2647 = vperm.xlu0 %2646, %v2584
    %v2648 = vpop.permute.xlu0 %2647
    %2650 = vset.pattern.permute.xlu0 2
    %2651 = vperm.xlu0 %2650, %v2585
    %v2652 = vpop.permute.xlu0 %2651
    %2654 = vset.pattern.permute.xlu0 2
    %2655 = vperm.xlu0 %2654, %v2586
    %v2656 = vpop.permute.xlu0 %2655
    %2658 = vset.pattern.permute.xlu0 2
    %2659 = vperm.xlu0 %2658, %v2587
    %v2660 = vpop.permute.xlu0 %2659
    %v2662 = vlaneseq
    %v2663 = vshrl.u32 %v2662, 7
    %v2664 = vsub.s32 2, %v2663
    %v2665 = vrot.slane %v2589, %v2664
    %v2666 = vmul.f32 %v2648, %v2665
    %v2667 = vmul.f32 %v2652, %v2665
    %v2668 = vmul.f32 %v2656, %v2665
    %v2669 = vmul.f32 %v2660, %v2665
    %v2670 = vadd.f32 %v2642, %v2666
    %v2671 = vadd.f32 %v2643, %v2667
    %v2672 = vadd.f32 %v2644, %v2668
    %v2673 = vadd.f32 %v2645, %v2669
    %2674 = vset.pattern.permute.xlu0 3
    %2675 = vperm.xlu0 %2674, %v2584
    %v2676 = vpop.permute.xlu0 %2675
    %2678 = vset.pattern.permute.xlu0 3
    %2679 = vperm.xlu0 %2678, %v2585
    %v2680 = vpop.permute.xlu0 %2679
    %2682 = vset.pattern.permute.xlu0 3
    %2683 = vperm.xlu0 %2682, %v2586
    %v2684 = vpop.permute.xlu0 %2683
    %2686 = vset.pattern.permute.xlu0 3
    %2687 = vperm.xlu0 %2686, %v2587
    %v2688 = vpop.permute.xlu0 %2687
    %v2690 = vlaneseq
    %v2691 = vshrl.u32 %v2690, 7
    %v2692 = vsub.s32 3, %v2691
    %v2693 = vrot.slane %v2589, %v2692
    %v2694 = vmul.f32 %v2676, %v2693
    %v2695 = vmul.f32 %v2680, %v2693
    %v2696 = vmul.f32 %v2684, %v2693
    %v2697 = vmul.f32 %v2688, %v2693
    %v2698 = vadd.f32 %v2670, %v2694
    %v2699 = vadd.f32 %v2671, %v2695
    %v2700 = vadd.f32 %v2672, %v2696
    %v2701 = vadd.f32 %v2673, %v2697
    %v2702 = vadd.f32 %v2580, %v2698
    %v2703 = vadd.f32 %v2581, %v2699
    %v2704 = vadd.f32 %v2582, %v2700
    %v2705 = vadd.f32 %v2583, %v2701
    %v2706 = vld [vmem:[#allocation2 + $0xc] sm:$0xff]
    %v2707 = vld [vmem:[#allocation2 + $0x14] sm:$0xff]
    %v2708 = vld [vmem:[#allocation2 + $0x2c] sm:$0xff]
    %v2709 = vld [vmem:[#allocation2 + $0x34] sm:$0xff]
    %s2710 = scalar_lea.vmem %s7, 48
    %v2711 = vld [vmem:[%s2710] sm:$0xf]
    %2713 = vset.pattern.permute.xlu0 0
    %2714 = vperm.xlu0 %2713, %v2706
    %v2715 = vpop.permute.xlu0 %2714
    %2718 = vset.pattern.permute.xlu0 0
    %2719 = vperm.xlu0 %2718, %v2707
    %v2720 = vpop.permute.xlu0 %2719
    %2723 = vset.pattern.permute.xlu0 0
    %2724 = vperm.xlu0 %2723, %v2708
    %v2725 = vpop.permute.xlu0 %2724
    %2728 = vset.pattern.permute.xlu0 0
    %2729 = vperm.xlu0 %2728, %v2709
    %v2730 = vpop.permute.xlu0 %2729
    %v2732 = vlaneseq
    %v2733 = vshrl.u32 %v2732, 7
    %v2734 = vsub.s32 0, %v2733
    %v2735 = vrot.slane %v2711, %v2734
    %v2736 = vmul.f32 %v2715, %v2735
    %v2737 = vmul.f32 %v2720, %v2735
    %v2738 = vmul.f32 %v2725, %v2735
    %v2739 = vmul.f32 %v2730, %v2735
    %2740 = vset.pattern.permute.xlu0 1
    %2741 = vperm.xlu0 %2740, %v2706
    %v2742 = vpop.permute.xlu0 %2741
    %2744 = vset.pattern.permute.xlu0 1
    %2745 = vperm.xlu0 %2744, %v2707
    %v2746 = vpop.permute.xlu0 %2745
    %2748 = vset.pattern.permute.xlu0 1
    %2749 = vperm.xlu0 %2748, %v2708
    %v2750 = vpop.permute.xlu0 %2749
    %2752 = vset.pattern.permute.xlu0 1
    %2753 = vperm.xlu0 %2752, %v2709
    %v2754 = vpop.permute.xlu0 %2753
    %v2756 = vlaneseq
    %v2757 = vshrl.u32 %v2756, 7
    %v2758 = vsub.s32 1, %v2757
    %v2759 = vrot.slane %v2711, %v2758
    %v2760 = vmul.f32 %v2742, %v2759
    %v2761 = vmul.f32 %v2746, %v2759
    %v2762 = vmul.f32 %v2750, %v2759
    %v2763 = vmul.f32 %v2754, %v2759
    %v2764 = vadd.f32 %v2736, %v2760
    %v2765 = vadd.f32 %v2737, %v2761
    %v2766 = vadd.f32 %v2738, %v2762
    %v2767 = vadd.f32 %v2739, %v2763
    %2768 = vset.pattern.permute.xlu0 2
    %2769 = vperm.xlu0 %2768, %v2706
    %v2770 = vpop.permute.xlu0 %2769
    %2772 = vset.pattern.permute.xlu0 2
    %2773 = vperm.xlu0 %2772, %v2707
    %v2774 = vpop.permute.xlu0 %2773
    %2776 = vset.pattern.permute.xlu0 2
    %2777 = vperm.xlu0 %2776, %v2708
    %v2778 = vpop.permute.xlu0 %2777
    %2780 = vset.pattern.permute.xlu0 2
    %2781 = vperm.xlu0 %2780, %v2709
    %v2782 = vpop.permute.xlu0 %2781
    %v2784 = vlaneseq
    %v2785 = vshrl.u32 %v2784, 7
    %v2786 = vsub.s32 2, %v2785
    %v2787 = vrot.slane %v2711, %v2786
    %v2788 = vmul.f32 %v2770, %v2787
    %v2789 = vmul.f32 %v2774, %v2787
    %v2790 = vmul.f32 %v2778, %v2787
    %v2791 = vmul.f32 %v2782, %v2787
    %v2792 = vadd.f32 %v2764, %v2788
    %v2793 = vadd.f32 %v2765, %v2789
    %v2794 = vadd.f32 %v2766, %v2790
    %v2795 = vadd.f32 %v2767, %v2791
    %2796 = vset.pattern.permute.xlu0 3
    %2797 = vperm.xlu0 %2796, %v2706
    %v2798 = vpop.permute.xlu0 %2797
    %2800 = vset.pattern.permute.xlu0 3
    %2801 = vperm.xlu0 %2800, %v2707
    %v2802 = vpop.permute.xlu0 %2801
    %2804 = vset.pattern.permute.xlu0 3
    %2805 = vperm.xlu0 %2804, %v2708
    %v2806 = vpop.permute.xlu0 %2805
    %2808 = vset.pattern.permute.xlu0 3
    %2809 = vperm.xlu0 %2808, %v2709
    %v2810 = vpop.permute.xlu0 %2809
    %v2812 = vlaneseq
    %v2813 = vshrl.u32 %v2812, 7
    %v2814 = vsub.s32 3, %v2813
    %v2815 = vrot.slane %v2711, %v2814
    %v2816 = vmul.f32 %v2798, %v2815
    %v2817 = vmul.f32 %v2802, %v2815
    %v2818 = vmul.f32 %v2806, %v2815
    %v2819 = vmul.f32 %v2810, %v2815
    %v2820 = vadd.f32 %v2792, %v2816
    %v2821 = vadd.f32 %v2793, %v2817
    %v2822 = vadd.f32 %v2794, %v2818
    %v2823 = vadd.f32 %v2795, %v2819
    %v2824 = vadd.f32 %v2702, %v2820
    %v2825 = vadd.f32 %v2703, %v2821
    %v2826 = vadd.f32 %v2704, %v2822
    %v2827 = vadd.f32 %v2705, %v2823
    %v2828 = vld [vmem:[#allocation2 + $0xd] sm:$0xff]
    %v2829 = vld [vmem:[#allocation2 + $0x15] sm:$0xff]
    %v2830 = vld [vmem:[#allocation2 + $0x2d] sm:$0xff]
    %v2831 = vld [vmem:[#allocation2 + $0x35] sm:$0xff]
    %s2832 = scalar_lea.vmem %s7, 52
    %v2833 = vld [vmem:[%s2832] sm:$0xf]
    %2835 = vset.pattern.permute.xlu0 0
    %2836 = vperm.xlu0 %2835, %v2828
    %v2837 = vpop.permute.xlu0 %2836
    %2840 = vset.pattern.permute.xlu0 0
    %2841 = vperm.xlu0 %2840, %v2829
    %v2842 = vpop.permute.xlu0 %2841
    %2845 = vset.pattern.permute.xlu0 0
    %2846 = vperm.xlu0 %2845, %v2830
    %v2847 = vpop.permute.xlu0 %2846
    %2850 = vset.pattern.permute.xlu0 0
    %2851 = vperm.xlu0 %2850, %v2831
    %v2852 = vpop.permute.xlu0 %2851
    %v2854 = vlaneseq
    %v2855 = vshrl.u32 %v2854, 7
    %v2856 = vsub.s32 0, %v2855
    %v2857 = vrot.slane %v2833, %v2856
    %v2858 = vmul.f32 %v2837, %v2857
    %v2859 = vmul.f32 %v2842, %v2857
    %v2860 = vmul.f32 %v2847, %v2857
    %v2861 = vmul.f32 %v2852, %v2857
    %2862 = vset.pattern.permute.xlu0 1
    %2863 = vperm.xlu0 %2862, %v2828
    %v2864 = vpop.permute.xlu0 %2863
    %2866 = vset.pattern.permute.xlu0 1
    %2867 = vperm.xlu0 %2866, %v2829
    %v2868 = vpop.permute.xlu0 %2867
    %2870 = vset.pattern.permute.xlu0 1
    %2871 = vperm.xlu0 %2870, %v2830
    %v2872 = vpop.permute.xlu0 %2871
    %2874 = vset.pattern.permute.xlu0 1
    %2875 = vperm.xlu0 %2874, %v2831
    %v2876 = vpop.permute.xlu0 %2875
    %v2878 = vlaneseq
    %v2879 = vshrl.u32 %v2878, 7
    %v2880 = vsub.s32 1, %v2879
    %v2881 = vrot.slane %v2833, %v2880
    %v2882 = vmul.f32 %v2864, %v2881
    %v2883 = vmul.f32 %v2868, %v2881
    %v2884 = vmul.f32 %v2872, %v2881
    %v2885 = vmul.f32 %v2876, %v2881
    %v2886 = vadd.f32 %v2858, %v2882
    %v2887 = vadd.f32 %v2859, %v2883
    %v2888 = vadd.f32 %v2860, %v2884
    %v2889 = vadd.f32 %v2861, %v2885
    %2890 = vset.pattern.permute.xlu0 2
    %2891 = vperm.xlu0 %2890, %v2828
    %v2892 = vpop.permute.xlu0 %2891
    %2894 = vset.pattern.permute.xlu0 2
    %2895 = vperm.xlu0 %2894, %v2829
    %v2896 = vpop.permute.xlu0 %2895
    %2898 = vset.pattern.permute.xlu0 2
    %2899 = vperm.xlu0 %2898, %v2830
    %v2900 = vpop.permute.xlu0 %2899
    %2902 = vset.pattern.permute.xlu0 2
    %2903 = vperm.xlu0 %2902, %v2831
    %v2904 = vpop.permute.xlu0 %2903
    %v2906 = vlaneseq
    %v2907 = vshrl.u32 %v2906, 7
    %v2908 = vsub.s32 2, %v2907
    %v2909 = vrot.slane %v2833, %v2908
    %v2910 = vmul.f32 %v2892, %v2909
    %v2911 = vmul.f32 %v2896, %v2909
    %v2912 = vmul.f32 %v2900, %v2909
    %v2913 = vmul.f32 %v2904, %v2909
    %v2914 = vadd.f32 %v2886, %v2910
    %v2915 = vadd.f32 %v2887, %v2911
    %v2916 = vadd.f32 %v2888, %v2912
    %v2917 = vadd.f32 %v2889, %v2913
    %2918 = vset.pattern.permute.xlu0 3
    %2919 = vperm.xlu0 %2918, %v2828
    %v2920 = vpop.permute.xlu0 %2919
    %2922 = vset.pattern.permute.xlu0 3
    %2923 = vperm.xlu0 %2922, %v2829
    %v2924 = vpop.permute.xlu0 %2923
    %2926 = vset.pattern.permute.xlu0 3
    %2927 = vperm.xlu0 %2926, %v2830
    %v2928 = vpop.permute.xlu0 %2927
    %2930 = vset.pattern.permute.xlu0 3
    %2931 = vperm.xlu0 %2930, %v2831
    %v2932 = vpop.permute.xlu0 %2931
    %v2934 = vlaneseq
    %v2935 = vshrl.u32 %v2934, 7
    %v2936 = vsub.s32 3, %v2935
    %v2937 = vrot.slane %v2833, %v2936
    %v2938 = vmul.f32 %v2920, %v2937
    %v2939 = vmul.f32 %v2924, %v2937
    %v2940 = vmul.f32 %v2928, %v2937
    %v2941 = vmul.f32 %v2932, %v2937
    %v2942 = vadd.f32 %v2914, %v2938
    %v2943 = vadd.f32 %v2915, %v2939
    %v2944 = vadd.f32 %v2916, %v2940
    %v2945 = vadd.f32 %v2917, %v2941
    %v2946 = vadd.f32 %v2824, %v2942
    %v2947 = vadd.f32 %v2825, %v2943
    %v2948 = vadd.f32 %v2826, %v2944
    %v2949 = vadd.f32 %v2827, %v2945
    %v2950 = vld [vmem:[#allocation2 + $0xe] sm:$0xff]
    %v2951 = vld [vmem:[#allocation2 + $0x16] sm:$0xff]
    %v2952 = vld [vmem:[#allocation2 + $0x2e] sm:$0xff]
    %v2953 = vld [vmem:[#allocation2 + $0x36] sm:$0xff]
    %s2954 = scalar_lea.vmem %s7, 56
    %v2955 = vld [vmem:[%s2954] sm:$0xf]
    %2957 = vset.pattern.permute.xlu0 0
    %2958 = vperm.xlu0 %2957, %v2950
    %v2959 = vpop.permute.xlu0 %2958
    %2962 = vset.pattern.permute.xlu0 0
    %2963 = vperm.xlu0 %2962, %v2951
    %v2964 = vpop.permute.xlu0 %2963
    %2967 = vset.pattern.permute.xlu0 0
    %2968 = vperm.xlu0 %2967, %v2952
    %v2969 = vpop.permute.xlu0 %2968
    %2972 = vset.pattern.permute.xlu0 0
    %2973 = vperm.xlu0 %2972, %v2953
    %v2974 = vpop.permute.xlu0 %2973
    %v2976 = vlaneseq
    %v2977 = vshrl.u32 %v2976, 7
    %v2978 = vsub.s32 0, %v2977
    %v2979 = vrot.slane %v2955, %v2978
    %v2980 = vmul.f32 %v2959, %v2979
    %v2981 = vmul.f32 %v2964, %v2979
    %v2982 = vmul.f32 %v2969, %v2979
    %v2983 = vmul.f32 %v2974, %v2979
    %2984 = vset.pattern.permute.xlu0 1
    %2985 = vperm.xlu0 %2984, %v2950
    %v2986 = vpop.permute.xlu0 %2985
    %2988 = vset.pattern.permute.xlu0 1
    %2989 = vperm.xlu0 %2988, %v2951
    %v2990 = vpop.permute.xlu0 %2989
    %2992 = vset.pattern.permute.xlu0 1
    %2993 = vperm.xlu0 %2992, %v2952
    %v2994 = vpop.permute.xlu0 %2993
    %2996 = vset.pattern.permute.xlu0 1
    %2997 = vperm.xlu0 %2996, %v2953
    %v2998 = vpop.permute.xlu0 %2997
    %v3000 = vlaneseq
    %v3001 = vshrl.u32 %v3000, 7
    %v3002 = vsub.s32 1, %v3001
    %v3003 = vrot.slane %v2955, %v3002
    %v3004 = vmul.f32 %v2986, %v3003
    %v3005 = vmul.f32 %v2990, %v3003
    %v3006 = vmul.f32 %v2994, %v3003
    %v3007 = vmul.f32 %v2998, %v3003
    %v3008 = vadd.f32 %v2980, %v3004
    %v3009 = vadd.f32 %v2981, %v3005
    %v3010 = vadd.f32 %v2982, %v3006
    %v3011 = vadd.f32 %v2983, %v3007
    %3012 = vset.pattern.permute.xlu0 2
    %3013 = vperm.xlu0 %3012, %v2950
    %v3014 = vpop.permute.xlu0 %3013
    %3016 = vset.pattern.permute.xlu0 2
    %3017 = vperm.xlu0 %3016, %v2951
    %v3018 = vpop.permute.xlu0 %3017
    %3020 = vset.pattern.permute.xlu0 2
    %3021 = vperm.xlu0 %3020, %v2952
    %v3022 = vpop.permute.xlu0 %3021
    %3024 = vset.pattern.permute.xlu0 2
    %3025 = vperm.xlu0 %3024, %v2953
    %v3026 = vpop.permute.xlu0 %3025
    %v3028 = vlaneseq
    %v3029 = vshrl.u32 %v3028, 7
    %v3030 = vsub.s32 2, %v3029
    %v3031 = vrot.slane %v2955, %v3030
    %v3032 = vmul.f32 %v3014, %v3031
    %v3033 = vmul.f32 %v3018, %v3031
    %v3034 = vmul.f32 %v3022, %v3031
    %v3035 = vmul.f32 %v3026, %v3031
    %v3036 = vadd.f32 %v3008, %v3032
    %v3037 = vadd.f32 %v3009, %v3033
    %v3038 = vadd.f32 %v3010, %v3034
    %v3039 = vadd.f32 %v3011, %v3035
    %3040 = vset.pattern.permute.xlu0 3
    %3041 = vperm.xlu0 %3040, %v2950
    %v3042 = vpop.permute.xlu0 %3041
    %3044 = vset.pattern.permute.xlu0 3
    %3045 = vperm.xlu0 %3044, %v2951
    %v3046 = vpop.permute.xlu0 %3045
    %3048 = vset.pattern.permute.xlu0 3
    %3049 = vperm.xlu0 %3048, %v2952
    %v3050 = vpop.permute.xlu0 %3049
    %3052 = vset.pattern.permute.xlu0 3
    %3053 = vperm.xlu0 %3052, %v2953
    %v3054 = vpop.permute.xlu0 %3053
    %v3056 = vlaneseq
    %v3057 = vshrl.u32 %v3056, 7
    %v3058 = vsub.s32 3, %v3057
    %v3059 = vrot.slane %v2955, %v3058
    %v3060 = vmul.f32 %v3042, %v3059
    %v3061 = vmul.f32 %v3046, %v3059
    %v3062 = vmul.f32 %v3050, %v3059
    %v3063 = vmul.f32 %v3054, %v3059
    %v3064 = vadd.f32 %v3036, %v3060
    %v3065 = vadd.f32 %v3037, %v3061
    %v3066 = vadd.f32 %v3038, %v3062
    %v3067 = vadd.f32 %v3039, %v3063
    %v3068 = vadd.f32 %v2946, %v3064
    %v3069 = vadd.f32 %v2947, %v3065
    %v3070 = vadd.f32 %v2948, %v3066
    %v3071 = vadd.f32 %v2949, %v3067
    %v3072 = vld [vmem:[#allocation8] sm:$0x1]
    %v3074 = vlaneseq
    %v3075 = vshrl.u32 %v3074, 7
    %v3076 = vsub.s32 0, %v3075
    %v3077 = vrot.slane %v3072, %v3076
    %v3079 = vadd.f32 %v3068, %v3077
    %v3080 = vadd.f32 %v3069, %v3077
    %v3081 = vadd.f32 %v3070, %v3077
    %v3082 = vadd.f32 %v3071, %v3077
    %vm3083 = vcmp.ge.f32.partialorder %v3079, 0.0
    %vm3084 = vcmp.ge.f32.partialorder %v3080, 0.0
    %vm3085 = vcmp.ge.f32.partialorder %v3081, 0.0
    %vm3086 = vcmp.ge.f32.partialorder %v3082, 0.0
    %v3087 = vmul.f32 %v3079, 0.01
    %v3088 = vmul.f32 %v3080, 0.01
    %v3089 = vmul.f32 %v3081, 0.01
    %v3090 = vmul.f32 %v3082, 0.01
    %v3091 = vsel %vm3083, %v3079, %v3087
    %v3092 = vsel %vm3084, %v3080, %v3088
    %v3093 = vsel %vm3085, %v3081, %v3089
    %v3094 = vsel %vm3086, %v3082, %v3090
    %v3095 = vsel %vm175, %v3091, 0.0
    %v3096 = vsel %vm175, %v3092, 0.0
    %v3097 = vadd.f32 %v3095, %v3096
    %v3098 = vrot.slane %v3097, 4
    %v3099 = vadd.f32 %v3097, %v3098
    %v3100 = vrot.slane %v3099, 2
    %v3101 = vadd.f32 %v3099, %v3100
    %v3102 = vrot.slane %v3101, 1
    %v3103 = vadd.f32 %v3101, %v3102
    %v3104 = vsel %vm175, %v3093, 0.0
    %v3105 = vsel %vm175, %v3094, 0.0
    %v3106 = vadd.f32 %v3104, %v3105
    %v3107 = vrot.slane %v3106, 4
    %v3108 = vadd.f32 %v3106, %v3107
    %v3109 = vrot.slane %v3108, 2
    %v3110 = vadd.f32 %v3108, %v3109
    %v3111 = vrot.slane %v3110, 1
    %v3112 = vadd.f32 %v3110, %v3111
    %v3113 = vsel %vm175, %v3103, 0.0
    %v3114 = vsel %vm175, %v3112, 0.0
    %v3115 = vadd.f32 %v3113, %v3114
    %v3116 = vmul.f32 %v3115, %v197
    %v3117 = vsub.f32 %v3091, %v3116
    %v3118 = vsub.f32 %v3092, %v3116
    %v3119 = vsub.f32 %v3093, %v3116
    %v3120 = vsub.f32 %v3094, %v3116
    %v3121 = vmul.f32 %v3117, %v3117
    %v3122 = vmul.f32 %v3118, %v3118
    %v3123 = vmul.f32 %v3119, %v3119
    %v3124 = vmul.f32 %v3120, %v3120
    %v3125 = vsel %vm175, %v3121, 0.0
    %v3126 = vsel %vm175, %v3122, 0.0
    %v3127 = vadd.f32 %v3125, %v3126
    %v3128 = vrot.slane %v3127, 4
    %v3129 = vadd.f32 %v3127, %v3128
    %v3130 = vrot.slane %v3129, 2
    %v3131 = vadd.f32 %v3129, %v3130
    %v3132 = vrot.slane %v3131, 1
    %v3133 = vadd.f32 %v3131, %v3132
    %v3134 = vsel %vm175, %v3123, 0.0
    %v3135 = vsel %vm175, %v3124, 0.0
    %v3136 = vadd.f32 %v3134, %v3135
    %v3137 = vrot.slane %v3136, 4
    %v3138 = vadd.f32 %v3136, %v3137
    %v3139 = vrot.slane %v3138, 2
    %v3140 = vadd.f32 %v3138, %v3139
    %v3141 = vrot.slane %v3140, 1
    %v3142 = vadd.f32 %v3140, %v3141
    %v3143 = vsel %vm175, %v3133, 0.0
    %v3144 = vsel %vm175, %v3142, 0.0
    %v3145 = vadd.f32 %v3143, %v3144
    %v3146 = vmul.f32 %v3145, %v197
    %v3147 = vadd.f32 %v3146, 1e-05
    %v3148 = vrsqrt.pop %v3147
    %v3149 = vmul.f32 %v3117, %v3148
    %v3150 = vmul.f32 %v3118, %v3148
    %v3151 = vmul.f32 %v3119, %v3148
    %v3152 = vmul.f32 %v3120, %v3148
    %v3153 = vld [vmem:[%s9] sm:$0x1]
    %v3155 = vlaneseq
    %v3156 = vshrl.u32 %v3155, 7
    %v3157 = vsub.s32 0, %v3156
    %v3158 = vrot.slane %v3153, %v3157
    %v3160 = vmul.f32 %v3149, %v3158
    %v3161 = vmul.f32 %v3150, %v3158
    %v3162 = vmul.f32 %v3151, %v3158
    %v3163 = vmul.f32 %v3152, %v3158
    %v3164 = vld [vmem:[%s10] sm:$0x1]
    %v3166 = vlaneseq
    %v3167 = vshrl.u32 %v3166, 7
    %v3168 = vsub.s32 0, %v3167
    %v3169 = vrot.slane %v3164, %v3168
    %v3171 = vadd.f32 %v3160, %v3169
    %v3172 = vadd.f32 %v3161, %v3169
    %v3173 = vadd.f32 %v3162, %v3169
    %v3174 = vadd.f32 %v3163, %v3169
    %3175 = vst.msk [vmem:[#allocation2] sm:$0xff] %vm175, 0.0
    %3176 = vst.msk [vmem:[#allocation2 + $0x8] sm:$0xff] %vm175, 0.0
    %3177 = vst.msk [vmem:[#allocation2 + $0x10] sm:$0xff] %vm175, 0.0
    %3178 = vst.msk [vmem:[#allocation2 + $0x18] sm:$0x3f] %vm260, 0.0
    %3179 = vst.msk [vmem:[#allocation2 + $0x20] sm:$0xff] %vm175, 0.0
    %3180 = vst.msk [vmem:[#allocation2 + $0x28] sm:$0xff] %vm175, 0.0
    %3181 = vst.msk [vmem:[#allocation2 + $0x30] sm:$0xff] %vm175, 0.0
    %3182 = vst.msk [vmem:[#allocation2 + $0x38] sm:$0x3f] %vm260, 0.0
    %3183 = vst.msk [vmem:[#allocation2 + $0x3] sm:$0xff] %vm175, %v3171
    %3184 = vst.msk [vmem:[#allocation2 + $0xb] sm:$0xff] %vm175, %v3172
    %3185 = vst.msk [vmem:[#allocation2 + $0x23] sm:$0xff] %vm175, %v3173
    %3186 = vst.msk [vmem:[#allocation2 + $0x2b] sm:$0xff] %vm175, %v3174
    %v3187 = vld [vmem:[#allocation2] ss:$2 sm:$0xff]
    %s3188 = scalar_lea.vmem [#allocation2], 32
    %v3189 = vld [vmem:[%s3188] ss:$2 sm:$0xff]
    %v3190 = vld [vmem:[%s11] sm:$0xf]
    %3192 = vset.pattern.permute.xlu0 0
    %3193 = vperm.xlu0 %3192, %v3187
    %v3194 = vpop.permute.xlu0 %3193
    %3197 = vset.pattern.permute.xlu0 0
    %3198 = vperm.xlu0 %3197, %v3189
    %v3199 = vpop.permute.xlu0 %3198
    %v3201 = vlaneseq
    %v3202 = vshrl.u32 %v3201, 7
    %v3203 = vsub.s32 0, %v3202
    %v3204 = vrot.slane %v3190, %v3203
    %v3205 = vmul.f32 %v3194, %v3204
    %v3206 = vmul.f32 %v3199, %v3204
    %3207 = vset.pattern.permute.xlu0 1
    %3208 = vperm.xlu0 %3207, %v3187
    %v3209 = vpop.permute.xlu0 %3208
    %3211 = vset.pattern.permute.xlu0 1
    %3212 = vperm.xlu0 %3211, %v3189
    %v3213 = vpop.permute.xlu0 %3212
    %v3215 = vlaneseq
    %v3216 = vshrl.u32 %v3215, 7
    %v3217 = vsub.s32 1, %v3216
    %v3218 = vrot.slane %v3190, %v3217
    %v3219 = vmul.f32 %v3209, %v3218
    %v3220 = vmul.f32 %v3213, %v3218
    %v3221 = vadd.f32 %v3205, %v3219
    %v3222 = vadd.f32 %v3206, %v3220
    %3223 = vset.pattern.permute.xlu0 2
    %3224 = vperm.xlu0 %3223, %v3187
    %v3225 = vpop.permute.xlu0 %3224
    %3227 = vset.pattern.permute.xlu0 2
    %3228 = vperm.xlu0 %3227, %v3189
    %v3229 = vpop.permute.xlu0 %3228
    %v3231 = vlaneseq
    %v3232 = vshrl.u32 %v3231, 7
    %v3233 = vsub.s32 2, %v3232
    %v3234 = vrot.slane %v3190, %v3233
    %v3235 = vmul.f32 %v3225, %v3234
    %v3236 = vmul.f32 %v3229, %v3234
    %v3237 = vadd.f32 %v3221, %v3235
    %v3238 = vadd.f32 %v3222, %v3236
    %3239 = vset.pattern.permute.xlu0 3
    %3240 = vperm.xlu0 %3239, %v3187
    %v3241 = vpop.permute.xlu0 %3240
    %3243 = vset.pattern.permute.xlu0 3
    %3244 = vperm.xlu0 %3243, %v3189
    %v3245 = vpop.permute.xlu0 %3244
    %v3247 = vlaneseq
    %v3248 = vshrl.u32 %v3247, 7
    %v3249 = vsub.s32 3, %v3248
    %v3250 = vrot.slane %v3190, %v3249
    %v3251 = vmul.f32 %v3241, %v3250
    %v3252 = vmul.f32 %v3245, %v3250
    %v3253 = vadd.f32 %v3237, %v3251
    %v3254 = vadd.f32 %v3238, %v3252
    %s3255 = scalar_lea.vmem [#allocation2], 1
    %v3256 = vld [vmem:[%s3255] ss:$2 sm:$0xff]
    %s3257 = scalar_lea.vmem [#allocation2], 33
    %v3258 = vld [vmem:[%s3257] ss:$2 sm:$0xff]
    %s3259 = scalar_lea.vmem %s11, 4
    %v3260 = vld [vmem:[%s3259] sm:$0xf]
    %3262 = vset.pattern.permute.xlu0 0
    %3263 = vperm.xlu0 %3262, %v3256
    %v3264 = vpop.permute.xlu0 %3263
    %3267 = vset.pattern.permute.xlu0 0
    %3268 = vperm.xlu0 %3267, %v3258
    %v3269 = vpop.permute.xlu0 %3268
    %v3271 = vlaneseq
    %v3272 = vshrl.u32 %v3271, 7
    %v3273 = vsub.s32 0, %v3272
    %v3274 = vrot.slane %v3260, %v3273
    %v3275 = vmul.f32 %v3264, %v3274
    %v3276 = vmul.f32 %v3269, %v3274
    %3277 = vset.pattern.permute.xlu0 1
    %3278 = vperm.xlu0 %3277, %v3256
    %v3279 = vpop.permute.xlu0 %3278
    %3281 = vset.pattern.permute.xlu0 1
    %3282 = vperm.xlu0 %3281, %v3258
    %v3283 = vpop.permute.xlu0 %3282
    %v3285 = vlaneseq
    %v3286 = vshrl.u32 %v3285, 7
    %v3287 = vsub.s32 1, %v3286
    %v3288 = vrot.slane %v3260, %v3287
    %v3289 = vmul.f32 %v3279, %v3288
    %v3290 = vmul.f32 %v3283, %v3288
    %v3291 = vadd.f32 %v3275, %v3289
    %v3292 = vadd.f32 %v3276, %v3290
    %3293 = vset.pattern.permute.xlu0 2
    %3294 = vperm.xlu0 %3293, %v3256
    %v3295 = vpop.permute.xlu0 %3294
    %3297 = vset.pattern.permute.xlu0 2
    %3298 = vperm.xlu0 %3297, %v3258
    %v3299 = vpop.permute.xlu0 %3298
    %v3301 = vlaneseq
    %v3302 = vshrl.u32 %v3301, 7
    %v3303 = vsub.s32 2, %v3302
    %v3304 = vrot.slane %v3260, %v3303
    %v3305 = vmul.f32 %v3295, %v3304
    %v3306 = vmul.f32 %v3299, %v3304
    %v3307 = vadd.f32 %v3291, %v3305
    %v3308 = vadd.f32 %v3292, %v3306
    %3309 = vset.pattern.permute.xlu0 3
    %3310 = vperm.xlu0 %3309, %v3256
    %v3311 = vpop.permute.xlu0 %3310
    %3313 = vset.pattern.permute.xlu0 3
    %3314 = vperm.xlu0 %3313, %v3258
    %v3315 = vpop.permute.xlu0 %3314
    %v3317 = vlaneseq
    %v3318 = vshrl.u32 %v3317, 7
    %v3319 = vsub.s32 3, %v3318
    %v3320 = vrot.slane %v3260, %v3319
    %v3321 = vmul.f32 %v3311, %v3320
    %v3322 = vmul.f32 %v3315, %v3320
    %v3323 = vadd.f32 %v3307, %v3321
    %v3324 = vadd.f32 %v3308, %v3322
    %v3325 = vadd.f32 %v3253, %v3323
    %v3326 = vadd.f32 %v3254, %v3324
    %s3327 = scalar_lea.vmem [#allocation2], 2
    %v3328 = vld [vmem:[%s3327] ss:$2 sm:$0xff]
    %s3329 = scalar_lea.vmem [#allocation2], 34
    %v3330 = vld [vmem:[%s3329] ss:$2 sm:$0xff]
    %s3331 = scalar_lea.vmem %s11, 8
    %v3332 = vld [vmem:[%s3331] sm:$0xf]
    %3334 = vset.pattern.permute.xlu0 0
    %3335 = vperm.xlu0 %3334, %v3328
    %v3336 = vpop.permute.xlu0 %3335
    %3339 = vset.pattern.permute.xlu0 0
    %3340 = vperm.xlu0 %3339, %v3330
    %v3341 = vpop.permute.xlu0 %3340
    %v3343 = vlaneseq
    %v3344 = vshrl.u32 %v3343, 7
    %v3345 = vsub.s32 0, %v3344
    %v3346 = vrot.slane %v3332, %v3345
    %v3347 = vmul.f32 %v3336, %v3346
    %v3348 = vmul.f32 %v3341, %v3346
    %3349 = vset.pattern.permute.xlu0 1
    %3350 = vperm.xlu0 %3349, %v3328
    %v3351 = vpop.permute.xlu0 %3350
    %3353 = vset.pattern.permute.xlu0 1
    %3354 = vperm.xlu0 %3353, %v3330
    %v3355 = vpop.permute.xlu0 %3354
    %v3357 = vlaneseq
    %v3358 = vshrl.u32 %v3357, 7
    %v3359 = vsub.s32 1, %v3358
    %v3360 = vrot.slane %v3332, %v3359
    %v3361 = vmul.f32 %v3351, %v3360
    %v3362 = vmul.f32 %v3355, %v3360
    %v3363 = vadd.f32 %v3347, %v3361
    %v3364 = vadd.f32 %v3348, %v3362
    %3365 = vset.pattern.permute.xlu0 2
    %3366 = vperm.xlu0 %3365, %v3328
    %v3367 = vpop.permute.xlu0 %3366
    %3369 = vset.pattern.permute.xlu0 2
    %3370 = vperm.xlu0 %3369, %v3330
    %v3371 = vpop.permute.xlu0 %3370
    %v3373 = vlaneseq
    %v3374 = vshrl.u32 %v3373, 7
    %v3375 = vsub.s32 2, %v3374
    %v3376 = vrot.slane %v3332, %v3375
    %v3377 = vmul.f32 %v3367, %v3376
    %v3378 = vmul.f32 %v3371, %v3376
    %v3379 = vadd.f32 %v3363, %v3377
    %v3380 = vadd.f32 %v3364, %v3378
    %3381 = vset.pattern.permute.xlu0 3
    %3382 = vperm.xlu0 %3381, %v3328
    %v3383 = vpop.permute.xlu0 %3382
    %3385 = vset.pattern.permute.xlu0 3
    %3386 = vperm.xlu0 %3385, %v3330
    %v3387 = vpop.permute.xlu0 %3386
    %v3389 = vlaneseq
    %v3390 = vshrl.u32 %v3389, 7
    %v3391 = vsub.s32 3, %v3390
    %v3392 = vrot.slane %v3332, %v3391
    %v3393 = vmul.f32 %v3383, %v3392
    %v3394 = vmul.f32 %v3387, %v3392
    %v3395 = vadd.f32 %v3379, %v3393
    %v3396 = vadd.f32 %v3380, %v3394
    %v3397 = vadd.f32 %v3325, %v3395
    %v3398 = vadd.f32 %v3326, %v3396
    %s3399 = scalar_lea.vmem [#allocation2], 3
    %v3400 = vld [vmem:[%s3399] ss:$2 sm:$0xff]
    %s3401 = scalar_lea.vmem [#allocation2], 35
    %v3402 = vld [vmem:[%s3401] ss:$2 sm:$0xff]
    %s3403 = scalar_lea.vmem %s11, 12
    %v3404 = vld [vmem:[%s3403] sm:$0xf]
    %3406 = vset.pattern.permute.xlu0 0
    %3407 = vperm.xlu0 %3406, %v3400
    %v3408 = vpop.permute.xlu0 %3407
    %3411 = vset.pattern.permute.xlu0 0
    %3412 = vperm.xlu0 %3411, %v3402
    %v3413 = vpop.permute.xlu0 %3412
    %v3415 = vlaneseq
    %v3416 = vshrl.u32 %v3415, 7
    %v3417 = vsub.s32 0, %v3416
    %v3418 = vrot.slane %v3404, %v3417
    %v3419 = vmul.f32 %v3408, %v3418
    %v3420 = vmul.f32 %v3413, %v3418
    %3421 = vset.pattern.permute.xlu0 1
    %3422 = vperm.xlu0 %3421, %v3400
    %v3423 = vpop.permute.xlu0 %3422
    %3425 = vset.pattern.permute.xlu0 1
    %3426 = vperm.xlu0 %3425, %v3402
    %v3427 = vpop.permute.xlu0 %3426
    %v3429 = vlaneseq
    %v3430 = vshrl.u32 %v3429, 7
    %v3431 = vsub.s32 1, %v3430
    %v3432 = vrot.slane %v3404, %v3431
    %v3433 = vmul.f32 %v3423, %v3432
    %v3434 = vmul.f32 %v3427, %v3432
    %v3435 = vadd.f32 %v3419, %v3433
    %v3436 = vadd.f32 %v3420, %v3434
    %3437 = vset.pattern.permute.xlu0 2
    %3438 = vperm.xlu0 %3437, %v3400
    %v3439 = vpop.permute.xlu0 %3438
    %3441 = vset.pattern.permute.xlu0 2
    %3442 = vperm.xlu0 %3441, %v3402
    %v3443 = vpop.permute.xlu0 %3442
    %v3445 = vlaneseq
    %v3446 = vshrl.u32 %v3445, 7
    %v3447 = vsub.s32 2, %v3446
    %v3448 = vrot.slane %v3404, %v3447
    %v3449 = vmul.f32 %v3439, %v3448
    %v3450 = vmul.f32 %v3443, %v3448
    %v3451 = vadd.f32 %v3435, %v3449
    %v3452 = vadd.f32 %v3436, %v3450
    %3453 = vset.pattern.permute.xlu0 3
    %3454 = vperm.xlu0 %3453, %v3400
    %v3455 = vpop.permute.xlu0 %3454
    %3457 = vset.pattern.permute.xlu0 3
    %3458 = vperm.xlu0 %3457, %v3402
    %v3459 = vpop.permute.xlu0 %3458
    %v3461 = vlaneseq
    %v3462 = vshrl.u32 %v3461, 7
    %v3463 = vsub.s32 3, %v3462
    %v3464 = vrot.slane %v3404, %v3463
    %v3465 = vmul.f32 %v3455, %v3464
    %v3466 = vmul.f32 %v3459, %v3464
    %v3467 = vadd.f32 %v3451, %v3465
    %v3468 = vadd.f32 %v3452, %v3466
    %v3469 = vadd.f32 %v3397, %v3467
    %v3470 = vadd.f32 %v3398, %v3468
    %s3471 = scalar_lea.vmem [#allocation2], 4
    %v3472 = vld [vmem:[%s3471] ss:$2 sm:$0xff]
    %s3473 = scalar_lea.vmem [#allocation2], 36
    %v3474 = vld [vmem:[%s3473] ss:$2 sm:$0xff]
    %s3475 = scalar_lea.vmem %s11, 16
    %v3476 = vld [vmem:[%s3475] sm:$0xf]
    %3478 = vset.pattern.permute.xlu0 0
    %3479 = vperm.xlu0 %3478, %v3472
    %v3480 = vpop.permute.xlu0 %3479
    %3483 = vset.pattern.permute.xlu0 0
    %3484 = vperm.xlu0 %3483, %v3474
    %v3485 = vpop.permute.xlu0 %3484
    %v3487 = vlaneseq
    %v3488 = vshrl.u32 %v3487, 7
    %v3489 = vsub.s32 0, %v3488
    %v3490 = vrot.slane %v3476, %v3489
    %v3491 = vmul.f32 %v3480, %v3490
    %v3492 = vmul.f32 %v3485, %v3490
    %3493 = vset.pattern.permute.xlu0 1
    %3494 = vperm.xlu0 %3493, %v3472
    %v3495 = vpop.permute.xlu0 %3494
    %3497 = vset.pattern.permute.xlu0 1
    %3498 = vperm.xlu0 %3497, %v3474
    %v3499 = vpop.permute.xlu0 %3498
    %v3501 = vlaneseq
    %v3502 = vshrl.u32 %v3501, 7
    %v3503 = vsub.s32 1, %v3502
    %v3504 = vrot.slane %v3476, %v3503
    %v3505 = vmul.f32 %v3495, %v3504
    %v3506 = vmul.f32 %v3499, %v3504
    %v3507 = vadd.f32 %v3491, %v3505
    %v3508 = vadd.f32 %v3492, %v3506
    %3509 = vset.pattern.permute.xlu0 2
    %3510 = vperm.xlu0 %3509, %v3472
    %v3511 = vpop.permute.xlu0 %3510
    %3513 = vset.pattern.permute.xlu0 2
    %3514 = vperm.xlu0 %3513, %v3474
    %v3515 = vpop.permute.xlu0 %3514
    %v3517 = vlaneseq
    %v3518 = vshrl.u32 %v3517, 7
    %v3519 = vsub.s32 2, %v3518
    %v3520 = vrot.slane %v3476, %v3519
    %v3521 = vmul.f32 %v3511, %v3520
    %v3522 = vmul.f32 %v3515, %v3520
    %v3523 = vadd.f32 %v3507, %v3521
    %v3524 = vadd.f32 %v3508, %v3522
    %3525 = vset.pattern.permute.xlu0 3
    %3526 = vperm.xlu0 %3525, %v3472
    %v3527 = vpop.permute.xlu0 %3526
    %3529 = vset.pattern.permute.xlu0 3
    %3530 = vperm.xlu0 %3529, %v3474
    %v3531 = vpop.permute.xlu0 %3530
    %v3533 = vlaneseq
    %v3534 = vshrl.u32 %v3533, 7
    %v3535 = vsub.s32 3, %v3534
    %v3536 = vrot.slane %v3476, %v3535
    %v3537 = vmul.f32 %v3527, %v3536
    %v3538 = vmul.f32 %v3531, %v3536
    %v3539 = vadd.f32 %v3523, %v3537
    %v3540 = vadd.f32 %v3524, %v3538
    %v3541 = vadd.f32 %v3469, %v3539
    %v3542 = vadd.f32 %v3470, %v3540
    %s3543 = scalar_lea.vmem [#allocation2], 5
    %v3544 = vld [vmem:[%s3543] ss:$2 sm:$0xff]
    %s3545 = scalar_lea.vmem [#allocation2], 37
    %v3546 = vld [vmem:[%s3545] ss:$2 sm:$0xff]
    %s3547 = scalar_lea.vmem %s11, 20
    %v3548 = vld [vmem:[%s3547] sm:$0xf]
    %3550 = vset.pattern.permute.xlu0 0
    %3551 = vperm.xlu0 %3550, %v3544
    %v3552 = vpop.permute.xlu0 %3551
    %3555 = vset.pattern.permute.xlu0 0
    %3556 = vperm.xlu0 %3555, %v3546
    %v3557 = vpop.permute.xlu0 %3556
    %v3559 = vlaneseq
    %v3560 = vshrl.u32 %v3559, 7
    %v3561 = vsub.s32 0, %v3560
    %v3562 = vrot.slane %v3548, %v3561
    %v3563 = vmul.f32 %v3552, %v3562
    %v3564 = vmul.f32 %v3557, %v3562
    %3565 = vset.pattern.permute.xlu0 1
    %3566 = vperm.xlu0 %3565, %v3544
    %v3567 = vpop.permute.xlu0 %3566
    %3569 = vset.pattern.permute.xlu0 1
    %3570 = vperm.xlu0 %3569, %v3546
    %v3571 = vpop.permute.xlu0 %3570
    %v3573 = vlaneseq
    %v3574 = vshrl.u32 %v3573, 7
    %v3575 = vsub.s32 1, %v3574
    %v3576 = vrot.slane %v3548, %v3575
    %v3577 = vmul.f32 %v3567, %v3576
    %v3578 = vmul.f32 %v3571, %v3576
    %v3579 = vadd.f32 %v3563, %v3577
    %v3580 = vadd.f32 %v3564, %v3578
    %3581 = vset.pattern.permute.xlu0 2
    %3582 = vperm.xlu0 %3581, %v3544
    %v3583 = vpop.permute.xlu0 %3582
    %3585 = vset.pattern.permute.xlu0 2
    %3586 = vperm.xlu0 %3585, %v3546
    %v3587 = vpop.permute.xlu0 %3586
    %v3589 = vlaneseq
    %v3590 = vshrl.u32 %v3589, 7
    %v3591 = vsub.s32 2, %v3590
    %v3592 = vrot.slane %v3548, %v3591
    %v3593 = vmul.f32 %v3583, %v3592
    %v3594 = vmul.f32 %v3587, %v3592
    %v3595 = vadd.f32 %v3579, %v3593
    %v3596 = vadd.f32 %v3580, %v3594
    %3597 = vset.pattern.permute.xlu0 3
    %3598 = vperm.xlu0 %3597, %v3544
    %v3599 = vpop.permute.xlu0 %3598
    %3601 = vset.pattern.permute.xlu0 3
    %3602 = vperm.xlu0 %3601, %v3546
    %v3603 = vpop.permute.xlu0 %3602
    %v3605 = vlaneseq
    %v3606 = vshrl.u32 %v3605, 7
    %v3607 = vsub.s32 3, %v3606
    %v3608 = vrot.slane %v3548, %v3607
    %v3609 = vmul.f32 %v3599, %v3608
    %v3610 = vmul.f32 %v3603, %v3608
    %v3611 = vadd.f32 %v3595, %v3609
    %v3612 = vadd.f32 %v3596, %v3610
    %v3613 = vadd.f32 %v3541, %v3611
    %v3614 = vadd.f32 %v3542, %v3612
    %s3615 = scalar_lea.vmem [#allocation2], 6
    %v3616 = vld [vmem:[%s3615] ss:$2 sm:$0xff]
    %s3617 = scalar_lea.vmem [#allocation2], 38
    %v3618 = vld [vmem:[%s3617] ss:$2 sm:$0xff]
    %s3619 = scalar_lea.vmem %s11, 24
    %v3620 = vld [vmem:[%s3619] sm:$0xf]
    %3622 = vset.pattern.permute.xlu0 0
    %3623 = vperm.xlu0 %3622, %v3616
    %v3624 = vpop.permute.xlu0 %3623
    %3627 = vset.pattern.permute.xlu0 0
    %3628 = vperm.xlu0 %3627, %v3618
    %v3629 = vpop.permute.xlu0 %3628
    %v3631 = vlaneseq
    %v3632 = vshrl.u32 %v3631, 7
    %v3633 = vsub.s32 0, %v3632
    %v3634 = vrot.slane %v3620, %v3633
    %v3635 = vmul.f32 %v3624, %v3634
    %v3636 = vmul.f32 %v3629, %v3634
    %3637 = vset.pattern.permute.xlu0 1
    %3638 = vperm.xlu0 %3637, %v3616
    %v3639 = vpop.permute.xlu0 %3638
    %3641 = vset.pattern.permute.xlu0 1
    %3642 = vperm.xlu0 %3641, %v3618
    %v3643 = vpop.permute.xlu0 %3642
    %v3645 = vlaneseq
    %v3646 = vshrl.u32 %v3645, 7
    %v3647 = vsub.s32 1, %v3646
    %v3648 = vrot.slane %v3620, %v3647
    %v3649 = vmul.f32 %v3639, %v3648
    %v3650 = vmul.f32 %v3643, %v3648
    %v3651 = vadd.f32 %v3635, %v3649
    %v3652 = vadd.f32 %v3636, %v3650
    %3653 = vset.pattern.permute.xlu0 2
    %3654 = vperm.xlu0 %3653, %v3616
    %v3655 = vpop.permute.xlu0 %3654
    %3657 = vset.pattern.permute.xlu0 2
    %3658 = vperm.xlu0 %3657, %v3618
    %v3659 = vpop.permute.xlu0 %3658
    %v3661 = vlaneseq
    %v3662 = vshrl.u32 %v3661, 7
    %v3663 = vsub.s32 2, %v3662
    %v3664 = vrot.slane %v3620, %v3663
    %v3665 = vmul.f32 %v3655, %v3664
    %v3666 = vmul.f32 %v3659, %v3664
    %v3667 = vadd.f32 %v3651, %v3665
    %v3668 = vadd.f32 %v3652, %v3666
    %3669 = vset.pattern.permute.xlu0 3
    %3670 = vperm.xlu0 %3669, %v3616
    %v3671 = vpop.permute.xlu0 %3670
    %3673 = vset.pattern.permute.xlu0 3
    %3674 = vperm.xlu0 %3673, %v3618
    %v3675 = vpop.permute.xlu0 %3674
    %v3677 = vlaneseq
    %v3678 = vshrl.u32 %v3677, 7
    %v3679 = vsub.s32 3, %v3678
    %v3680 = vrot.slane %v3620, %v3679
    %v3681 = vmul.f32 %v3671, %v3680
    %v3682 = vmul.f32 %v3675, %v3680
    %v3683 = vadd.f32 %v3667, %v3681
    %v3684 = vadd.f32 %v3668, %v3682
    %v3685 = vadd.f32 %v3613, %v3683
    %v3686 = vadd.f32 %v3614, %v3684
    %v3687 = vld [vmem:[#allocation9] sm:$0x1]
    %v3689 = vlaneseq
    %v3690 = vshrl.u32 %v3689, 7
    %v3691 = vsub.s32 0, %v3690
    %v3692 = vrot.slane %v3687, %v3691
    %v3694 = vadd.f32 %v3685, %v3692
    %v3695 = vadd.f32 %v3686, %v3692
    %vm3696 = vcmp.ge.f32.partialorder %v3694, 0.0
    %vm3697 = vcmp.ge.f32.partialorder %v3695, 0.0
    %v3698 = vmul.f32 %v3694, 0.01
    %v3699 = vmul.f32 %v3695, 0.01
    %v3700 = vsel %vm3696, %v3694, %v3698
    %v3701 = vsel %vm3697, %v3695, %v3699
    %v3702 = vld [vmem:[#allocation11] sm:$0xf]
    %3704 = vset.pattern.permute.xlu0 0
    %3705 = vperm.xlu0 %3704, %v1153
    %v3706 = vpop.permute.xlu0 %3705
    %3709 = vset.pattern.permute.xlu0 0
    %3710 = vperm.xlu0 %3709, %v1154
    %v3711 = vpop.permute.xlu0 %3710
    %v3713 = vlaneseq
    %v3714 = vshrl.u32 %v3713, 7
    %v3715 = vsub.s32 0, %v3714
    %v3716 = vrot.slane %v3702, %v3715
    %v3717 = vmul.f32 %v3706, %v3716
    %v3718 = vmul.f32 %v3711, %v3716
    %3719 = vset.pattern.permute.xlu0 1
    %3720 = vperm.xlu0 %3719, %v1153
    %v3721 = vpop.permute.xlu0 %3720
    %3723 = vset.pattern.permute.xlu0 1
    %3724 = vperm.xlu0 %3723, %v1154
    %v3725 = vpop.permute.xlu0 %3724
    %v3727 = vlaneseq
    %v3728 = vshrl.u32 %v3727, 7
    %v3729 = vsub.s32 1, %v3728
    %v3730 = vrot.slane %v3702, %v3729
    %v3731 = vmul.f32 %v3721, %v3730
    %v3732 = vmul.f32 %v3725, %v3730
    %v3733 = vadd.f32 %v3717, %v3731
    %v3734 = vadd.f32 %v3718, %v3732
    %3735 = vset.pattern.permute.xlu0 2
    %3736 = vperm.xlu0 %3735, %v1153
    %v3737 = vpop.permute.xlu0 %3736
    %3739 = vset.pattern.permute.xlu0 2
    %3740 = vperm.xlu0 %3739, %v1154
    %v3741 = vpop.permute.xlu0 %3740
    %v3743 = vlaneseq
    %v3744 = vshrl.u32 %v3743, 7
    %v3745 = vsub.s32 2, %v3744
    %v3746 = vrot.slane %v3702, %v3745
    %v3747 = vmul.f32 %v3737, %v3746
    %v3748 = vmul.f32 %v3741, %v3746
    %v3749 = vadd.f32 %v3733, %v3747
    %v3750 = vadd.f32 %v3734, %v3748
    %3751 = vset.pattern.permute.xlu0 3
    %3752 = vperm.xlu0 %3751, %v1153
    %v3753 = vpop.permute.xlu0 %3752
    %3755 = vset.pattern.permute.xlu0 3
    %3756 = vperm.xlu0 %3755, %v1154
    %v3757 = vpop.permute.xlu0 %3756
    %v3759 = vlaneseq
    %v3760 = vshrl.u32 %v3759, 7
    %v3761 = vsub.s32 3, %v3760
    %v3762 = vrot.slane %v3702, %v3761
    %v3763 = vmul.f32 %v3753, %v3762
    %v3764 = vmul.f32 %v3757, %v3762
    %v3765 = vadd.f32 %v3749, %v3763
    %v3766 = vadd.f32 %v3750, %v3764
    %v3767 = vld [vmem:[#allocation12] sm:$0x3f]
    %3769 = vset.pattern.permute.xlu0 0
    %3770 = vperm.xlu0 %3769, %v3700
    %v3771 = vpop.permute.xlu0 %3770
    %3774 = vset.pattern.permute.xlu0 0
    %3775 = vperm.xlu0 %3774, %v3701
    %v3776 = vpop.permute.xlu0 %3775
    %v3778 = vlaneseq
    %v3779 = vshrl.u32 %v3778, 7
    %v3780 = vsub.s32 0, %v3779
    %v3781 = vrot.slane %v3767, %v3780
    %v3782 = vmul.f32 %v3771, %v3781
    %v3783 = vmul.f32 %v3776, %v3781
    %3784 = vset.pattern.permute.xlu0 1
    %3785 = vperm.xlu0 %3784, %v3700
    %v3786 = vpop.permute.xlu0 %3785
    %3788 = vset.pattern.permute.xlu0 1
    %3789 = vperm.xlu0 %3788, %v3701
    %v3790 = vpop.permute.xlu0 %3789
    %v3792 = vlaneseq
    %v3793 = vshrl.u32 %v3792, 7
    %v3794 = vsub.s32 1, %v3793
    %v3795 = vrot.slane %v3767, %v3794
    %v3796 = vmul.f32 %v3786, %v3795
    %v3797 = vmul.f32 %v3790, %v3795
    %v3798 = vadd.f32 %v3782, %v3796
    %v3799 = vadd.f32 %v3783, %v3797
    %3800 = vset.pattern.permute.xlu0 2
    %3801 = vperm.xlu0 %3800, %v3700
    %v3802 = vpop.permute.xlu0 %3801
    %3804 = vset.pattern.permute.xlu0 2
    %3805 = vperm.xlu0 %3804, %v3701
    %v3806 = vpop.permute.xlu0 %3805
    %v3808 = vlaneseq
    %v3809 = vshrl.u32 %v3808, 7
    %v3810 = vsub.s32 2, %v3809
    %v3811 = vrot.slane %v3767, %v3810
    %v3812 = vmul.f32 %v3802, %v3811
    %v3813 = vmul.f32 %v3806, %v3811
    %v3814 = vadd.f32 %v3798, %v3812
    %v3815 = vadd.f32 %v3799, %v3813
    %3816 = vset.pattern.permute.xlu0 3
    %3817 = vperm.xlu0 %3816, %v3700
    %v3818 = vpop.permute.xlu0 %3817
    %3820 = vset.pattern.permute.xlu0 3
    %3821 = vperm.xlu0 %3820, %v3701
    %v3822 = vpop.permute.xlu0 %3821
    %v3824 = vlaneseq
    %v3825 = vshrl.u32 %v3824, 7
    %v3826 = vsub.s32 3, %v3825
    %v3827 = vrot.slane %v3767, %v3826
    %v3828 = vmul.f32 %v3818, %v3827
    %v3829 = vmul.f32 %v3822, %v3827
    %v3830 = vadd.f32 %v3814, %v3828
    %v3831 = vadd.f32 %v3815, %v3829
    %3832 = vset.pattern.permute.xlu0 4
    %3833 = vperm.xlu0 %3832, %v3700
    %v3834 = vpop.permute.xlu0 %3833
    %3836 = vset.pattern.permute.xlu0 4
    %3837 = vperm.xlu0 %3836, %v3701
    %v3838 = vpop.permute.xlu0 %3837
    %v3840 = vlaneseq
    %v3841 = vshrl.u32 %v3840, 7
    %v3842 = vsub.s32 4, %v3841
    %v3843 = vrot.slane %v3767, %v3842
    %v3844 = vmul.f32 %v3834, %v3843
    %v3845 = vmul.f32 %v3838, %v3843
    %v3846 = vadd.f32 %v3830, %v3844
    %v3847 = vadd.f32 %v3831, %v3845
    %3848 = vset.pattern.permute.xlu0 5
    %3849 = vperm.xlu0 %3848, %v3700
    %v3850 = vpop.permute.xlu0 %3849
    %3852 = vset.pattern.permute.xlu0 5
    %3853 = vperm.xlu0 %3852, %v3701
    %v3854 = vpop.permute.xlu0 %3853
    %v3856 = vlaneseq
    %v3857 = vshrl.u32 %v3856, 7
    %v3858 = vsub.s32 5, %v3857
    %v3859 = vrot.slane %v3767, %v3858
    %v3860 = vmul.f32 %v3850, %v3859
    %v3861 = vmul.f32 %v3854, %v3859
    %v3862 = vadd.f32 %v3846, %v3860
    %v3863 = vadd.f32 %v3847, %v3861
    %v3864 = vadd.f32 %v3765, %v3862
    %v3865 = vadd.f32 %v3766, %v3863
    %v3866 = vld [vmem:[#allocation14] sm:$0x1]
    %v3868 = vlaneseq
    %v3869 = vshrl.u32 %v3868, 7
    %v3870 = vsub.s32 0, %v3869
    %v3871 = vrot.slane %v3866, %v3870
    %v3873 = vadd.f32 %v3864, %v3871
    %v3874 = vadd.f32 %v3865, %v3871
    %vm3875 = vcmp.ge.f32.partialorder %v3873, 0.0
    %vm3876 = vcmp.ge.f32.partialorder %v3874, 0.0
    %v3877 = vmul.f32 %v3873, 0.01
    %v3878 = vmul.f32 %v3874, 0.01
    %v3879 = vsel %vm3875, %v3873, %v3877
    %v3880 = vsel %vm3876, %v3874, %v3878
    %v3881 = vld [vmem:[%s16] sm:$0x3f]
    %3883 = vset.pattern.permute.xlu0 0
    %3884 = vperm.xlu0 %3883, %v3879
    %v3885 = vpop.permute.xlu0 %3884
    %3888 = vset.pattern.permute.xlu0 0
    %3889 = vperm.xlu0 %3888, %v3880
    %v3890 = vpop.permute.xlu0 %3889
    %v3892 = vlaneseq
    %v3893 = vshrl.u32 %v3892, 7
    %v3894 = vsub.s32 0, %v3893
    %v3895 = vrot.slane %v3881, %v3894
    %v3896 = vmul.f32 %v3885, %v3895
    %v3897 = vmul.f32 %v3890, %v3895
    %3898 = vset.pattern.permute.xlu0 1
    %3899 = vperm.xlu0 %3898, %v3879
    %v3900 = vpop.permute.xlu0 %3899
    %3902 = vset.pattern.permute.xlu0 1
    %3903 = vperm.xlu0 %3902, %v3880
    %v3904 = vpop.permute.xlu0 %3903
    %v3906 = vlaneseq
    %v3907 = vshrl.u32 %v3906, 7
    %v3908 = vsub.s32 1, %v3907
    %v3909 = vrot.slane %v3881, %v3908
    %v3910 = vmul.f32 %v3900, %v3909
    %v3911 = vmul.f32 %v3904, %v3909
    %v3912 = vadd.f32 %v3896, %v3910
    %v3913 = vadd.f32 %v3897, %v3911
    %3914 = vset.pattern.permute.xlu0 2
    %3915 = vperm.xlu0 %3914, %v3879
    %v3916 = vpop.permute.xlu0 %3915
    %3918 = vset.pattern.permute.xlu0 2
    %3919 = vperm.xlu0 %3918, %v3880
    %v3920 = vpop.permute.xlu0 %3919
    %v3922 = vlaneseq
    %v3923 = vshrl.u32 %v3922, 7
    %v3924 = vsub.s32 2, %v3923
    %v3925 = vrot.slane %v3881, %v3924
    %v3926 = vmul.f32 %v3916, %v3925
    %v3927 = vmul.f32 %v3920, %v3925
    %v3928 = vadd.f32 %v3912, %v3926
    %v3929 = vadd.f32 %v3913, %v3927
    %3930 = vset.pattern.permute.xlu0 3
    %3931 = vperm.xlu0 %3930, %v3879
    %v3932 = vpop.permute.xlu0 %3931
    %3934 = vset.pattern.permute.xlu0 3
    %3935 = vperm.xlu0 %3934, %v3880
    %v3936 = vpop.permute.xlu0 %3935
    %v3938 = vlaneseq
    %v3939 = vshrl.u32 %v3938, 7
    %v3940 = vsub.s32 3, %v3939
    %v3941 = vrot.slane %v3881, %v3940
    %v3942 = vmul.f32 %v3932, %v3941
    %v3943 = vmul.f32 %v3936, %v3941
    %v3944 = vadd.f32 %v3928, %v3942
    %v3945 = vadd.f32 %v3929, %v3943
    %3946 = vset.pattern.permute.xlu0 4
    %3947 = vperm.xlu0 %3946, %v3879
    %v3948 = vpop.permute.xlu0 %3947
    %3950 = vset.pattern.permute.xlu0 4
    %3951 = vperm.xlu0 %3950, %v3880
    %v3952 = vpop.permute.xlu0 %3951
    %v3954 = vlaneseq
    %v3955 = vshrl.u32 %v3954, 7
    %v3956 = vsub.s32 4, %v3955
    %v3957 = vrot.slane %v3881, %v3956
    %v3958 = vmul.f32 %v3948, %v3957
    %v3959 = vmul.f32 %v3952, %v3957
    %v3960 = vadd.f32 %v3944, %v3958
    %v3961 = vadd.f32 %v3945, %v3959
    %3962 = vset.pattern.permute.xlu0 5
    %3963 = vperm.xlu0 %3962, %v3879
    %v3964 = vpop.permute.xlu0 %3963
    %3966 = vset.pattern.permute.xlu0 5
    %3967 = vperm.xlu0 %3966, %v3880
    %v3968 = vpop.permute.xlu0 %3967
    %v3970 = vlaneseq
    %v3971 = vshrl.u32 %v3970, 7
    %v3972 = vsub.s32 5, %v3971
    %v3973 = vrot.slane %v3881, %v3972
    %v3974 = vmul.f32 %v3964, %v3973
    %v3975 = vmul.f32 %v3968, %v3973
    %v3976 = vadd.f32 %v3960, %v3974
    %v3977 = vadd.f32 %v3961, %v3975
    %v3978 = vld [vmem:[#allocation15] sm:$0x1]
    %v3980 = vlaneseq
    %v3981 = vshrl.u32 %v3980, 7
    %v3982 = vsub.s32 0, %v3981
    %v3983 = vrot.slane %v3978, %v3982
    %v3985 = vadd.f32 %v3976, %v3983
    %v3986 = vadd.f32 %v3977, %v3983
    %vm3987 = vcmp.ge.f32.partialorder %v3985, 0.0
    %vm3988 = vcmp.ge.f32.partialorder %v3986, 0.0
    %v3989 = vmul.f32 %v3985, 0.01
    %v3990 = vmul.f32 %v3986, 0.01
    %v3991 = vsel %vm3987, %v3985, %v3989
    %v3992 = vsel %vm3988, %v3986, %v3990
    %v3993 = vld [vmem:[%s18] sm:$0x3f]
    %3995 = vset.pattern.permute.xlu0 0
    %3996 = vperm.xlu0 %3995, %v3991
    %v3997 = vpop.permute.xlu0 %3996
    %4000 = vset.pattern.permute.xlu0 0
    %4001 = vperm.xlu0 %4000, %v3992
    %v4002 = vpop.permute.xlu0 %4001
    %v4004 = vlaneseq
    %v4005 = vshrl.u32 %v4004, 7
    %v4006 = vsub.s32 0, %v4005
    %v4007 = vrot.slane %v3993, %v4006
    %v4008 = vmul.f32 %v3997, %v4007
    %v4009 = vmul.f32 %v4002, %v4007
    %4010 = vset.pattern.permute.xlu0 1
    %4011 = vperm.xlu0 %4010, %v3991
    %v4012 = vpop.permute.xlu0 %4011
    %4014 = vset.pattern.permute.xlu0 1
    %4015 = vperm.xlu0 %4014, %v3992
    %v4016 = vpop.permute.xlu0 %4015
    %v4018 = vlaneseq
    %v4019 = vshrl.u32 %v4018, 7
    %v4020 = vsub.s32 1, %v4019
    %v4021 = vrot.slane %v3993, %v4020
    %v4022 = vmul.f32 %v4012, %v4021
    %v4023 = vmul.f32 %v4016, %v4021
    %v4024 = vadd.f32 %v4008, %v4022
    %v4025 = vadd.f32 %v4009, %v4023
    %4026 = vset.pattern.permute.xlu0 2
    %4027 = vperm.xlu0 %4026, %v3991
    %v4028 = vpop.permute.xlu0 %4027
    %4030 = vset.pattern.permute.xlu0 2
    %4031 = vperm.xlu0 %4030, %v3992
    %v4032 = vpop.permute.xlu0 %4031
    %v4034 = vlaneseq
    %v4035 = vshrl.u32 %v4034, 7
    %v4036 = vsub.s32 2, %v4035
    %v4037 = vrot.slane %v3993, %v4036
    %v4038 = vmul.f32 %v4028, %v4037
    %v4039 = vmul.f32 %v4032, %v4037
    %v4040 = vadd.f32 %v4024, %v4038
    %v4041 = vadd.f32 %v4025, %v4039
    %4042 = vset.pattern.permute.xlu0 3
    %4043 = vperm.xlu0 %4042, %v3991
    %v4044 = vpop.permute.xlu0 %4043
    %4046 = vset.pattern.permute.xlu0 3
    %4047 = vperm.xlu0 %4046, %v3992
    %v4048 = vpop.permute.xlu0 %4047
    %v4050 = vlaneseq
    %v4051 = vshrl.u32 %v4050, 7
    %v4052 = vsub.s32 3, %v4051
    %v4053 = vrot.slane %v3993, %v4052
    %v4054 = vmul.f32 %v4044, %v4053
    %v4055 = vmul.f32 %v4048, %v4053
    %v4056 = vadd.f32 %v4040, %v4054
    %v4057 = vadd.f32 %v4041, %v4055
    %4058 = vset.pattern.permute.xlu0 4
    %4059 = vperm.xlu0 %4058, %v3991
    %v4060 = vpop.permute.xlu0 %4059
    %4062 = vset.pattern.permute.xlu0 4
    %4063 = vperm.xlu0 %4062, %v3992
    %v4064 = vpop.permute.xlu0 %4063
    %v4066 = vlaneseq
    %v4067 = vshrl.u32 %v4066, 7
    %v4068 = vsub.s32 4, %v4067
    %v4069 = vrot.slane %v3993, %v4068
    %v4070 = vmul.f32 %v4060, %v4069
    %v4071 = vmul.f32 %v4064, %v4069
    %v4072 = vadd.f32 %v4056, %v4070
    %v4073 = vadd.f32 %v4057, %v4071
    %4074 = vset.pattern.permute.xlu0 5
    %4075 = vperm.xlu0 %4074, %v3991
    %v4076 = vpop.permute.xlu0 %4075
    %4078 = vset.pattern.permute.xlu0 5
    %4079 = vperm.xlu0 %4078, %v3992
    %v4080 = vpop.permute.xlu0 %4079
    %v4082 = vlaneseq
    %v4083 = vshrl.u32 %v4082, 7
    %v4084 = vsub.s32 5, %v4083
    %v4085 = vrot.slane %v3993, %v4084
    %v4086 = vmul.f32 %v4076, %v4085
    %v4087 = vmul.f32 %v4080, %v4085
    %v4088 = vadd.f32 %v4072, %v4086
    %v4089 = vadd.f32 %v4073, %v4087
    %v4090 = vld [vmem:[#allocation17] sm:$0x1]
    %v4092 = vlaneseq
    %v4093 = vshrl.u32 %v4092, 7
    %v4094 = vsub.s32 0, %v4093
    %v4095 = vrot.slane %v4090, %v4094
    %v4097 = vadd.f32 %v4088, %v4095
    %v4098 = vadd.f32 %v4089, %v4095
    %vm4099 = vcmp.ge.f32.partialorder %v4097, 0.0
    %vm4100 = vcmp.ge.f32.partialorder %v4098, 0.0
    %v4101 = vmul.f32 %v4097, 0.01
    %v4102 = vmul.f32 %v4098, 0.01
    %v4103 = vsel %vm4099, %v4097, %v4101
    %v4104 = vsel %vm4100, %v4098, %v4102
    %v4105 = vadd.f32 %v3700, %v4103
    %v4106 = vadd.f32 %v3701, %v4104
    %vm4107 = vcmask 48128
    %4108 = vst.msk [vmem:[%s20] sm:$0xff] %vm4107, %v4105
    %4109 = vst.msk [vmem:[%s20 + $0x8] sm:$0xff] %vm4107, %v4106
    // Predicated region
    $region118: #{residual_block_forward.1} parent=1 // pred_check
      _
    $region119: #{residual_block_forward.1} parent=1 // pred_check_branch
      %4111 = sbr.rel (0) target = $region121
    $region120: #{residual_block_forward.1} parent=1 // pred_region
      _
    $region121: #{residual_block_forward.1} parent=1 // pred_fallthru
      _
    // Predicated region
    $region122: #{residual_block_forward.1} parent=1 // pred_check
      _
    $region123: #{residual_block_forward.1} parent=1 // pred_check_branch
      %4113 = sbr.rel (0) target = $region125
    $region124: #{residual_block_forward.1} parent=1 // pred_region
      _
    $region125: #{residual_block_forward.1} parent=1 // pred_fallthru
      _
    %4114 = vsyncpa [#allocation5], 1
    %4115 = vsyncpa [#allocation7], 1
    %4116 = vsyncpa [#allocation10], 1
    %4117 = vsyncpa [#allocation13], 1
    %4118 = vsyncpa [#allocation16], 1

</llo_original>
